<compile_context>
chip_gen: v7x
topology: tpu7x:2x2x1
jax: 0.10.0
libtpu: 0.0.40
codegen_flags: <defaults>
</compile_context>

<pallas_src>
import functools

import jax
import jax.numpy as jnp
import numpy as np
from jax import lax
from jax.experimental import pallas as pl
from jax.experimental.pallas import tpu as pltpu


# ----------------------------------------------------------------------------- helpers
def _round_up(x, m):
    return ((x + m - 1) // m) * m


def _pick_row_tile(n, h, w, target=1024):
    """Largest divisor th of h with matmul M-dim th*w <= target (multiple-of-256-ish),
    while keeping the total grid n*(h//th) >= 2 so both v7x TensorCores get work."""
    divs = [d for d in range(1, h + 1) if h % d == 0]
    cands = [d for d in divs if d * w <= target] or [1]
    th = cands[-1]
    if n * (h // th) < 2:                      # v7x: don't idle the second TensorCore
        smaller = [d for d in cands if d < th]
        if smaller:
            th = smaller[-1]
    return th
    # TODO(synk): images with W*1 row > target (very wide images) degenerate to th=1;
    #             a column tile would be needed there.


def _vmem_limit_bytes():
    """~Half of physical VMEM: v5e/v6e (128 MiB) -> 64 MiB, v7x (64 MiB) -> 32 MiB."""
    try:
        cap = pltpu.get_tpu_info().vmem_capacity_bytes
    except Exception:  # pragma: no cover - defensive fallback
        cap = 64 * 1024 * 1024
    return int(min(cap // 2, 96 * 1024 * 1024))


# ----------------------------------------------------------------------------- kernel
def _bottleneck2_kernel(x_ref, w1_ref, b1_ref, w2_ref, b2_ref, o_ref, y1buf,
                        *, th, leaky, add):
    """Fused Conv1x1+BN+LReLU -> Conv3x3(p=1)+BN+LReLU (+ residual) for one
    (batch, row-tile) block.

    x_ref : (1, H+2, W, C1p)  row-padded image, resident per batch (compute dtype)
    w1_ref: (C1p, Cmp)        1x1 weights, BN1 scale folded (compute dtype)
    b1_ref: (1, Cmp)          folded BN1 bias (f32)
    w2_ref: (9, Cmp, C2p)     3x3 weights per tap, BN2 scale folded (compute dtype)
    b2_ref: (1, C2p)          folded BN2 bias (f32)
    o_ref : (1, TH, W, C2p)
    y1buf : VMEM scratch (TH+2, W+2, Cmp)  staging buffer for the 3x3 taps
    """
    t = pl.program_id(1)
    nt = pl.num_programs(1)
    wd = o_ref.shape[2]
    c1p = x_ref.shape[3]
    cm = w1_ref.shape[1]
    c2p = o_ref.shape[3]

    r0 = pl.multiple_of(t * th, th)

    # ---- 1x1 conv on a (TH+2)-row window; the 2 halo rows are recomputed, never
    #      written to HBM.
    xwin = x_ref[0, pl.ds(r0, th + 2), :, :]                       # (TH+2, W, C1p)
    y1 = jnp.dot(xwin.reshape((th + 2) * wd, c1p), w1_ref[...],
                 preferred_element_type=jnp.float32)
    y1 = y1 + b1_ref[0]
    if leaky:
        y1 = jnp.where(y1 >= 0.0, y1, 0.1 * y1)
    y1 = y1.reshape(th + 2, wd, cm)

    # Rows outside the image must be the 3x3's ZERO padding (not conv-of-zero-input).
    ridx = lax.broadcasted_iota(jnp.int32, (th + 2, 1, 1), 0)
    pad_row = ((t == 0) & (ridx == 0)) | ((t == nt - 1) & (ridx == th + 1))
    y1 = jnp.where(pad_row, 0.0, y1).astype(y1buf.dtype)

    # Stage into the (TH+2, W+2, Cmp) buffer; zero border columns give the p=1 pad.
    # (Re-zeroed every step: safe under "parallel" grid sharding across cores.)
    zcol = jnp.zeros((th + 2, 1, cm), y1buf.dtype)
    y1buf[:, 0:1, :] = zcol
    y1buf[:, wd + 1:wd + 2, :] = zcol
    y1buf[:, 1:wd + 1, :] = y1

    # ---- 3x3 conv: 9 accumulating matmuls over shifted views (no im2col patch).
    acc = jnp.zeros((th * wd, c2p), jnp.float32)
    for i in range(3):
        for j in range(3):
            tap = y1buf[i:i + th, j:j + wd, :].reshape(th * wd, cm)
            acc = acc + jnp.dot(tap, w2_ref[3 * i + j],
                                preferred_element_type=jnp.float32)
    acc = acc + b2_ref[0]
    if leaky:
        acc = jnp.where(acc >= 0.0, acc, 0.1 * acc)
    y2 = acc.reshape(th, wd, c2p)

    if add:
        res = x_ref[0, pl.ds(r0 + 1, th), :, :]                    # rows [r0, r0+TH)
        y2 = y2 + res.astype(jnp.float32)                          # C1p == C2p here

    o_ref[0] = y2.astype(o_ref.dtype)


# ----------------------------------------------------------------------------- wrapper
def bottleneck2(x_nchw, cv1_params, cv2_params, *, shortcut=True, g=1, eps=1e-5,
                leaky=True, compute_dtype=jnp.bfloat16):
    """Bottleneck2 forward. Input/output are NCHW (PyTorch layout); BN in eval mode."""
    w1, b1, g1, be1, m1, v1 = cv1_params        # cv1: Conv(c1, c_, k=1)
    w2, b2, g2, be2, m2, v2 = cv2_params        # cv2: Conv(c_, c2, k=3, p=1)
    assert g == 1  # TODO(synk): grouped convolution (g > 1) not implemented

    n, c1, h, w = x_nchw.shape
    c_ = w1.shape[0]
    c2 = w2.shape[0]
    add = shortcut and c1 == c2
    out_dtype = x_nchw.dtype

    c1p = _round_up(c1, 128)
    cmp_ = _round_up(c_, 128)
    c2p = _round_up(c2, 128)
    # TODO(synk): when the real channel count is << 128 the lane padding wastes MXU
    #             columns / HBM bytes; recovering that needs a pixel-packed layout.

    # One layout change at the module boundary: NCHW->NHWC, lane-dense channel pad,
    # one zero row top/bottom (uniform in-bounds halo reads; masked in-kernel).
    x_nhwc = jnp.transpose(x_nchw, (0, 2, 3, 1))
    x_rp = jnp.pad(x_nhwc, ((0, 0), (1, 1), (0, 0), (0, c1p - c1))).astype(compute_dtype)

    # ---- fold BN (eval) + conv bias into the weights in f32; cast weights only ----
    s1 = (g1 / jnp.sqrt(v1 + eps)).astype(jnp.float32)
    w1_2d = w1[:, :, 0, 0].astype(jnp.float32).T * s1[None, :]          # (c1, c_)
    bias1 = ((b1 - m1) * s1 + be1).astype(jnp.float32)
    w1_p = (jnp.zeros((c1p, cmp_), jnp.float32).at[:c1, :c_].set(w1_2d)
            .astype(compute_dtype))
    bias1_p = jnp.zeros((1, cmp_), jnp.float32).at[0, :c_].set(bias1)

    s2 = (g2 / jnp.sqrt(v2 + eps)).astype(jnp.float32)
    w2_hwio = jnp.transpose(w2.astype(jnp.float32), (2, 3, 1, 0)) * s2[None, None, None, :]
    bias2 = ((b2 - m2) * s2 + be2).astype(jnp.float32)
    w2_p = jnp.zeros((3, 3, cmp_, c2p), jnp.float32).at[:, :, :c_, :c2].set(w2_hwio)
    w2_taps = w2_p.reshape(9, cmp_, c2p).astype(compute_dtype)
    bias2_p = jnp.zeros((1, c2p), jnp.float32).at[0, :c2].set(bias2)

    th = _pick_row_tile(n, h, w)
    nt = h // th

    flops = 2 * n * h * w * (c1p * cmp_ + 9 * cmp_ * c2p)
    bytes_acc = (x_rp.size * x_rp.dtype.itemsize
                 + w1_p.size * w1_p.dtype.itemsize
                 + w2_taps.size * w2_taps.dtype.itemsize
                 + bias1_p.size * 4 + bias2_p.size * 4
                 + n * h * w * c2p * jnp.dtype(out_dtype).itemsize)

    y2 = pl.pallas_call(
        functools.partial(_bottleneck2_kernel, th=th, leaky=leaky, add=add),
        out_shape=jax.ShapeDtypeStruct((n, h, w, c2p), out_dtype),
        grid=(n, nt),
        in_specs=[
            # Row-padded image, resident across the row-tile axis (bf16 keeps it small).
            # TODO(synk): single-buffer this resident operand once pipeline_mode tuning
            #             is validated on all generations.
            pl.BlockSpec((1, h + 2, w, c1p), lambda b, t: (b, 0, 0, 0)),
            pl.BlockSpec((c1p, cmp_), lambda b, t: (0, 0)),
            pl.BlockSpec((1, cmp_), lambda b, t: (0, 0)),
            pl.BlockSpec((9, cmp_, c2p), lambda b, t: (0, 0, 0)),
            pl.BlockSpec((1, c2p), lambda b, t: (0, 0)),
        ],
        out_specs=pl.BlockSpec((1, th, w, c2p), lambda b, t: (b, t, 0, 0)),
        scratch_shapes=[pltpu.VMEM((th + 2, w + 2, cmp_), compute_dtype)],
        compiler_params=pltpu.CompilerParams(
            dimension_semantics=("parallel", "parallel"),
            vmem_limit_bytes=_vmem_limit_bytes()),
        cost_estimate=pl.CostEstimate(flops=int(flops), transcendentals=0,
                                      bytes_accessed=int(bytes_acc)),
    )(x_rp, w1_p, bias1_p, w2_taps, bias2_p)

    return jnp.transpose(y2[..., :c2], (0, 3, 1, 2))


# ----------------------------------------------------------------------------- reference
def _conv_block_ref(x, w, b, gamma, beta, mean, var, *, s, p, d, g, eps=1e-5, leaky=True):
    y = jax.lax.conv_general_dilated(
        x, w, window_strides=(s, s), padding=[(p, p), (p, p)],
        rhs_dilation=(d, d), feature_group_count=g,
        dimension_numbers=("NCHW", "OIHW", "NCHW"))
    y = y + b[None, :, None, None]
    y = (y - mean[None, :, None, None]) / jnp.sqrt(var + eps)[None, :, None, None]
    y = y * gamma[None, :, None, None] + beta[None, :, None, None]
    if leaky:
        y = jnp.where(y >= 0, y, 0.1 * y)
    return y


def _bottleneck2_ref(x, cv1, cv2, *, shortcut, g):
    add = shortcut and x.shape[1] == cv2[0].shape[0]
    y = _conv_block_ref(x, *cv1, s=1, p=0, d=1, g=1)
    y = _conv_block_ref(y, *cv2, s=1, p=1, d=1, g=g)
    return x + y if add else y


# ----------------------------------------------------------------------------- test
if __name__ == "__main__":
    # Bottleneck2(c1=8, c2=8, shortcut=True, e=0.5) -> c_ = 4
    N, C1, H, W = 2, 8, 16, 16
    C2, E, G = 8, 0.5, 1
    C_ = int(C2 * E)

    key = jax.random.PRNGKey(0)
    ks = jax.random.split(key, 13)

    x = jax.random.normal(ks[0], (N, C1, H, W), jnp.float32)

    w1 = 0.1 * jax.random.normal(ks[1], (C_, C1, 1, 1), jnp.float32)
    b1 = 0.1 * jax.random.normal(ks[2], (C_,), jnp.float32)
    g1 = 1.0 + 0.1 * jax.random.normal(ks[3], (C_,), jnp.float32)
    be1 = 0.1 * jax.random.normal(ks[4], (C_,), jnp.float32)
    m1 = 0.1 * jax.random.normal(ks[5], (C_,), jnp.float32)
    v1 = jnp.abs(1.0 + 0.1 * jax.random.normal(ks[6], (C_,), jnp.float32))

    w2 = 0.1 * jax.random.normal(ks[7], (C2, C_, 3, 3), jnp.float32)
    b2 = 0.1 * jax.random.normal(ks[8], (C2,), jnp.float32)
    g2 = 1.0 + 0.1 * jax.random.normal(ks[9], (C2,), jnp.float32)
    be2 = 0.1 * jax.random.normal(ks[10], (C2,), jnp.float32)
    m2 = 0.1 * jax.random.normal(ks[11], (C2,), jnp.float32)
    v2 = jnp.abs(1.0 + 0.1 * jax.random.normal(ks[12], (C2,), jnp.float32))

    cv1 = (w1, b1, g1, be1, m1, v1)
    cv2 = (w2, b2, g2, be2, m2, v2)

    # Exercise residual / plain paths, and both the exact f32 and fast bf16 compute paths.
    for shortcut in (True, False):
        ref = _bottleneck2_ref(x, cv1, cv2, shortcut=shortcut, g=G)
        for cdt, rtol, atol in ((jnp.float32, 1e-4, 1e-4), (jnp.bfloat16, 3e-2, 3e-2)):
            out = bottleneck2(x, cv1, cv2, shortcut=shortcut, g=G, compute_dtype=cdt)
            out = jax.block_until_ready(out)
            np.testing.assert_allclose(np.asarray(out), np.asarray(ref),
                                       rtol=rtol, atol=atol)

    print("KERNEL_OK")
</pallas_src>

<mosaic_0001>
module attributes {stable_mosaic.version = 11 : i64} {
  func.func @_bottleneck2_kernel(%arg0: i32, %arg1: i32, %arg2: memref<1x18x16x128xf32, #tpu.memory_space<vmem>>, %arg3: memref<128x128xf32, #tpu.memory_space<vmem>>, %arg4: memref<1x128xf32, #tpu.memory_space<vmem>>, %arg5: memref<9x128x128xf32, #tpu.memory_space<vmem>>, %arg6: memref<1x128xf32, #tpu.memory_space<vmem>>, %arg7: memref<1x16x16x128xf32, #tpu.memory_space<vmem>>, %arg8: memref<18x18x128xf32, #tpu.memory_space<vmem>>) attributes {dimension_semantics = [#tpu.dimension_semantics<parallel>, #tpu.dimension_semantics<parallel>], iteration_bounds = array<i64: 2, 1>, scalar_prefetch = 0 : i64, scratch_operands = 1 : i64, tpu.core_type = #tpu.core_type<tc>, window_params = [{transform_indices = @transform_0, window_bounds = array<i64: 1, 18, 16, 128>}, {pipeline_mode = #tpu.pipeline_mode<synchronous>, transform_indices = @transform_1, window_bounds = array<i64: 128, 128>}, {pipeline_mode = #tpu.pipeline_mode<synchronous>, transform_indices = @transform_2, window_bounds = array<i64: 1, 128>}, {pipeline_mode = #tpu.pipeline_mode<synchronous>, transform_indices = @transform_3, window_bounds = array<i64: 9, 128, 128>}, {pipeline_mode = #tpu.pipeline_mode<synchronous>, transform_indices = @transform_4, window_bounds = array<i64: 1, 128>}, {transform_indices = @transform_5, window_bounds = array<i64: 1, 16, 16, 128>}]} {
    %c16_i32 = arith.constant 16 : i32
    %0 = arith.muli %arg1, %c16_i32 : i32
    %1 = tpu.assume_multiple %0, 16 : i32
    %c0 = arith.constant 0 : index
    %2 = arith.index_cast %1 : i32 to index
    %c0_0 = arith.constant 0 : index
    %c0_1 = arith.constant 0 : index
    %3 = vector.load %arg2[%c0, %2, %c0_0, %c0_1] : memref<1x18x16x128xf32, #tpu.memory_space<vmem>>, vector<1x18x16x128xf32>
    %4 = vector.shape_cast %3 : vector<1x18x16x128xf32> to vector<18x16x128xf32>
    %5 = vector.shape_cast %4 : vector<18x16x128xf32> to vector<288x128xf32>
    %c0_2 = arith.constant 0 : index
    %c0_3 = arith.constant 0 : index
    %6 = vector.load %arg3[%c0_2, %c0_3] : memref<128x128xf32, #tpu.memory_space<vmem>>, vector<128x128xf32>
    %cst = arith.constant dense<0.000000e+00> : vector<288x128xf32>
    %7 = tpu.matmul %5, %6, %cst {dimension_numbers = #tpu.dot_dimension_numbers<[1], [0], [0], [1], [0, 0, 1, 1], [], []>} : vector<288x128xf32>, vector<128x128xf32>, vector<288x128xf32> -> vector<288x128xf32>
    %c0_4 = arith.constant 0 : index
    %c0_5 = arith.constant 0 : index
    %8 = vector.load %arg4[%c0_4, %c0_5] : memref<1x128xf32, #tpu.memory_space<vmem>>, vector<1x128xf32>
    %9 = vector.shape_cast %8 : vector<1x128xf32> to vector<128xf32>
    %10 = vector.shape_cast %9 : vector<128xf32> to vector<1x128xf32>
    %11 = vector.broadcast %10 : vector<1x128xf32> to vector<288x128xf32>
    %12 = arith.addf %7, %11 : vector<288x128xf32>
    %cst_6 = arith.constant 0.000000e+00 : f32
    %13 = vector.broadcast %cst_6 : f32 to vector<288x128xf32>
    %14 = arith.cmpf oge, %12, %13 : vector<288x128xf32>
    %cst_7 = arith.constant 1.000000e-01 : f32
    %15 = vector.broadcast %cst_7 : f32 to vector<288x128xf32>
    %16 = arith.mulf %15, %12 : vector<288x128xf32>
    %17 = arith.select %14, %12, %16 : vector<288x128xi1>, vector<288x128xf32>
    %18 = vector.shape_cast %17 : vector<288x128xf32> to vector<18x16x128xf32>
    %19 = tpu.iota {dimensions = array<i32: 0>} : vector<18x1x1xi32>
    %c0_i32 = arith.constant 0 : i32
    %20 = arith.cmpi eq, %arg1, %c0_i32 : i32
    %c0_i32_8 = arith.constant 0 : i32
    %21 = vector.broadcast %c0_i32_8 : i32 to vector<18x1x1xi32>
    %22 = arith.cmpi eq, %19, %21 : vector<18x1x1xi32>
    %23 = vector.broadcast %20 : i1 to vector<18x1x1xi1>
    %24 = arith.andi %23, %22 : vector<18x1x1xi1>
    %c0_i32_9 = arith.constant 0 : i32
    %25 = arith.cmpi eq, %arg1, %c0_i32_9 : i32
    %c17_i32 = arith.constant 17 : i32
    %26 = vector.broadcast %c17_i32 : i32 to vector<18x1x1xi32>
    %27 = arith.cmpi eq, %19, %26 : vector<18x1x1xi32>
    %28 = vector.broadcast %25 : i1 to vector<18x1x1xi1>
    %29 = arith.andi %28, %27 : vector<18x1x1xi1>
    %30 = arith.ori %24, %29 : vector<18x1x1xi1>
    %cst_10 = arith.constant 0.000000e+00 : f32
    %31 = vector.shape_cast %30 : vector<18x1x1xi1> to vector<18x1x1xi1>
    %32 = vector.broadcast %31 : vector<18x1x1xi1> to vector<18x16x128xi1>
    %33 = vector.broadcast %cst_10 : f32 to vector<18x16x128xf32>
    %34 = arith.select %32, %33, %18 : vector<18x16x128xi1>, vector<18x16x128xf32>
    %cst_11 = arith.constant 0.000000e+00 : f32
    %35 = vector.broadcast %cst_11 : f32 to vector<18x1x128xf32>
    %c0_12 = arith.constant 0 : index
    %c0_13 = arith.constant 0 : index
    %c0_14 = arith.constant 0 : index
    %36 = vector.load %arg8[%c0_12, %c0_13, %c0_14] : memref<18x18x128xf32, #tpu.memory_space<vmem>>, vector<18x1x128xf32>
    tpu.vector_store %arg8[%c0_12, %c0_13, %c0_14], %35 {strides = array<i32>} : memref<18x18x128xf32, #tpu.memory_space<vmem>>, vector<18x1x128xf32>,
    %c0_15 = arith.constant 0 : index
    %c17 = arith.constant 17 : index
    %c0_16 = arith.constant 0 : index
    %37 = vector.load %arg8[%c0_15, %c17, %c0_16] : memref<18x18x128xf32, #tpu.memory_space<vmem>>, vector<18x1x128xf32>
    tpu.vector_store %arg8[%c0_15, %c17, %c0_16], %35 {strides = array<i32>} : memref<18x18x128xf32, #tpu.memory_space<vmem>>, vector<18x1x128xf32>,
    %c0_17 = arith.constant 0 : index
    %c1 = arith.constant 1 : index
    %c0_18 = arith.constant 0 : index
    %38 = vector.load %arg8[%c0_17, %c1, %c0_18] : memref<18x18x128xf32, #tpu.memory_space<vmem>>, vector<18x16x128xf32>
    tpu.vector_store %arg8[%c0_17, %c1, %c0_18], %34 {strides = array<i32>} : memref<18x18x128xf32, #tpu.memory_space<vmem>>, vector<18x16x128xf32>,
    %cst_19 = arith.constant 0.000000e+00 : f32
    %39 = vector.broadcast %cst_19 : f32 to vector<256x128xf32>
    %c0_20 = arith.constant 0 : index
    %c0_21 = arith.constant 0 : index
    %c0_22 = arith.constant 0 : index
    %40 = vector.load %arg8[%c0_20, %c0_21, %c0_22] : memref<18x18x128xf32, #tpu.memory_space<vmem>>, vector<16x16x128xf32>
    %41 = vector.shape_cast %40 : vector<16x16x128xf32> to vector<256x128xf32>
    %c0_23 = arith.constant 0 : index
    %c0_24 = arith.constant 0 : index
    %c0_25 = arith.constant 0 : index
    %42 = vector.load %arg5[%c0_23, %c0_24, %c0_25] : memref<9x128x128xf32, #tpu.memory_space<vmem>>, vector<1x128x128xf32>
    %43 = vector.shape_cast %42 : vector<1x128x128xf32> to vector<128x128xf32>
    %cst_26 = arith.constant dense<0.000000e+00> : vector<256x128xf32>
    %44 = tpu.matmul %41, %43, %cst_26 {dimension_numbers = #tpu.dot_dimension_numbers<[1], [0], [0], [1], [0, 0, 1, 1], [], []>} : vector<256x128xf32>, vector<128x128xf32>, vector<256x128xf32> -> vector<256x128xf32>
    %45 = arith.addf %39, %44 : vector<256x128xf32>
    %c0_27 = arith.constant 0 : index
    %c1_28 = arith.constant 1 : index
    %c0_29 = arith.constant 0 : index
    %46 = vector.load %arg8[%c0_27, %c1_28, %c0_29] : memref<18x18x128xf32, #tpu.memory_space<vmem>>, vector<16x16x128xf32>
    %47 = vector.shape_cast %46 : vector<16x16x128xf32> to vector<256x128xf32>
    %c1_30 = arith.constant 1 : index
    %c0_31 = arith.constant 0 : index
    %c0_32 = arith.constant 0 : index
    %48 = vector.load %arg5[%c1_30, %c0_31, %c0_32] : memref<9x128x128xf32, #tpu.memory_space<vmem>>, vector<1x128x128xf32>
    %49 = vector.shape_cast %48 : vector<1x128x128xf32> to vector<128x128xf32>
    %cst_33 = arith.constant dense<0.000000e+00> : vector<256x128xf32>
    %50 = tpu.matmul %47, %49, %cst_33 {dimension_numbers = #tpu.dot_dimension_numbers<[1], [0], [0], [1], [0, 0, 1, 1], [], []>} : vector<256x128xf32>, vector<128x128xf32>, vector<256x128xf32> -> vector<256x128xf32>
    %51 = arith.addf %45, %50 : vector<256x128xf32>
    %c0_34 = arith.constant 0 : index
    %c2 = arith.constant 2 : index
    %c0_35 = arith.constant 0 : index
    %52 = vector.load %arg8[%c0_34, %c2, %c0_35] : memref<18x18x128xf32, #tpu.memory_space<vmem>>, vector<16x16x128xf32>
    %53 = vector.shape_cast %52 : vector<16x16x128xf32> to vector<256x128xf32>
    %c2_36 = arith.constant 2 : index
    %c0_37 = arith.constant 0 : index
    %c0_38 = arith.constant 0 : index
    %54 = vector.load %arg5[%c2_36, %c0_37, %c0_38] : memref<9x128x128xf32, #tpu.memory_space<vmem>>, vector<1x128x128xf32>
    %55 = vector.shape_cast %54 : vector<1x128x128xf32> to vector<128x128xf32>
    %cst_39 = arith.constant dense<0.000000e+00> : vector<256x128xf32>
    %56 = tpu.matmul %53, %55, %cst_39 {dimension_numbers = #tpu.dot_dimension_numbers<[1], [0], [0], [1], [0, 0, 1, 1], [], []>} : vector<256x128xf32>, vector<128x128xf32>, vector<256x128xf32> -> vector<256x128xf32>
    %57 = arith.addf %51, %56 : vector<256x128xf32>
    %c1_40 = arith.constant 1 : index
    %c0_41 = arith.constant 0 : index
    %c0_42 = arith.constant 0 : index
    %58 = vector.load %arg8[%c1_40, %c0_41, %c0_42] : memref<18x18x128xf32, #tpu.memory_space<vmem>>, vector<16x16x128xf32>
    %59 = vector.shape_cast %58 : vector<16x16x128xf32> to vector<256x128xf32>
    %c3 = arith.constant 3 : index
    %c0_43 = arith.constant 0 : index
    %c0_44 = arith.constant 0 : index
    %60 = vector.load %arg5[%c3, %c0_43, %c0_44] : memref<9x128x128xf32, #tpu.memory_space<vmem>>, vector<1x128x128xf32>
    %61 = vector.shape_cast %60 : vector<1x128x128xf32> to vector<128x128xf32>
    %cst_45 = arith.constant dense<0.000000e+00> : vector<256x128xf32>
    %62 = tpu.matmul %59, %61, %cst_45 {dimension_numbers = #tpu.dot_dimension_numbers<[1], [0], [0], [1], [0, 0, 1, 1], [], []>} : vector<256x128xf32>, vector<128x128xf32>, vector<256x128xf32> -> vector<256x128xf32>
    %63 = arith.addf %57, %62 : vector<256x128xf32>
    %c1_46 = arith.constant 1 : index
    %c1_47 = arith.constant 1 : index
    %c0_48 = arith.constant 0 : index
    %64 = vector.load %arg8[%c1_46, %c1_47, %c0_48] : memref<18x18x128xf32, #tpu.memory_space<vmem>>, vector<16x16x128xf32>
    %65 = vector.shape_cast %64 : vector<16x16x128xf32> to vector<256x128xf32>
    %c4 = arith.constant 4 : index
    %c0_49 = arith.constant 0 : index
    %c0_50 = arith.constant 0 : index
    %66 = vector.load %arg5[%c4, %c0_49, %c0_50] : memref<9x128x128xf32, #tpu.memory_space<vmem>>, vector<1x128x128xf32>
    %67 = vector.shape_cast %66 : vector<1x128x128xf32> to vector<128x128xf32>
    %cst_51 = arith.constant dense<0.000000e+00> : vector<256x128xf32>
    %68 = tpu.matmul %65, %67, %cst_51 {dimension_numbers = #tpu.dot_dimension_numbers<[1], [0], [0], [1], [0, 0, 1, 1], [], []>} : vector<256x128xf32>, vector<128x128xf32>, vector<256x128xf32> -> vector<256x128xf32>
    %69 = arith.addf %63, %68 : vector<256x128xf32>
    %c1_52 = arith.constant 1 : index
    %c2_53 = arith.constant 2 : index
    %c0_54 = arith.constant 0 : index
    %70 = vector.load %arg8[%c1_52, %c2_53, %c0_54] : memref<18x18x128xf32, #tpu.memory_space<vmem>>, vector<16x16x128xf32>
    %71 = vector.shape_cast %70 : vector<16x16x128xf32> to vector<256x128xf32>
    %c5 = arith.constant 5 : index
    %c0_55 = arith.constant 0 : index
    %c0_56 = arith.constant 0 : index
    %72 = vector.load %arg5[%c5, %c0_55, %c0_56] : memref<9x128x128xf32, #tpu.memory_space<vmem>>, vector<1x128x128xf32>
    %73 = vector.shape_cast %72 : vector<1x128x128xf32> to vector<128x128xf32>
    %cst_57 = arith.constant dense<0.000000e+00> : vector<256x128xf32>
    %74 = tpu.matmul %71, %73, %cst_57 {dimension_numbers = #tpu.dot_dimension_numbers<[1], [0], [0], [1], [0, 0, 1, 1], [], []>} : vector<256x128xf32>, vector<128x128xf32>, vector<256x128xf32> -> vector<256x128xf32>
    %75 = arith.addf %69, %74 : vector<256x128xf32>
    %c2_58 = arith.constant 2 : index
    %c0_59 = arith.constant 0 : index
    %c0_60 = arith.constant 0 : index
    %76 = vector.load %arg8[%c2_58, %c0_59, %c0_60] : memref<18x18x128xf32, #tpu.memory_space<vmem>>, vector<16x16x128xf32>
    %77 = vector.shape_cast %76 : vector<16x16x128xf32> to vector<256x128xf32>
    %c6 = arith.constant 6 : index
    %c0_61 = arith.constant 0 : index
    %c0_62 = arith.constant 0 : index
    %78 = vector.load %arg5[%c6, %c0_61, %c0_62] : memref<9x128x128xf32, #tpu.memory_space<vmem>>, vector<1x128x128xf32>
    %79 = vector.shape_cast %78 : vector<1x128x128xf32> to vector<128x128xf32>
    %cst_63 = arith.constant dense<0.000000e+00> : vector<256x128xf32>
    %80 = tpu.matmul %77, %79, %cst_63 {dimension_numbers = #tpu.dot_dimension_numbers<[1], [0], [0], [1], [0, 0, 1, 1], [], []>} : vector<256x128xf32>, vector<128x128xf32>, vector<256x128xf32> -> vector<256x128xf32>
    %81 = arith.addf %75, %80 : vector<256x128xf32>
    %c2_64 = arith.constant 2 : index
    %c1_65 = arith.constant 1 : index
    %c0_66 = arith.constant 0 : index
    %82 = vector.load %arg8[%c2_64, %c1_65, %c0_66] : memref<18x18x128xf32, #tpu.memory_space<vmem>>, vector<16x16x128xf32>
    %83 = vector.shape_cast %82 : vector<16x16x128xf32> to vector<256x128xf32>
    %c7 = arith.constant 7 : index
    %c0_67 = arith.constant 0 : index
    %c0_68 = arith.constant 0 : index
    %84 = vector.load %arg5[%c7, %c0_67, %c0_68] : memref<9x128x128xf32, #tpu.memory_space<vmem>>, vector<1x128x128xf32>
    %85 = vector.shape_cast %84 : vector<1x128x128xf32> to vector<128x128xf32>
    %cst_69 = arith.constant dense<0.000000e+00> : vector<256x128xf32>
    %86 = tpu.matmul %83, %85, %cst_69 {dimension_numbers = #tpu.dot_dimension_numbers<[1], [0], [0], [1], [0, 0, 1, 1], [], []>} : vector<256x128xf32>, vector<128x128xf32>, vector<256x128xf32> -> vector<256x128xf32>
    %87 = arith.addf %81, %86 : vector<256x128xf32>
    %c2_70 = arith.constant 2 : index
    %c2_71 = arith.constant 2 : index
    %c0_72 = arith.constant 0 : index
    %88 = vector.load %arg8[%c2_70, %c2_71, %c0_72] : memref<18x18x128xf32, #tpu.memory_space<vmem>>, vector<16x16x128xf32>
    %89 = vector.shape_cast %88 : vector<16x16x128xf32> to vector<256x128xf32>
    %c8 = arith.constant 8 : index
    %c0_73 = arith.constant 0 : index
    %c0_74 = arith.constant 0 : index
    %90 = vector.load %arg5[%c8, %c0_73, %c0_74] : memref<9x128x128xf32, #tpu.memory_space<vmem>>, vector<1x128x128xf32>
    %91 = vector.shape_cast %90 : vector<1x128x128xf32> to vector<128x128xf32>
    %cst_75 = arith.constant dense<0.000000e+00> : vector<256x128xf32>
    %92 = tpu.matmul %89, %91, %cst_75 {dimension_numbers = #tpu.dot_dimension_numbers<[1], [0], [0], [1], [0, 0, 1, 1], [], []>} : vector<256x128xf32>, vector<128x128xf32>, vector<256x128xf32> -> vector<256x128xf32>
    %93 = arith.addf %87, %92 : vector<256x128xf32>
    %c0_76 = arith.constant 0 : index
    %c0_77 = arith.constant 0 : index
    %94 = vector.load %arg6[%c0_76, %c0_77] : memref<1x128xf32, #tpu.memory_space<vmem>>, vector<1x128xf32>
    %95 = vector.shape_cast %94 : vector<1x128xf32> to vector<128xf32>
    %96 = vector.shape_cast %95 : vector<128xf32> to vector<1x128xf32>
    %97 = vector.broadcast %96 : vector<1x128xf32> to vector<256x128xf32>
    %98 = arith.addf %93, %97 : vector<256x128xf32>
    %cst_78 = arith.constant 0.000000e+00 : f32
    %99 = vector.broadcast %cst_78 : f32 to vector<256x128xf32>
    %100 = arith.cmpf oge, %98, %99 : vector<256x128xf32>
    %cst_79 = arith.constant 1.000000e-01 : f32
    %101 = vector.broadcast %cst_79 : f32 to vector<256x128xf32>
    %102 = arith.mulf %101, %98 : vector<256x128xf32>
    %103 = arith.select %100, %98, %102 : vector<256x128xi1>, vector<256x128xf32>
    %104 = vector.shape_cast %103 : vector<256x128xf32> to vector<16x16x128xf32>
    %c1_i32 = arith.constant 1 : i32
    %105 = arith.addi %1, %c1_i32 : i32
    %c0_80 = arith.constant 0 : index
    %106 = arith.index_cast %105 : i32 to index
    %c0_81 = arith.constant 0 : index
    %c0_82 = arith.constant 0 : index
    %107 = vector.load %arg2[%c0_80, %106, %c0_81, %c0_82] : memref<1x18x16x128xf32, #tpu.memory_space<vmem>>, vector<1x16x16x128xf32>
    %108 = vector.shape_cast %107 : vector<1x16x16x128xf32> to vector<16x16x128xf32>
    %109 = arith.addf %104, %108 : vector<16x16x128xf32>
    %c0_83 = arith.constant 0 : index
    %c0_84 = arith.constant 0 : index
    %c0_85 = arith.constant 0 : index
    %c0_86 = arith.constant 0 : index
    %110 = vector.load %arg7[%c0_83, %c0_84, %c0_85, %c0_86] : memref<1x16x16x128xf32, #tpu.memory_space<vmem>>, vector<1x16x16x128xf32>
    %111 = vector.shape_cast %110 : vector<1x16x16x128xf32> to vector<16x16x128xf32>
    %112 = vector.shape_cast %109 : vector<16x16x128xf32> to vector<1x16x16x128xf32>
    tpu.vector_store %arg7[%c0_83, %c0_84, %c0_85, %c0_86], %112 {strides = array<i32>} : memref<1x16x16x128xf32, #tpu.memory_space<vmem>>, vector<1x16x16x128xf32>,
    return
  }
  func.func @transform_0(%arg0: i32, %arg1: i32) -> (i32, i32, i32, i32) {
    %c0_i32 = arith.constant 0 : i32
    %c0_i32_0 = arith.constant 0 : i32
    %c0_i32_1 = arith.constant 0 : i32
    %c0_i32_2 = arith.constant 0 : i32
    return %arg0, %c0_i32, %c0_i32_0, %c0_i32_1 : i32, i32, i32, i32
  }
  func.func @transform_1(%arg0: i32, %arg1: i32) -> (i32, i32) {
    %c0_i32 = arith.constant 0 : i32
    %c0_i32_0 = arith.constant 0 : i32
    %c0_i32_1 = arith.constant 0 : i32
    return %c0_i32, %c0_i32_0 : i32, i32
  }
  func.func @transform_2(%arg0: i32, %arg1: i32) -> (i32, i32) {
    %c0_i32 = arith.constant 0 : i32
    %c0_i32_0 = arith.constant 0 : i32
    %c0_i32_1 = arith.constant 0 : i32
    return %c0_i32, %c0_i32_0 : i32, i32
  }
  func.func @transform_3(%arg0: i32, %arg1: i32) -> (i32, i32, i32) {
    %c0_i32 = arith.constant 0 : i32
    %c0_i32_0 = arith.constant 0 : i32
    %c0_i32_1 = arith.constant 0 : i32
    %c0_i32_2 = arith.constant 0 : i32
    return %c0_i32, %c0_i32_0, %c0_i32_1 : i32, i32, i32
  }
  func.func @transform_4(%arg0: i32, %arg1: i32) -> (i32, i32) {
    %c0_i32 = arith.constant 0 : i32
    %c0_i32_0 = arith.constant 0 : i32
    %c0_i32_1 = arith.constant 0 : i32
    return %c0_i32, %c0_i32_0 : i32, i32
  }
  func.func @transform_5(%arg0: i32, %arg1: i32) -> (i32, i32, i32, i32) {
    %c0_i32 = arith.constant 0 : i32
    %c0_i32_0 = arith.constant 0 : i32
    %c0_i32_1 = arith.constant 0 : i32
    return %arg0, %arg1, %c0_i32, %c0_i32_0 : i32, i32, i32, i32
  }
}

</mosaic_0001>

<llo_original>
// kernel: tpu_custom_call.1
$region0: #{tpu_custom_call.1}
  #allocation0 [shape = 'u32[]', space=smem, size = 0x4, offset = 0x4, fixed_abs, tag = 'smem constant byte address 0x4 - core index']
  #allocation1 [shape = 'u32[144,128]{1,0:T(1,128)}', space=vmem, size = 0x12000, scoped, tag = 'internal scratch']
  #allocation2 [shape = 'f32[18,18,128]{2,1,0:T(8,128)}', space=vmem, size = 0x36000, scoped, tag = 'scratch operand']
  %s0 = inlined_call_operand.hbm [shape: f32[2,18,16,128], index: 0, kind: input, shape index: {}]
  %s1 = inlined_call_operand.hbm [shape: f32[128,128], index: 1, kind: input, shape index: {}]
  %s2 = inlined_call_operand.vmem [shape: f32[1,128], index: 2, kind: input, shape index: {}]
  %s3 = inlined_call_operand.hbm [shape: f32[9,128,128], index: 3, kind: input, shape index: {}]
  %s4 = inlined_call_operand.vmem [shape: f32[1,128], index: 4, kind: input, shape index: {}]
  %s5 = inlined_call_operand.hbm [shape: f32[2,16,16,128], index: 5, kind: output, shape index: {}]
  %s6 = sld [smem:[#allocation0]]
  $region65: #{tpu_custom_call.1} parent=0
    _
  %s8 = ssub.s32 1, %s6
  %s9 = scalar_select 0, %s8, %s6
  $region1: #{tpu_custom_call.1} parent=0
    #allocation3 [shape = 'u8[294912]{0}', space=vmem, size = 0x48000, scoped, tag = 'input window, operand 0']
    #allocation4 [shape = 's32[2]{0}', space=sflag, size = 0x8, scoped, tag = 'scoped memory for tpu_custom_call.1']
    #allocation5 [shape = 's32[2]{0}', space=sflag, size = 0x8, scoped, tag = 'scoped memory for tpu_custom_call.1']
    #allocation6 [shape = 'u8[65536]{0}', space=vmem, size = 0x10000, scoped, tag = 'input window, operand 1, single buffered']
    #allocation7 [shape = 's32[1]{0}', space=sflag, size = 0x4, scoped, tag = 'scoped memory for tpu_custom_call.1']
    #allocation8 [shape = 'u8[589824]{0}', space=vmem, size = 0x90000, scoped, tag = 'input window, operand 3, single buffered']
    #allocation9 [shape = 'u8[262144]{0}', space=vmem, size = 0x40000, scoped, tag = 'output window, operand 0']
    %10 = vsyncpa [#allocation4], 0
    %s11 = scalar_lea.sflag [#allocation4], 1
    %12 = vsyncpa %s11, 0
    %13 = vsyncpa [#allocation7], 0
    %14 = vsyncpa [#allocation5], 0
    %s15 = scalar_lea.sflag [#allocation5], 1
    %16 = vsyncpa %s15, 0
    loop: start=0, step=1, limit=4
    $region2: #{tpu_custom_call.1} parent=1 // loop_pre_header
      _
    $region3: #{tpu_custom_call.1} parent=1 // loop_header
      %s18 = sphi 0, %s22
      %p19 = scmp.ge.s32.totalorder %s18, 4
      %s25 = sphi 0, %s37
      %s26 = sphi 0, %s33
      %s27 = sphi 0, %s25
      %s28 = sphi 0, %s26
      %s29 = sphi 0, %s27
      %s30 = sphi 0, %s28
      %s40 = sphi 0, %s42
      %s43 = sphi 0, %s40
      %s44 = sphi 0, %s43
      %s60 = sphi 0, %s44
      %s64 = sphi 0, %s64
      %s66 = sphi 0, %s64
      %s67 = sphi 0, %s66
      %s81 = sphi 0, %s67
      %s85 = sphi 0, %s85
      %s87 = sphi 0, %s85
      %s88 = sphi 0, %s87
      %s102 = sphi 0, %s88
      %s106 = sphi 0, %s106
      %s108 = sphi 0, %s106
      %s109 = sphi 0, %s108
      %s123 = sphi 0, %s109
      %s127 = sphi 0, %s127
      %s129 = sphi 0, %s127
      %s130 = sphi 0, %s129
      %s144 = sphi 0, %s130
      %s152 = sphi 0, %s154
      %s155 = sphi 0, %s152
      %s156 = sphi 0, %s155
      %s172 = sphi 0, %s156
    $region4: #{tpu_custom_call.1} parent=1 // loop_header_branch
      %21 = sbr.rel (%p19) target = $region8
    $region5: #{tpu_custom_call.1} parent=1 // loop_body
      %s23 = ssub.s32 %s18, 1
      %s24 = ssub.s32 %s18, 2
      %s31 = sadd.s32 1, %s26
      %p32 = scmp.ge.s32.totalorder %s31, 1
      %s33 = scalar_select %p32, 0, %s31
      %s34 = sadd.s32 1, %s25
      %s35 = scalar_select %p32, %s34, %s25
      %p36 = scmp.ge.s32.totalorder %s35, 2
      %s37 = scalar_select %p36, 0, %s35
      %s38 = ssub.s32 %s25, %s37
      %p39 = scmp.eq.s32.totalorder %s38, 0
      %s41 = sadd.s32 %s40, 1
      %s42 = scalar_select %p39, %s40, %s41
      %p45 = pneg %p39
      %p46 = scmp.eq.s32.totalorder %s18, 1
      %p47 = por %p45, %p46
      %p48 = scmp.ne.s32.totalorder %s40, %s43
      %p49 = scmp.eq.s32.totalorder %s18, 0
      %p50 = por %p48, %p49
      %p51 = scmp.ne.s32.totalorder %s40, %s43
      %p52 = scmp.eq.s32.totalorder %s23, 1
      %p53 = por %p51, %p52
      %p54 = scmp.ne.s32.totalorder %s43, %s44
      %p55 = scmp.eq.s32.totalorder %s23, 0
      %p56 = por %p54, %p55
      %p57 = scmp.ne.s32.totalorder %s43, %s44
      %p58 = scmp.eq.s32.totalorder %s24, 1
      %p59 = por %p57, %p58
      %p61 = scmp.ne.s32.totalorder %s44, %s60
      %p62 = scmp.eq.s32.totalorder %s24, 0
      %p63 = por %p61, %p62
      %s65 = sadd.s32 %s64, 1
      %p68 = scmp.eq.s32.totalorder %s18, 1
      %p69 = scmp.ne.s32.totalorder %s64, %s66
      %p70 = scmp.eq.s32.totalorder %s18, 0
      %p71 = por %p69, %p70
      %p72 = scmp.ne.s32.totalorder %s64, %s66
      %p73 = scmp.eq.s32.totalorder %s23, 1
      %p74 = por %p72, %p73
      %p75 = scmp.ne.s32.totalorder %s66, %s67
      %p76 = scmp.eq.s32.totalorder %s23, 0
      %p77 = por %p75, %p76
      %p78 = scmp.ne.s32.totalorder %s66, %s67
      %p79 = scmp.eq.s32.totalorder %s24, 1
      %p80 = por %p78, %p79
      %p82 = scmp.ne.s32.totalorder %s67, %s81
      %p83 = scmp.eq.s32.totalorder %s24, 0
      %p84 = por %p82, %p83
      %s86 = sadd.s32 %s85, 1
      %p89 = scmp.eq.s32.totalorder %s18, 1
      %p90 = scmp.ne.s32.totalorder %s85, %s87
      %p91 = scmp.eq.s32.totalorder %s18, 0
      %p92 = por %p90, %p91
      %p93 = scmp.ne.s32.totalorder %s85, %s87
      %p94 = scmp.eq.s32.totalorder %s23, 1
      %p95 = por %p93, %p94
      %p96 = scmp.ne.s32.totalorder %s87, %s88
      %p97 = scmp.eq.s32.totalorder %s23, 0
      %p98 = por %p96, %p97
      %p99 = scmp.ne.s32.totalorder %s87, %s88
      %p100 = scmp.eq.s32.totalorder %s24, 1
      %p101 = por %p99, %p100
      %p103 = scmp.ne.s32.totalorder %s88, %s102
      %p104 = scmp.eq.s32.totalorder %s24, 0
      %p105 = por %p103, %p104
      %s107 = sadd.s32 %s106, 1
      %p110 = scmp.eq.s32.totalorder %s18, 1
      %p111 = scmp.ne.s32.totalorder %s106, %s108
      %p112 = scmp.eq.s32.totalorder %s18, 0
      %p113 = por %p111, %p112
      %p114 = scmp.ne.s32.totalorder %s106, %s108
      %p115 = scmp.eq.s32.totalorder %s23, 1
      %p116 = por %p114, %p115
      %p117 = scmp.ne.s32.totalorder %s108, %s109
      %p118 = scmp.eq.s32.totalorder %s23, 0
      %p119 = por %p117, %p118
      %p120 = scmp.ne.s32.totalorder %s108, %s109
      %p121 = scmp.eq.s32.totalorder %s24, 1
      %p122 = por %p120, %p121
      %p124 = scmp.ne.s32.totalorder %s109, %s123
      %p125 = scmp.eq.s32.totalorder %s24, 0
      %p126 = por %p124, %p125
      %s128 = sadd.s32 %s127, 1
      %p131 = scmp.eq.s32.totalorder %s18, 1
      %p132 = scmp.ne.s32.totalorder %s127, %s129
      %p133 = scmp.eq.s32.totalorder %s18, 0
      %p134 = por %p132, %p133
      %p135 = scmp.ne.s32.totalorder %s127, %s129
      %p136 = scmp.eq.s32.totalorder %s23, 1
      %p137 = por %p135, %p136
      %p138 = scmp.ne.s32.totalorder %s129, %s130
      %p139 = scmp.eq.s32.totalorder %s23, 0
      %p140 = por %p138, %p139
      %p141 = scmp.ne.s32.totalorder %s129, %s130
      %p142 = scmp.eq.s32.totalorder %s24, 1
      %p143 = por %p141, %p142
      %p145 = scmp.ne.s32.totalorder %s130, %s144
      %p146 = scmp.eq.s32.totalorder %s24, 0
      %p147 = por %p145, %p146
      %s148 = ssub.s32 %s25, %s37
      %s149 = ssub.s32 %s26, %s33
      %s150 = sor.u32 %s148, %s149
      %p151 = scmp.eq.s32.totalorder %s150, 0
      %s153 = sadd.s32 %s152, 1
      %s154 = scalar_select %p151, %s152, %s153
      %p157 = pneg %p151
      %p158 = scmp.eq.s32.totalorder %s18, 1
      %p159 = por %p157, %p158
      %p160 = scmp.ne.s32.totalorder %s152, %s155
      %p161 = scmp.eq.s32.totalorder %s18, 0
      %p162 = por %p160, %p161
      %p163 = scmp.ne.s32.totalorder %s152, %s155
      %p164 = scmp.eq.s32.totalorder %s23, 1
      %p165 = por %p163, %p164
      %p166 = scmp.ne.s32.totalorder %s155, %s156
      %p167 = scmp.eq.s32.totalorder %s23, 0
      %p168 = por %p166, %p167
      %p169 = scmp.ne.s32.totalorder %s155, %s156
      %p170 = scmp.eq.s32.totalorder %s24, 1
      %p171 = por %p169, %p170
      %p173 = scmp.ne.s32.totalorder %s156, %s172
      %p174 = scmp.eq.s32.totalorder %s24, 0
      %p175 = por %p173, %p174
      %p176 = scmp.le.s32.totalorder 1, %s18
      %p177 = scmp.lt.s32.totalorder %s18, 3
      %p178 = pnand %p176, %p177
      %p179 = pneg %p178
      // Predicated region
      $region9: #{tpu_custom_call.1} parent=5 // pred_check
        _
      $region10: #{tpu_custom_call.1} parent=5 // pred_check_branch
        %181 = sbr.rel (%p178) target = $region12
      $region11: #{tpu_custom_call.1} parent=5 // pred_region
        %s182 = ssub.s32 %s18, 1
        // Predicated region
        $region13: #{tpu_custom_call.1} parent=11 // pred_check
          %p183 = pneg %p77
        $region14: #{tpu_custom_call.1} parent=11 // pred_check_branch
          %185 = sbr.rel (%p183) target = $region16
        $region15: #{tpu_custom_call.1} parent=11 // pred_region
          %s187 = ssub.s32 2048, 2048
          %188 = vsyncadd [#allocation7], %s187
          %s189 = sshll.u32 [#allocation6], 4
          %s190 = int_to_ptr.vmem [resolvable:$true] %s189
          %195 = dma.hbm_to_vmem [thread:$0]  %s1, 2048, %s190, [#allocation7], 128, 128, 8
        $region16: #{tpu_custom_call.1} parent=11 // pred_fallthru
          _
        // Predicated region
        $region17: #{tpu_custom_call.1} parent=11 // pred_check
          %p196 = pneg %p98
        $region18: #{tpu_custom_call.1} parent=11 // pred_check_branch
          %198 = sbr.rel (%p196) target = $region20
        $region19: #{tpu_custom_call.1} parent=11 // pred_region
          _
        $region20: #{tpu_custom_call.1} parent=11 // pred_fallthru
          _
        // Predicated region
        $region21: #{tpu_custom_call.1} parent=11 // pred_check
          %p199 = pneg %p119
        $region22: #{tpu_custom_call.1} parent=11 // pred_check_branch
          %201 = sbr.rel (%p199) target = $region24
        $region23: #{tpu_custom_call.1} parent=11 // pred_region
          %s203 = ssub.s32 18432, 18432
          %204 = vsyncadd [#allocation7], %s203
          %s205 = sshll.u32 [#allocation8], 4
          %s206 = int_to_ptr.vmem [resolvable:$true] %s205
          %211 = dma.hbm_to_vmem [thread:$0]  %s3, 18432, %s206, [#allocation7], 128, 128, 8
        $region24: #{tpu_custom_call.1} parent=11 // pred_fallthru
          _
        // Predicated region
        $region25: #{tpu_custom_call.1} parent=11 // pred_check
          %p212 = pneg %p140
        $region26: #{tpu_custom_call.1} parent=11 // pred_check_branch
          %214 = sbr.rel (%p212) target = $region28
        $region27: #{tpu_custom_call.1} parent=11 // pred_region
          _
        $region28: #{tpu_custom_call.1} parent=11 // pred_fallthru
          _
      $region12: #{tpu_custom_call.1} parent=5 // pred_fallthru
        _
      %p215 = scmp.lt.s32.totalorder %s18, 2
      // Predicated region
      $region29: #{tpu_custom_call.1} parent=5 // pred_check
        %p216 = pneg %p215
      $region30: #{tpu_custom_call.1} parent=5 // pred_check_branch
        %218 = sbr.rel (%p216) target = $region32
      $region31: #{tpu_custom_call.1} parent=5 // pred_region
        // Predicated region
        $region33: #{tpu_custom_call.1} parent=31 // pred_check
          %p219 = pneg %p50
        $region34: #{tpu_custom_call.1} parent=31 // pred_check_branch
          %221 = sbr.rel (%p219) target = $region36
        $region35: #{tpu_custom_call.1} parent=31 // pred_region
          %s222 = sand.u32 %s40, 1
          %s223 = scalar_lea.sflag [#allocation4], %s222
          %s224 = sand.u32 %s40, 1
          %s225 = smul.addr %s224, 288
          %s226 = scalar_lea.vmem [#allocation3], %s225
          %s228 = ssub.s32 4608, 4608
          %229 = vsyncadd %s223, %s228
          %s230 = smul.addr %s25, 36
          %s231 = smul.addr %s230, 128
          %s232 = scalar_lea.hbm %s0, %s231
          %s233 = sshll.u32 %s226, 4
          %s234 = int_to_ptr.vmem [resolvable:$true] %s233
          %239 = dma.hbm_to_vmem [thread:$0]  %s232, 4608, %s234, %s223, 128, 128, 8
        $region36: #{tpu_custom_call.1} parent=31 // pred_fallthru
          _
      $region32: #{tpu_custom_call.1} parent=5 // pred_fallthru
        _
      %p240 = scmp.le.s32.totalorder 1, %s18
      %p241 = scmp.lt.s32.totalorder %s18, 3
      %p242 = pnand %p240, %p241
      %p243 = pneg %p242
      // Predicated region
      $region37: #{tpu_custom_call.1} parent=5 // pred_check
        _
      $region38: #{tpu_custom_call.1} parent=5 // pred_check_branch
        %245 = sbr.rel (%p242) target = $region40
      $region39: #{tpu_custom_call.1} parent=5 // pred_region
        %s246 = ssub.s32 %s18, 1
        %s247 = sand.u32 %s43, 1
        %s248 = scalar_lea.sflag [#allocation4], %s247
        %s249 = sand.u32 %s43, 1
        %s250 = smul.addr %s249, 288
        %s251 = scalar_lea.vmem [#allocation3], %s250
        // Predicated region
        $region41: #{tpu_custom_call.1} parent=39 // pred_check
          %p252 = pneg %p56
        $region42: #{tpu_custom_call.1} parent=39 // pred_check_branch
          %254 = sbr.rel (%p252) target = $region44
        $region43: #{tpu_custom_call.1} parent=39 // pred_region
          %255 = dma.done %s248, 4608
        $region44: #{tpu_custom_call.1} parent=39 // pred_fallthru
          _
        // Predicated region
        $region45: #{tpu_custom_call.1} parent=39 // pred_check
          %p256 = pneg %p77
        $region46: #{tpu_custom_call.1} parent=39 // pred_check_branch
          %258 = sbr.rel (%p256) target = $region48
        $region47: #{tpu_custom_call.1} parent=39 // pred_region
          %259 = dma.done [#allocation7], 2048
        $region48: #{tpu_custom_call.1} parent=39 // pred_fallthru
          _
        // Predicated region
        $region49: #{tpu_custom_call.1} parent=39 // pred_check
          %p260 = pneg %p119
        $region50: #{tpu_custom_call.1} parent=39 // pred_check_branch
          %262 = sbr.rel (%p260) target = $region52
        $region51: #{tpu_custom_call.1} parent=39 // pred_region
          %263 = dma.done [#allocation7], 18432
        $region52: #{tpu_custom_call.1} parent=39 // pred_fallthru
          _
        %s264 = sand.u32 %s43, 1
        %s265 = scalar_lea.sflag [#allocation4], %s264
        %s266 = sand.u32 %s43, 1
        %s267 = smul.addr %s266, 288
        %s268 = scalar_lea.vmem [#allocation3], %s267
        %p269 = pneg %p56
        %p270 = pneg %p53
        %p271 = pneg %p77
        %p272 = pneg %p74
        %p273 = pneg %p98
        %p274 = pneg %p95
        %p275 = pneg %p119
        %p276 = pneg %p116
        %p277 = pneg %p140
        %p278 = pneg %p137
        %p279 = pneg %p168
        %p280 = pneg %p165
        %s281 = sand.u32 %s155, 1
        %s282 = scalar_lea.sflag [#allocation5], %s281
        %s283 = sand.u32 %s155, 1
        %s284 = smul.addr %s283, 256
        %s285 = scalar_lea.vmem [#allocation9], %s284
        %s286 = smul.u32 16, %s28
        %s287 = smul.u32 %s28, 16
        %s288 = smul.u32 %s287, 16
        %s289 = scalar_lea.vmem %s251, %s288 [#allocation3]
        %v290 = vld [vmem:[%s289] sm:$0xff]
        %v291 = vld [vmem:[%s289 + $0x8] sm:$0xff]
        %v292 = vld [vmem:[%s289 + $0x10] sm:$0xff]
        %v293 = vld [vmem:[%s289 + $0x18] sm:$0xff]
        %v294 = vld [vmem:[%s289 + $0x20] sm:$0xff]
        %v295 = vld [vmem:[%s289 + $0x28] sm:$0xff]
        %v296 = vld [vmem:[%s289 + $0x30] sm:$0xff]
        %v297 = vld [vmem:[%s289 + $0x38] sm:$0xff]
        %v298 = vld [vmem:[%s289 + $0x40] sm:$0xff]
        %v299 = vld [vmem:[%s289 + $0x48] sm:$0xff]
        %v300 = vld [vmem:[%s289 + $0x50] sm:$0xff]
        %v301 = vld [vmem:[%s289 + $0x58] sm:$0xff]
        %v302 = vld [vmem:[%s289 + $0x60] sm:$0xff]
        %v303 = vld [vmem:[%s289 + $0x68] sm:$0xff]
        %v304 = vld [vmem:[%s289 + $0x70] sm:$0xff]
        %v305 = vld [vmem:[%s289 + $0x78] sm:$0xff]
        %v306 = vld [vmem:[%s289 + $0x80] sm:$0xff]
        %v307 = vld [vmem:[%s289 + $0x88] sm:$0xff]
        %v308 = vld [vmem:[%s289 + $0x90] sm:$0xff]
        %v309 = vld [vmem:[%s289 + $0x98] sm:$0xff]
        %v310 = vld [vmem:[%s289 + $0xa0] sm:$0xff]
        %v311 = vld [vmem:[%s289 + $0xa8] sm:$0xff]
        %v312 = vld [vmem:[%s289 + $0xb0] sm:$0xff]
        %v313 = vld [vmem:[%s289 + $0xb8] sm:$0xff]
        %v314 = vld [vmem:[%s289 + $0xc0] sm:$0xff]
        %v315 = vld [vmem:[%s289 + $0xc8] sm:$0xff]
        %v316 = vld [vmem:[%s289 + $0xd0] sm:$0xff]
        %v317 = vld [vmem:[%s289 + $0xd8] sm:$0xff]
        %v318 = vld [vmem:[%s289 + $0xe0] sm:$0xff]
        %v319 = vld [vmem:[%s289 + $0xe8] sm:$0xff]
        %v320 = vld [vmem:[%s289 + $0xf0] sm:$0xff]
        %v321 = vld [vmem:[%s289 + $0xf8] sm:$0xff]
        %v322 = vld [vmem:[%s289 + $0x100] sm:$0xff]
        %v323 = vld [vmem:[%s289 + $0x108] sm:$0xff]
        %v324 = vld [vmem:[%s289 + $0x110] sm:$0xff]
        %v325 = vld [vmem:[%s289 + $0x118] sm:$0xff]
        %v326 = vld [vmem:[#allocation6] sm:$0xff]
        %v327 = vld [vmem:[#allocation6 + $0x8] sm:$0xff]
        %v328 = vld [vmem:[#allocation6 + $0x10] sm:$0xff]
        %v329 = vld [vmem:[#allocation6 + $0x18] sm:$0xff]
        %v330 = vld [vmem:[#allocation6 + $0x20] sm:$0xff]
        %v331 = vld [vmem:[#allocation6 + $0x28] sm:$0xff]
        %v332 = vld [vmem:[#allocation6 + $0x30] sm:$0xff]
        %v333 = vld [vmem:[#allocation6 + $0x38] sm:$0xff]
        %v334 = vld [vmem:[#allocation6 + $0x40] sm:$0xff]
        %v335 = vld [vmem:[#allocation6 + $0x48] sm:$0xff]
        %v336 = vld [vmem:[#allocation6 + $0x50] sm:$0xff]
        %v337 = vld [vmem:[#allocation6 + $0x58] sm:$0xff]
        %v338 = vld [vmem:[#allocation6 + $0x60] sm:$0xff]
        %v339 = vld [vmem:[#allocation6 + $0x68] sm:$0xff]
        %v340 = vld [vmem:[#allocation6 + $0x70] sm:$0xff]
        %v341 = vld [vmem:[#allocation6 + $0x78] sm:$0xff]
        %v342 = vld [vmem:[%s2] sm:$0x1]
        %v344 = vlaneseq
        %v345 = vshrl.u32 %v344, 7
        %v346 = vsub.s32 0, %v345
        %v347 = vrot.slane %v342, %v346
        %349 = vmatprep.subr.mxu0 0.0
        %350 = vmatpush1.msra.mxu0 %v326
        %351 = vmatprep.subr.mxu0 0.0
        %352 = vmatpush1.msra.mxu0 %v327
        %353 = vmatprep.subr.mxu0 0.0
        %354 = vmatpush1.msra.mxu0 %v328
        %355 = vmatprep.subr.mxu0 0.0
        %356 = vmatpush1.msra.mxu0 %v329
        %357 = vmatprep.subr.mxu0 0.0
        %358 = vmatpush1.msra.mxu0 %v330
        %359 = vmatprep.subr.mxu0 0.0
        %360 = vmatpush1.msra.mxu0 %v331
        %361 = vmatprep.subr.mxu0 0.0
        %362 = vmatpush1.msra.mxu0 %v332
        %363 = vmatprep.subr.mxu0 0.0
        %364 = vmatpush1.msra.mxu0 %v333
        %365 = vmatprep.subr.mxu0 0.0
        %366 = vmatpush1.msra.mxu0 %v334
        %367 = vmatprep.subr.mxu0 0.0
        %368 = vmatpush1.msra.mxu0 %v335
        %369 = vmatprep.subr.mxu0 0.0
        %370 = vmatpush1.msra.mxu0 %v336
        %371 = vmatprep.subr.mxu0 0.0
        %372 = vmatpush1.msra.mxu0 %v337
        %373 = vmatprep.subr.mxu0 0.0
        %374 = vmatpush1.msra.mxu0 %v338
        %375 = vmatprep.subr.mxu0 0.0
        %376 = vmatpush1.msra.mxu0 %v339
        %377 = vmatprep.subr.mxu0 0.0
        %378 = vmatpush1.msra.mxu0 %v340
        %379 = vmatprep.subr.mxu0 0.0
        %380 = vmatpush1.msra.mxu0 %v341
        %381 = vmatprep.subr.mxu0 0.0
        %382 = vmatpush1.msra.mxu0 0.0
        %383 = vmatprep.subr.mxu0 0.0
        %384 = vmatpush1.msra.mxu0 0.0
        %385 = vmatprep.subr.mxu0 0.0
        %386 = vmatpush1.msra.mxu0 0.0
        %387 = vmatprep.subr.mxu0 0.0
        %388 = vmatpush1.msra.mxu0 0.0
        %389 = vmatprep.subr.mxu0 0.0
        %390 = vmatpush1.msra.mxu0 0.0
        %391 = vmatprep.subr.mxu0 0.0
        %392 = vmatpush1.msra.mxu0 0.0
        %393 = vmatprep.subr.mxu0 0.0
        %394 = vmatpush1.msra.mxu0 0.0
        %395 = vmatprep.subr.mxu0 0.0
        %396 = vmatpush1.msra.mxu0 0.0
        %397 = vmatprep.subr.mxu0 0.0
        %398 = vmatpush1.msra.mxu0 0.0
        %399 = vmatprep.subr.mxu0 0.0
        %400 = vmatpush1.msra.mxu0 0.0
        %401 = vmatprep.subr.mxu0 0.0
        %402 = vmatpush1.msra.mxu0 0.0
        %403 = vmatprep.subr.mxu0 0.0
        %404 = vmatpush1.msra.mxu0 0.0
        %405 = vmatprep.subr.mxu0 0.0
        %406 = vmatpush1.msra.mxu0 0.0
        %407 = vmatprep.subr.mxu0 0.0
        %408 = vmatpush1.msra.mxu0 0.0
        %409 = vmatprep.subr.mxu0 0.0
        %410 = vmatpush1.msra.mxu0 0.0
        %411 = vmatprep.subr.mxu0 0.0
        %412 = vmatpush1.msra.mxu0 0.0
        %413 = vmatprep.mubr.f32.mxu0 0.0
        %414 = vmatmul.mubr.f32.gmra.mrb[0].mxu0 %v290
        %v415 = vpop.f32.mrb[0].mxu0
        %v416 = vadd.f32 %v347, %v415
        %v417 = vpop.f32.mrb[0].mxu0
        %418 = vmatprep.mubr.f32.mxu0 0.0
        %419 = vmatmul.mubr.f32.gmra.mrb[0].mxu0 %v291
        %v420 = vpop.f32.mrb[0].mxu0
        %v421 = vadd.f32 %v347, %v420
        %v422 = vpop.f32.mrb[0].mxu0
        %423 = vmatprep.mubr.f32.mxu0 0.0
        %424 = vmatmul.mubr.f32.gmra.mrb[0].mxu0 %v292
        %v425 = vpop.f32.mrb[0].mxu0
        %v426 = vadd.f32 %v347, %v425
        %v427 = vpop.f32.mrb[0].mxu0
        %428 = vmatprep.mubr.f32.mxu0 0.0
        %429 = vmatmul.mubr.f32.gmra.mrb[0].mxu0 %v293
        %v430 = vpop.f32.mrb[0].mxu0
        %v431 = vadd.f32 %v347, %v430
        %v432 = vpop.f32.mrb[0].mxu0
        %433 = vmatprep.mubr.f32.mxu0 0.0
        %434 = vmatmul.mubr.f32.gmra.mrb[0].mxu0 %v294
        %v435 = vpop.f32.mrb[0].mxu0
        %v436 = vadd.f32 %v347, %v435
        %v437 = vpop.f32.mrb[0].mxu0
        %438 = vmatprep.mubr.f32.mxu0 0.0
        %439 = vmatmul.mubr.f32.gmra.mrb[0].mxu0 %v295
        %v440 = vpop.f32.mrb[0].mxu0
        %v441 = vadd.f32 %v347, %v440
        %v442 = vpop.f32.mrb[0].mxu0
        %443 = vmatprep.mubr.f32.mxu0 0.0
        %444 = vmatmul.mubr.f32.gmra.mrb[0].mxu0 %v296
        %v445 = vpop.f32.mrb[0].mxu0
        %v446 = vadd.f32 %v347, %v445
        %v447 = vpop.f32.mrb[0].mxu0
        %448 = vmatprep.mubr.f32.mxu0 0.0
        %449 = vmatmul.mubr.f32.gmra.mrb[0].mxu0 %v297
        %v450 = vpop.f32.mrb[0].mxu0
        %v451 = vadd.f32 %v347, %v450
        %v452 = vpop.f32.mrb[0].mxu0
        %453 = vmatprep.mubr.f32.mxu0 0.0
        %454 = vmatmul.mubr.f32.gmra.mrb[0].mxu0 %v298
        %v455 = vpop.f32.mrb[0].mxu0
        %v456 = vadd.f32 %v347, %v455
        %v457 = vpop.f32.mrb[0].mxu0
        %458 = vmatprep.mubr.f32.mxu0 0.0
        %459 = vmatmul.mubr.f32.gmra.mrb[0].mxu0 %v299
        %v460 = vpop.f32.mrb[0].mxu0
        %v461 = vadd.f32 %v347, %v460
        %v462 = vpop.f32.mrb[0].mxu0
        %463 = vmatprep.mubr.f32.mxu0 0.0
        %464 = vmatmul.mubr.f32.gmra.mrb[0].mxu0 %v300
        %v465 = vpop.f32.mrb[0].mxu0
        %v466 = vadd.f32 %v347, %v465
        %v467 = vpop.f32.mrb[0].mxu0
        %468 = vmatprep.mubr.f32.mxu0 0.0
        %469 = vmatmul.mubr.f32.gmra.mrb[0].mxu0 %v301
        %v470 = vpop.f32.mrb[0].mxu0
        %v471 = vadd.f32 %v347, %v470
        %v472 = vpop.f32.mrb[0].mxu0
        %473 = vmatprep.mubr.f32.mxu0 0.0
        %474 = vmatmul.mubr.f32.gmra.mrb[0].mxu0 %v302
        %v475 = vpop.f32.mrb[0].mxu0
        %v476 = vadd.f32 %v347, %v475
        %v477 = vpop.f32.mrb[0].mxu0
        %478 = vmatprep.mubr.f32.mxu0 0.0
        %479 = vmatmul.mubr.f32.gmra.mrb[0].mxu0 %v303
        %v480 = vpop.f32.mrb[0].mxu0
        %v481 = vadd.f32 %v347, %v480
        %v482 = vpop.f32.mrb[0].mxu0
        %483 = vmatprep.mubr.f32.mxu0 0.0
        %484 = vmatmul.mubr.f32.gmra.mrb[0].mxu0 %v304
        %v485 = vpop.f32.mrb[0].mxu0
        %v486 = vadd.f32 %v347, %v485
        %v487 = vpop.f32.mrb[0].mxu0
        %488 = vmatprep.mubr.f32.mxu0 0.0
        %489 = vmatmul.mubr.f32.gmra.mrb[0].mxu0 %v305
        %v490 = vpop.f32.mrb[0].mxu0
        %v491 = vadd.f32 %v347, %v490
        %v492 = vpop.f32.mrb[0].mxu0
        %493 = vmatprep.mubr.f32.mxu0 0.0
        %494 = vmatmul.mubr.f32.gmra.mrb[0].mxu0 %v306
        %v495 = vpop.f32.mrb[0].mxu0
        %v496 = vadd.f32 %v347, %v495
        %v497 = vpop.f32.mrb[0].mxu0
        %498 = vmatprep.mubr.f32.mxu0 0.0
        %499 = vmatmul.mubr.f32.gmra.mrb[0].mxu0 %v307
        %v500 = vpop.f32.mrb[0].mxu0
        %v501 = vadd.f32 %v347, %v500
        %v502 = vpop.f32.mrb[0].mxu0
        %503 = vmatprep.mubr.f32.mxu0 0.0
        %504 = vmatmul.mubr.f32.gmra.mrb[0].mxu0 %v308
        %v505 = vpop.f32.mrb[0].mxu0
        %v506 = vadd.f32 %v347, %v505
        %v507 = vpop.f32.mrb[0].mxu0
        %508 = vmatprep.mubr.f32.mxu0 0.0
        %509 = vmatmul.mubr.f32.gmra.mrb[0].mxu0 %v309
        %v510 = vpop.f32.mrb[0].mxu0
        %v511 = vadd.f32 %v347, %v510
        %v512 = vpop.f32.mrb[0].mxu0
        %513 = vmatprep.mubr.f32.mxu0 0.0
        %514 = vmatmul.mubr.f32.gmra.mrb[0].mxu0 %v310
        %v515 = vpop.f32.mrb[0].mxu0
        %v516 = vadd.f32 %v347, %v515
        %v517 = vpop.f32.mrb[0].mxu0
        %518 = vmatprep.mubr.f32.mxu0 0.0
        %519 = vmatmul.mubr.f32.gmra.mrb[0].mxu0 %v311
        %v520 = vpop.f32.mrb[0].mxu0
        %v521 = vadd.f32 %v347, %v520
        %v522 = vpop.f32.mrb[0].mxu0
        %523 = vmatprep.mubr.f32.mxu0 0.0
        %524 = vmatmul.mubr.f32.gmra.mrb[0].mxu0 %v312
        %v525 = vpop.f32.mrb[0].mxu0
        %v526 = vadd.f32 %v347, %v525
        %v527 = vpop.f32.mrb[0].mxu0
        %528 = vmatprep.mubr.f32.mxu0 0.0
        %529 = vmatmul.mubr.f32.gmra.mrb[0].mxu0 %v313
        %v530 = vpop.f32.mrb[0].mxu0
        %v531 = vadd.f32 %v347, %v530
        %v532 = vpop.f32.mrb[0].mxu0
        %533 = vmatprep.mubr.f32.mxu0 0.0
        %534 = vmatmul.mubr.f32.gmra.mrb[0].mxu0 %v314
        %v535 = vpop.f32.mrb[0].mxu0
        %v536 = vadd.f32 %v347, %v535
        %v537 = vpop.f32.mrb[0].mxu0
        %538 = vmatprep.mubr.f32.mxu0 0.0
        %539 = vmatmul.mubr.f32.gmra.mrb[0].mxu0 %v315
        %v540 = vpop.f32.mrb[0].mxu0
        %v541 = vadd.f32 %v347, %v540
        %v542 = vpop.f32.mrb[0].mxu0
        %543 = vmatprep.mubr.f32.mxu0 0.0
        %544 = vmatmul.mubr.f32.gmra.mrb[0].mxu0 %v316
        %v545 = vpop.f32.mrb[0].mxu0
        %v546 = vadd.f32 %v347, %v545
        %v547 = vpop.f32.mrb[0].mxu0
        %548 = vmatprep.mubr.f32.mxu0 0.0
        %549 = vmatmul.mubr.f32.gmra.mrb[0].mxu0 %v317
        %v550 = vpop.f32.mrb[0].mxu0
        %v551 = vadd.f32 %v347, %v550
        %v552 = vpop.f32.mrb[0].mxu0
        %553 = vmatprep.mubr.f32.mxu0 0.0
        %554 = vmatmul.mubr.f32.gmra.mrb[0].mxu0 %v318
        %v555 = vpop.f32.mrb[0].mxu0
        %v556 = vadd.f32 %v347, %v555
        %v557 = vpop.f32.mrb[0].mxu0
        %558 = vmatprep.mubr.f32.mxu0 0.0
        %559 = vmatmul.mubr.f32.gmra.mrb[0].mxu0 %v319
        %v560 = vpop.f32.mrb[0].mxu0
        %v561 = vadd.f32 %v347, %v560
        %v562 = vpop.f32.mrb[0].mxu0
        %563 = vmatprep.mubr.f32.mxu0 0.0
        %564 = vmatmul.mubr.f32.gmra.mrb[0].mxu0 %v320
        %v565 = vpop.f32.mrb[0].mxu0
        %v566 = vadd.f32 %v347, %v565
        %v567 = vpop.f32.mrb[0].mxu0
        %568 = vmatprep.mubr.f32.mxu0 0.0
        %569 = vmatmul.mubr.f32.gmra.mrb[0].mxu0 %v321
        %v570 = vpop.f32.mrb[0].mxu0
        %v571 = vadd.f32 %v347, %v570
        %v572 = vpop.f32.mrb[0].mxu0
        %573 = vmatprep.mubr.f32.mxu0 0.0
        %574 = vmatmul.mubr.f32.gmra.mrb[0].mxu0 %v322
        %v575 = vpop.f32.mrb[0].mxu0
        %v576 = vadd.f32 %v347, %v575
        %v577 = vpop.f32.mrb[0].mxu0
        %578 = vmatprep.mubr.f32.mxu0 0.0
        %579 = vmatmul.mubr.f32.gmra.mrb[0].mxu0 %v323
        %v580 = vpop.f32.mrb[0].mxu0
        %v581 = vadd.f32 %v347, %v580
        %v582 = vpop.f32.mrb[0].mxu0
        %583 = vmatprep.mubr.f32.mxu0 0.0
        %584 = vmatmul.mubr.f32.gmra.mrb[0].mxu0 %v324
        %v585 = vpop.f32.mrb[0].mxu0
        %v586 = vadd.f32 %v347, %v585
        %v587 = vpop.f32.mrb[0].mxu0
        %588 = vmatprep.mubr.f32.mxu0 0.0
        %589 = vmatmul.mubr.f32.gmra.mrb[0].mxu0 %v325
        %v590 = vpop.f32.mrb[0].mxu0
        %v591 = vadd.f32 %v347, %v590
        %v592 = vpop.f32.mrb[0].mxu0
        %593 = vdwg.mxu0
        %vm594 = vcmp.ge.f32.partialorder %v416, 0.0
        %vm595 = vcmp.ge.f32.partialorder %v421, 0.0
        %vm596 = vcmp.ge.f32.partialorder %v426, 0.0
        %vm597 = vcmp.ge.f32.partialorder %v431, 0.0
        %vm598 = vcmp.ge.f32.partialorder %v436, 0.0
        %vm599 = vcmp.ge.f32.partialorder %v441, 0.0
        %vm600 = vcmp.ge.f32.partialorder %v446, 0.0
        %vm601 = vcmp.ge.f32.partialorder %v451, 0.0
        %vm602 = vcmp.ge.f32.partialorder %v456, 0.0
        %vm603 = vcmp.ge.f32.partialorder %v461, 0.0
        %vm604 = vcmp.ge.f32.partialorder %v466, 0.0
        %vm605 = vcmp.ge.f32.partialorder %v471, 0.0
        %vm606 = vcmp.ge.f32.partialorder %v476, 0.0
        %vm607 = vcmp.ge.f32.partialorder %v481, 0.0
        %vm608 = vcmp.ge.f32.partialorder %v486, 0.0
        %vm609 = vcmp.ge.f32.partialorder %v491, 0.0
        %vm610 = vcmp.ge.f32.partialorder %v496, 0.0
        %vm611 = vcmp.ge.f32.partialorder %v501, 0.0
        %vm612 = vcmp.ge.f32.partialorder %v506, 0.0
        %vm613 = vcmp.ge.f32.partialorder %v511, 0.0
        %vm614 = vcmp.ge.f32.partialorder %v516, 0.0
        %vm615 = vcmp.ge.f32.partialorder %v521, 0.0
        %vm616 = vcmp.ge.f32.partialorder %v526, 0.0
        %vm617 = vcmp.ge.f32.partialorder %v531, 0.0
        %vm618 = vcmp.ge.f32.partialorder %v536, 0.0
        %vm619 = vcmp.ge.f32.partialorder %v541, 0.0
        %vm620 = vcmp.ge.f32.partialorder %v546, 0.0
        %vm621 = vcmp.ge.f32.partialorder %v551, 0.0
        %vm622 = vcmp.ge.f32.partialorder %v556, 0.0
        %vm623 = vcmp.ge.f32.partialorder %v561, 0.0
        %vm624 = vcmp.ge.f32.partialorder %v566, 0.0
        %vm625 = vcmp.ge.f32.partialorder %v571, 0.0
        %vm626 = vcmp.ge.f32.partialorder %v576, 0.0
        %vm627 = vcmp.ge.f32.partialorder %v581, 0.0
        %vm628 = vcmp.ge.f32.partialorder %v586, 0.0
        %vm629 = vcmp.ge.f32.partialorder %v591, 0.0
        %v630 = vmul.f32 %v416, 0.1
        %v631 = vmul.f32 %v421, 0.1
        %v632 = vmul.f32 %v426, 0.1
        %v633 = vmul.f32 %v431, 0.1
        %v634 = vmul.f32 %v436, 0.1
        %v635 = vmul.f32 %v441, 0.1
        %v636 = vmul.f32 %v446, 0.1
        %v637 = vmul.f32 %v451, 0.1
        %v638 = vmul.f32 %v456, 0.1
        %v639 = vmul.f32 %v461, 0.1
        %v640 = vmul.f32 %v466, 0.1
        %v641 = vmul.f32 %v471, 0.1
        %v642 = vmul.f32 %v476, 0.1
        %v643 = vmul.f32 %v481, 0.1
        %v644 = vmul.f32 %v486, 0.1
        %v645 = vmul.f32 %v491, 0.1
        %v646 = vmul.f32 %v496, 0.1
        %v647 = vmul.f32 %v501, 0.1
        %v648 = vmul.f32 %v506, 0.1
        %v649 = vmul.f32 %v511, 0.1
        %v650 = vmul.f32 %v516, 0.1
        %v651 = vmul.f32 %v521, 0.1
        %v652 = vmul.f32 %v526, 0.1
        %v653 = vmul.f32 %v531, 0.1
        %v654 = vmul.f32 %v536, 0.1
        %v655 = vmul.f32 %v541, 0.1
        %v656 = vmul.f32 %v546, 0.1
        %v657 = vmul.f32 %v551, 0.1
        %v658 = vmul.f32 %v556, 0.1
        %v659 = vmul.f32 %v561, 0.1
        %v660 = vmul.f32 %v566, 0.1
        %v661 = vmul.f32 %v571, 0.1
        %v662 = vmul.f32 %v576, 0.1
        %v663 = vmul.f32 %v581, 0.1
        %v664 = vmul.f32 %v586, 0.1
        %v665 = vmul.f32 %v591, 0.1
        %v666 = vsel %vm594, %v416, %v630
        %v667 = vsel %vm595, %v421, %v631
        %v668 = vsel %vm596, %v426, %v632
        %v669 = vsel %vm597, %v431, %v633
        %v670 = vsel %vm598, %v436, %v634
        %v671 = vsel %vm599, %v441, %v635
        %v672 = vsel %vm600, %v446, %v636
        %v673 = vsel %vm601, %v451, %v637
        %v674 = vsel %vm602, %v456, %v638
        %v675 = vsel %vm603, %v461, %v639
        %v676 = vsel %vm604, %v466, %v640
        %v677 = vsel %vm605, %v471, %v641
        %v678 = vsel %vm606, %v476, %v642
        %v679 = vsel %vm607, %v481, %v643
        %v680 = vsel %vm608, %v486, %v644
        %v681 = vsel %vm609, %v491, %v645
        %v682 = vsel %vm610, %v496, %v646
        %v683 = vsel %vm611, %v501, %v647
        %v684 = vsel %vm612, %v506, %v648
        %v685 = vsel %vm613, %v511, %v649
        %v686 = vsel %vm614, %v516, %v650
        %v687 = vsel %vm615, %v521, %v651
        %v688 = vsel %vm616, %v526, %v652
        %v689 = vsel %vm617, %v531, %v653
        %v690 = vsel %vm618, %v536, %v654
        %v691 = vsel %vm619, %v541, %v655
        %v692 = vsel %vm620, %v546, %v656
        %v693 = vsel %vm621, %v551, %v657
        %v694 = vsel %vm622, %v556, %v658
        %v695 = vsel %vm623, %v561, %v659
        %v696 = vsel %vm624, %v566, %v660
        %v697 = vsel %vm625, %v571, %v661
        %v698 = vsel %vm626, %v576, %v662
        %v699 = vsel %vm627, %v581, %v663
        %v700 = vsel %vm628, %v586, %v664
        %v701 = vsel %vm629, %v591, %v665
        %p702 = scmp.eq.s32.totalorder %s28, 0
        %s703 = scalar_select %p702, 1, 0
        %v704 = vstv %s703
        %vm705 = vcmp.eq.s32.totalorder %v704, 1
        %v706 = vsel %vm705, 1, 0
        %vm707 = vcmp.eq.s32.totalorder %v706, 1
        %v708 = vsel %vm707, 0.0, %v666
        %v709 = vsel %vm707, 0.0, %v667
        %v710 = vsel 0, 0.0, %v668
        %v711 = vsel 0, 0.0, %v669
        %v712 = vsel 0, 0.0, %v670
        %v713 = vsel 0, 0.0, %v671
        %v714 = vsel 0, 0.0, %v672
        %v715 = vsel 0, 0.0, %v673
        %v716 = vsel 0, 0.0, %v674
        %v717 = vsel 0, 0.0, %v675
        %v718 = vsel 0, 0.0, %v676
        %v719 = vsel 0, 0.0, %v677
        %v720 = vsel 0, 0.0, %v678
        %v721 = vsel 0, 0.0, %v679
        %v722 = vsel 0, 0.0, %v680
        %v723 = vsel 0, 0.0, %v681
        %v724 = vsel 0, 0.0, %v682
        %v725 = vsel 0, 0.0, %v683
        %v726 = vsel 0, 0.0, %v684
        %v727 = vsel 0, 0.0, %v685
        %v728 = vsel 0, 0.0, %v686
        %v729 = vsel 0, 0.0, %v687
        %v730 = vsel 0, 0.0, %v688
        %v731 = vsel 0, 0.0, %v689
        %v732 = vsel 0, 0.0, %v690
        %v733 = vsel 0, 0.0, %v691
        %v734 = vsel 0, 0.0, %v692
        %v735 = vsel 0, 0.0, %v693
        %v736 = vsel 0, 0.0, %v694
        %v737 = vsel 0, 0.0, %v695
        %v738 = vsel 0, 0.0, %v696
        %v739 = vsel 0, 0.0, %v697
        %v740 = vsel 0, 0.0, %v698
        %v741 = vsel 0, 0.0, %v699
        %v742 = vsel %vm707, 0.0, %v700
        %v743 = vsel %vm707, 0.0, %v701
        %744 = vst [vmem:[#allocation2] sm:$0x1] 0.0
        %745 = vst [vmem:[#allocation2 + $0x18] sm:$0x1] 0.0
        %746 = vst [vmem:[#allocation2 + $0x30] sm:$0x1] 0.0
        %747 = vst [vmem:[#allocation2 + $0x48] sm:$0x1] 0.0
        %748 = vst [vmem:[#allocation2 + $0x60] sm:$0x1] 0.0
        %749 = vst [vmem:[#allocation2 + $0x78] sm:$0x1] 0.0
        %750 = vst [vmem:[#allocation2 + $0x90] sm:$0x1] 0.0
        %751 = vst [vmem:[#allocation2 + $0xa8] sm:$0x1] 0.0
        %752 = vst [vmem:[#allocation2 + $0xc0] sm:$0x1] 0.0
        %753 = vst [vmem:[#allocation2 + $0xd8] sm:$0x1] 0.0
        %754 = vst [vmem:[#allocation2 + $0xf0] sm:$0x1] 0.0
        %755 = vst [vmem:[#allocation2 + $0x108] sm:$0x1] 0.0
        %756 = vst [vmem:[#allocation2 + $0x120] sm:$0x1] 0.0
        %757 = vst [vmem:[#allocation2 + $0x138] sm:$0x1] 0.0
        %758 = vst [vmem:[#allocation2 + $0x150] sm:$0x1] 0.0
        %759 = vst [vmem:[#allocation2 + $0x168] sm:$0x1] 0.0
        %760 = vst [vmem:[#allocation2 + $0x180] sm:$0x1] 0.0
        %761 = vst [vmem:[#allocation2 + $0x198] sm:$0x1] 0.0
        %762 = vst [vmem:[#allocation2 + $0x11] sm:$0x1] 0.0
        %763 = vst [vmem:[#allocation2 + $0x29] sm:$0x1] 0.0
        %764 = vst [vmem:[#allocation2 + $0x41] sm:$0x1] 0.0
        %765 = vst [vmem:[#allocation2 + $0x59] sm:$0x1] 0.0
        %766 = vst [vmem:[#allocation2 + $0x71] sm:$0x1] 0.0
        %767 = vst [vmem:[#allocation2 + $0x89] sm:$0x1] 0.0
        %768 = vst [vmem:[#allocation2 + $0xa1] sm:$0x1] 0.0
        %769 = vst [vmem:[#allocation2 + $0xb9] sm:$0x1] 0.0
        %770 = vst [vmem:[#allocation2 + $0xd1] sm:$0x1] 0.0
        %771 = vst [vmem:[#allocation2 + $0xe9] sm:$0x1] 0.0
        %772 = vst [vmem:[#allocation2 + $0x101] sm:$0x1] 0.0
        %773 = vst [vmem:[#allocation2 + $0x119] sm:$0x1] 0.0
        %774 = vst [vmem:[#allocation2 + $0x131] sm:$0x1] 0.0
        %775 = vst [vmem:[#allocation2 + $0x149] sm:$0x1] 0.0
        %776 = vst [vmem:[#allocation2 + $0x161] sm:$0x1] 0.0
        %777 = vst [vmem:[#allocation2 + $0x179] sm:$0x1] 0.0
        %778 = vst [vmem:[#allocation2 + $0x191] sm:$0x1] 0.0
        %779 = vst [vmem:[#allocation2 + $0x1a9] sm:$0x1] 0.0
        %780 = vst [vmem:[#allocation2 + $0x1] sm:$0xff] %v708
        %781 = vst [vmem:[#allocation2 + $0x9] sm:$0xff] %v709
        %782 = vst [vmem:[#allocation2 + $0x19] sm:$0xff] %v710
        %783 = vst [vmem:[#allocation2 + $0x21] sm:$0xff] %v711
        %784 = vst [vmem:[#allocation2 + $0x31] sm:$0xff] %v712
        %785 = vst [vmem:[#allocation2 + $0x39] sm:$0xff] %v713
        %786 = vst [vmem:[#allocation2 + $0x49] sm:$0xff] %v714
        %787 = vst [vmem:[#allocation2 + $0x51] sm:$0xff] %v715
        %788 = vst [vmem:[#allocation2 + $0x61] sm:$0xff] %v716
        %789 = vst [vmem:[#allocation2 + $0x69] sm:$0xff] %v717
        %790 = vst [vmem:[#allocation2 + $0x79] sm:$0xff] %v718
        %791 = vst [vmem:[#allocation2 + $0x81] sm:$0xff] %v719
        %792 = vst [vmem:[#allocation2 + $0x91] sm:$0xff] %v720
        %793 = vst [vmem:[#allocation2 + $0x99] sm:$0xff] %v721
        %794 = vst [vmem:[#allocation2 + $0xa9] sm:$0xff] %v722
        %795 = vst [vmem:[#allocation2 + $0xb1] sm:$0xff] %v723
        %796 = vst [vmem:[#allocation2 + $0xc1] sm:$0xff] %v724
        %797 = vst [vmem:[#allocation2 + $0xc9] sm:$0xff] %v725
        %798 = vst [vmem:[#allocation2 + $0xd9] sm:$0xff] %v726
        %799 = vst [vmem:[#allocation2 + $0xe1] sm:$0xff] %v727
        %800 = vst [vmem:[#allocation2 + $0xf1] sm:$0xff] %v728
        %801 = vst [vmem:[#allocation2 + $0xf9] sm:$0xff] %v729
        %802 = vst [vmem:[#allocation2 + $0x109] sm:$0xff] %v730
        %803 = vst [vmem:[#allocation2 + $0x111] sm:$0xff] %v731
        %804 = vst [vmem:[#allocation2 + $0x121] sm:$0xff] %v732
        %805 = vst [vmem:[#allocation2 + $0x129] sm:$0xff] %v733
        %806 = vst [vmem:[#allocation2 + $0x139] sm:$0xff] %v734
        %807 = vst [vmem:[#allocation2 + $0x141] sm:$0xff] %v735
        %808 = vst [vmem:[#allocation2 + $0x151] sm:$0xff] %v736
        %809 = vst [vmem:[#allocation2 + $0x159] sm:$0xff] %v737
        %810 = vst [vmem:[#allocation2 + $0x169] sm:$0xff] %v738
        %811 = vst [vmem:[#allocation2 + $0x171] sm:$0xff] %v739
        %812 = vst [vmem:[#allocation2 + $0x181] sm:$0xff] %v740
        %813 = vst [vmem:[#allocation2 + $0x189] sm:$0xff] %v741
        %814 = vst [vmem:[#allocation2 + $0x199] sm:$0xff] %v742
        %815 = vst [vmem:[#allocation2 + $0x1a1] sm:$0xff] %v743
        %v816 = vld [vmem:[#allocation2] sm:$0xff]
        %v817 = vld [vmem:[#allocation2 + $0x8] sm:$0xff]
        %v818 = vld [vmem:[#allocation2 + $0x18] sm:$0xff]
        %v819 = vld [vmem:[#allocation2 + $0x20] sm:$0xff]
        %v820 = vld [vmem:[#allocation2 + $0x30] sm:$0xff]
        %v821 = vld [vmem:[#allocation2 + $0x38] sm:$0xff]
        %v822 = vld [vmem:[#allocation2 + $0x48] sm:$0xff]
        %v823 = vld [vmem:[#allocation2 + $0x50] sm:$0xff]
        %v824 = vld [vmem:[#allocation2 + $0x60] sm:$0xff]
        %v825 = vld [vmem:[#allocation2 + $0x68] sm:$0xff]
        %v826 = vld [vmem:[#allocation2 + $0x78] sm:$0xff]
        %v827 = vld [vmem:[#allocation2 + $0x80] sm:$0xff]
        %v828 = vld [vmem:[#allocation2 + $0x90] sm:$0xff]
        %v829 = vld [vmem:[#allocation2 + $0x98] sm:$0xff]
        %v830 = vld [vmem:[#allocation2 + $0xa8] sm:$0xff]
        %v831 = vld [vmem:[#allocation2 + $0xb0] sm:$0xff]
        %v832 = vld [vmem:[#allocation2 + $0xc0] sm:$0xff]
        %v833 = vld [vmem:[#allocation2 + $0xc8] sm:$0xff]
        %v834 = vld [vmem:[#allocation2 + $0xd8] sm:$0xff]
        %v835 = vld [vmem:[#allocation2 + $0xe0] sm:$0xff]
        %v836 = vld [vmem:[#allocation2 + $0xf0] sm:$0xff]
        %v837 = vld [vmem:[#allocation2 + $0xf8] sm:$0xff]
        %v838 = vld [vmem:[#allocation2 + $0x108] sm:$0xff]
        %v839 = vld [vmem:[#allocation2 + $0x110] sm:$0xff]
        %v840 = vld [vmem:[#allocation2 + $0x120] sm:$0xff]
        %v841 = vld [vmem:[#allocation2 + $0x128] sm:$0xff]
        %v842 = vld [vmem:[#allocation2 + $0x138] sm:$0xff]
        %v843 = vld [vmem:[#allocation2 + $0x140] sm:$0xff]
        %v844 = vld [vmem:[#allocation2 + $0x150] sm:$0xff]
        %v845 = vld [vmem:[#allocation2 + $0x158] sm:$0xff]
        %v846 = vld [vmem:[#allocation2 + $0x168] sm:$0xff]
        %v847 = vld [vmem:[#allocation2 + $0x170] sm:$0xff]
        %v848 = vld [vmem:[#allocation8] sm:$0xff]
        %v849 = vld [vmem:[#allocation8 + $0x8] sm:$0xff]
        %v850 = vld [vmem:[#allocation8 + $0x10] sm:$0xff]
        %v851 = vld [vmem:[#allocation8 + $0x18] sm:$0xff]
        %v852 = vld [vmem:[#allocation8 + $0x20] sm:$0xff]
        %v853 = vld [vmem:[#allocation8 + $0x28] sm:$0xff]
        %v854 = vld [vmem:[#allocation8 + $0x30] sm:$0xff]
        %v855 = vld [vmem:[#allocation8 + $0x38] sm:$0xff]
        %v856 = vld [vmem:[#allocation8 + $0x40] sm:$0xff]
        %v857 = vld [vmem:[#allocation8 + $0x48] sm:$0xff]
        %v858 = vld [vmem:[#allocation8 + $0x50] sm:$0xff]
        %v859 = vld [vmem:[#allocation8 + $0x58] sm:$0xff]
        %v860 = vld [vmem:[#allocation8 + $0x60] sm:$0xff]
        %v861 = vld [vmem:[#allocation8 + $0x68] sm:$0xff]
        %v862 = vld [vmem:[#allocation8 + $0x70] sm:$0xff]
        %v863 = vld [vmem:[#allocation8 + $0x78] sm:$0xff]
        %v864 = vld [vmem:[#allocation2 + $0x1] sm:$0xff]
        %v865 = vld [vmem:[#allocation2 + $0x9] sm:$0xff]
        %v866 = vld [vmem:[#allocation2 + $0x19] sm:$0xff]
        %v867 = vld [vmem:[#allocation2 + $0x21] sm:$0xff]
        %v868 = vld [vmem:[#allocation2 + $0x31] sm:$0xff]
        %v869 = vld [vmem:[#allocation2 + $0x39] sm:$0xff]
        %v870 = vld [vmem:[#allocation2 + $0x49] sm:$0xff]
        %v871 = vld [vmem:[#allocation2 + $0x51] sm:$0xff]
        %v872 = vld [vmem:[#allocation2 + $0x61] sm:$0xff]
        %v873 = vld [vmem:[#allocation2 + $0x69] sm:$0xff]
        %v874 = vld [vmem:[#allocation2 + $0x79] sm:$0xff]
        %v875 = vld [vmem:[#allocation2 + $0x81] sm:$0xff]
        %v876 = vld [vmem:[#allocation2 + $0x91] sm:$0xff]
        %v877 = vld [vmem:[#allocation2 + $0x99] sm:$0xff]
        %v878 = vld [vmem:[#allocation2 + $0xa9] sm:$0xff]
        %v879 = vld [vmem:[#allocation2 + $0xb1] sm:$0xff]
        %v880 = vld [vmem:[#allocation2 + $0xc1] sm:$0xff]
        %v881 = vld [vmem:[#allocation2 + $0xc9] sm:$0xff]
        %v882 = vld [vmem:[#allocation2 + $0xd9] sm:$0xff]
        %v883 = vld [vmem:[#allocation2 + $0xe1] sm:$0xff]
        %v884 = vld [vmem:[#allocation2 + $0xf1] sm:$0xff]
        %v885 = vld [vmem:[#allocation2 + $0xf9] sm:$0xff]
        %v886 = vld [vmem:[#allocation2 + $0x109] sm:$0xff]
        %v887 = vld [vmem:[#allocation2 + $0x111] sm:$0xff]
        %v888 = vld [vmem:[#allocation2 + $0x121] sm:$0xff]
        %v889 = vld [vmem:[#allocation2 + $0x129] sm:$0xff]
        %v890 = vld [vmem:[#allocation2 + $0x139] sm:$0xff]
        %v891 = vld [vmem:[#allocation2 + $0x141] sm:$0xff]
        %v892 = vld [vmem:[#allocation2 + $0x151] sm:$0xff]
        %v893 = vld [vmem:[#allocation2 + $0x159] sm:$0xff]
        %v894 = vld [vmem:[#allocation2 + $0x169] sm:$0xff]
        %v895 = vld [vmem:[#allocation2 + $0x171] sm:$0xff]
        %s896 = scalar_lea.vmem [#allocation8], 128
        %v897 = vld [vmem:[%s896] sm:$0xff]
        %v898 = vld [vmem:[%s896 + $0x8] sm:$0xff]
        %v899 = vld [vmem:[%s896 + $0x10] sm:$0xff]
        %v900 = vld [vmem:[%s896 + $0x18] sm:$0xff]
        %v901 = vld [vmem:[%s896 + $0x20] sm:$0xff]
        %v902 = vld [vmem:[%s896 + $0x28] sm:$0xff]
        %v903 = vld [vmem:[%s896 + $0x30] sm:$0xff]
        %v904 = vld [vmem:[%s896 + $0x38] sm:$0xff]
        %v905 = vld [vmem:[%s896 + $0x40] sm:$0xff]
        %v906 = vld [vmem:[%s896 + $0x48] sm:$0xff]
        %v907 = vld [vmem:[%s896 + $0x50] sm:$0xff]
        %v908 = vld [vmem:[%s896 + $0x58] sm:$0xff]
        %v909 = vld [vmem:[%s896 + $0x60] sm:$0xff]
        %v910 = vld [vmem:[%s896 + $0x68] sm:$0xff]
        %v911 = vld [vmem:[%s896 + $0x70] sm:$0xff]
        %v912 = vld [vmem:[%s896 + $0x78] sm:$0xff]
        %913 = vmatprep.subr.mxu0 0.0
        %914 = vmatpush1.msra.mxu0 %v897
        %915 = vmatprep.subr.mxu0 0.0
        %916 = vmatpush1.msra.mxu0 %v898
        %917 = vmatprep.subr.mxu0 0.0
        %918 = vmatpush1.msra.mxu0 %v899
        %919 = vmatprep.subr.mxu0 0.0
        %920 = vmatpush1.msra.mxu0 %v900
        %921 = vmatprep.subr.mxu0 0.0
        %922 = vmatpush1.msra.mxu0 %v901
        %923 = vmatprep.subr.mxu0 0.0
        %924 = vmatpush1.msra.mxu0 %v902
        %925 = vmatprep.subr.mxu0 0.0
        %926 = vmatpush1.msra.mxu0 %v903
        %927 = vmatprep.subr.mxu0 0.0
        %928 = vmatpush1.msra.mxu0 %v904
        %929 = vmatprep.subr.mxu0 0.0
        %930 = vmatpush1.msra.mxu0 %v905
        %931 = vmatprep.subr.mxu0 0.0
        %932 = vmatpush1.msra.mxu0 %v906
        %933 = vmatprep.subr.mxu0 0.0
        %934 = vmatpush1.msra.mxu0 %v907
        %935 = vmatprep.subr.mxu0 0.0
        %936 = vmatpush1.msra.mxu0 %v908
        %937 = vmatprep.subr.mxu0 0.0
        %938 = vmatpush1.msra.mxu0 %v909
        %939 = vmatprep.subr.mxu0 0.0
        %940 = vmatpush1.msra.mxu0 %v910
        %941 = vmatprep.subr.mxu0 0.0
        %942 = vmatpush1.msra.mxu0 %v911
        %943 = vmatprep.subr.mxu0 0.0
        %944 = vmatpush1.msra.mxu0 %v912
        %945 = vmatprep.subr.mxu0 0.0
        %946 = vmatpush1.msra.mxu0 0.0
        %947 = vmatprep.subr.mxu0 0.0
        %948 = vmatpush1.msra.mxu0 0.0
        %949 = vmatprep.subr.mxu0 0.0
        %950 = vmatpush1.msra.mxu0 0.0
        %951 = vmatprep.subr.mxu0 0.0
        %952 = vmatpush1.msra.mxu0 0.0
        %953 = vmatprep.subr.mxu0 0.0
        %954 = vmatpush1.msra.mxu0 0.0
        %955 = vmatprep.subr.mxu0 0.0
        %956 = vmatpush1.msra.mxu0 0.0
        %957 = vmatprep.subr.mxu0 0.0
        %958 = vmatpush1.msra.mxu0 0.0
        %959 = vmatprep.subr.mxu0 0.0
        %960 = vmatpush1.msra.mxu0 0.0
        %961 = vmatprep.subr.mxu0 0.0
        %962 = vmatpush1.msra.mxu0 0.0
        %963 = vmatprep.subr.mxu0 0.0
        %964 = vmatpush1.msra.mxu0 0.0
        %965 = vmatprep.subr.mxu0 0.0
        %966 = vmatpush1.msra.mxu0 0.0
        %967 = vmatprep.subr.mxu0 0.0
        %968 = vmatpush1.msra.mxu0 0.0
        %969 = vmatprep.subr.mxu0 0.0
        %970 = vmatpush1.msra.mxu0 0.0
        %971 = vmatprep.subr.mxu0 0.0
        %972 = vmatpush1.msra.mxu0 0.0
        %973 = vmatprep.subr.mxu0 0.0
        %974 = vmatpush1.msra.mxu0 0.0
        %975 = vmatprep.subr.mxu0 0.0
        %976 = vmatpush1.msra.mxu0 0.0
        %977 = vmatprep.mubr.f32.mxu0 0.0
        %978 = vmatmul.mubr.f32.gmra.mrb[0].mxu0 %v864
        %v979 = vpop.f32.mrb[0].mxu0
        %v980 = vadd.f32 0.0, %v979
        %v981 = vpop.f32.mrb[0].mxu0
        %982 = vmatprep.mubr.f32.mxu0 0.0
        %983 = vmatmul.mubr.f32.gmra.mrb[0].mxu0 %v865
        %v984 = vpop.f32.mrb[0].mxu0
        %v985 = vadd.f32 0.0, %v984
        %v986 = vpop.f32.mrb[0].mxu0
        %987 = vmatprep.mubr.f32.mxu0 0.0
        %988 = vmatmul.mubr.f32.gmra.mrb[0].mxu0 %v866
        %v989 = vpop.f32.mrb[0].mxu0
        %v990 = vadd.f32 0.0, %v989
        %v991 = vpop.f32.mrb[0].mxu0
        %992 = vmatprep.mubr.f32.mxu0 0.0
        %993 = vmatmul.mubr.f32.gmra.mrb[0].mxu0 %v867
        %v994 = vpop.f32.mrb[0].mxu0
        %v995 = vadd.f32 0.0, %v994
        %v996 = vpop.f32.mrb[0].mxu0
        %997 = vmatprep.mubr.f32.mxu0 0.0
        %998 = vmatmul.mubr.f32.gmra.mrb[0].mxu0 %v868
        %v999 = vpop.f32.mrb[0].mxu0
        %v1000 = vadd.f32 0.0, %v999
        %v1001 = vpop.f32.mrb[0].mxu0
        %1002 = vmatprep.mubr.f32.mxu0 0.0
        %1003 = vmatmul.mubr.f32.gmra.mrb[0].mxu0 %v869
        %v1004 = vpop.f32.mrb[0].mxu0
        %v1005 = vadd.f32 0.0, %v1004
        %v1006 = vpop.f32.mrb[0].mxu0
        %1007 = vmatprep.mubr.f32.mxu0 0.0
        %1008 = vmatmul.mubr.f32.gmra.mrb[0].mxu0 %v870
        %v1009 = vpop.f32.mrb[0].mxu0
        %v1010 = vadd.f32 0.0, %v1009
        %v1011 = vpop.f32.mrb[0].mxu0
        %1012 = vmatprep.mubr.f32.mxu0 0.0
        %1013 = vmatmul.mubr.f32.gmra.mrb[0].mxu0 %v871
        %v1014 = vpop.f32.mrb[0].mxu0
        %v1015 = vadd.f32 0.0, %v1014
        %v1016 = vpop.f32.mrb[0].mxu0
        %1017 = vmatprep.mubr.f32.mxu0 0.0
        %1018 = vmatmul.mubr.f32.gmra.mrb[0].mxu0 %v872
        %v1019 = vpop.f32.mrb[0].mxu0
        %v1020 = vadd.f32 0.0, %v1019
        %v1021 = vpop.f32.mrb[0].mxu0
        %1022 = vmatprep.mubr.f32.mxu0 0.0
        %1023 = vmatmul.mubr.f32.gmra.mrb[0].mxu0 %v873
        %v1024 = vpop.f32.mrb[0].mxu0
        %v1025 = vadd.f32 0.0, %v1024
        %v1026 = vpop.f32.mrb[0].mxu0
        %1027 = vmatprep.mubr.f32.mxu0 0.0
        %1028 = vmatmul.mubr.f32.gmra.mrb[0].mxu0 %v874
        %v1029 = vpop.f32.mrb[0].mxu0
        %v1030 = vadd.f32 0.0, %v1029
        %v1031 = vpop.f32.mrb[0].mxu0
        %1032 = vmatprep.mubr.f32.mxu0 0.0
        %1033 = vmatmul.mubr.f32.gmra.mrb[0].mxu0 %v875
        %v1034 = vpop.f32.mrb[0].mxu0
        %v1035 = vadd.f32 0.0, %v1034
        %v1036 = vpop.f32.mrb[0].mxu0
        %1037 = vmatprep.mubr.f32.mxu0 0.0
        %1038 = vmatmul.mubr.f32.gmra.mrb[0].mxu0 %v876
        %v1039 = vpop.f32.mrb[0].mxu0
        %v1040 = vadd.f32 0.0, %v1039
        %v1041 = vpop.f32.mrb[0].mxu0
        %1042 = vmatprep.mubr.f32.mxu0 0.0
        %1043 = vmatmul.mubr.f32.gmra.mrb[0].mxu0 %v877
        %v1044 = vpop.f32.mrb[0].mxu0
        %v1045 = vadd.f32 0.0, %v1044
        %v1046 = vpop.f32.mrb[0].mxu0
        %1047 = vmatprep.mubr.f32.mxu0 0.0
        %1048 = vmatmul.mubr.f32.gmra.mrb[0].mxu0 %v878
        %v1049 = vpop.f32.mrb[0].mxu0
        %v1050 = vadd.f32 0.0, %v1049
        %v1051 = vpop.f32.mrb[0].mxu0
        %1052 = vmatprep.mubr.f32.mxu0 0.0
        %1053 = vmatmul.mubr.f32.gmra.mrb[0].mxu0 %v879
        %v1054 = vpop.f32.mrb[0].mxu0
        %v1055 = vadd.f32 0.0, %v1054
        %v1056 = vpop.f32.mrb[0].mxu0
        %1057 = vmatprep.mubr.f32.mxu0 0.0
        %1058 = vmatmul.mubr.f32.gmra.mrb[0].mxu0 %v880
        %v1059 = vpop.f32.mrb[0].mxu0
        %v1060 = vadd.f32 0.0, %v1059
        %v1061 = vpop.f32.mrb[0].mxu0
        %1062 = vmatprep.mubr.f32.mxu0 0.0
        %1063 = vmatmul.mubr.f32.gmra.mrb[0].mxu0 %v881
        %v1064 = vpop.f32.mrb[0].mxu0
        %v1065 = vadd.f32 0.0, %v1064
        %v1066 = vpop.f32.mrb[0].mxu0
        %1067 = vmatprep.mubr.f32.mxu0 0.0
        %1068 = vmatmul.mubr.f32.gmra.mrb[0].mxu0 %v882
        %v1069 = vpop.f32.mrb[0].mxu0
        %v1070 = vadd.f32 0.0, %v1069
        %v1071 = vpop.f32.mrb[0].mxu0
        %1072 = vmatprep.mubr.f32.mxu0 0.0
        %1073 = vmatmul.mubr.f32.gmra.mrb[0].mxu0 %v883
        %v1074 = vpop.f32.mrb[0].mxu0
        %v1075 = vadd.f32 0.0, %v1074
        %v1076 = vpop.f32.mrb[0].mxu0
        %1077 = vmatprep.mubr.f32.mxu0 0.0
        %1078 = vmatmul.mubr.f32.gmra.mrb[0].mxu0 %v884
        %v1079 = vpop.f32.mrb[0].mxu0
        %v1080 = vadd.f32 0.0, %v1079
        %v1081 = vpop.f32.mrb[0].mxu0
        %1082 = vmatprep.mubr.f32.mxu0 0.0
        %1083 = vmatmul.mubr.f32.gmra.mrb[0].mxu0 %v885
        %v1084 = vpop.f32.mrb[0].mxu0
        %v1085 = vadd.f32 0.0, %v1084
        %v1086 = vpop.f32.mrb[0].mxu0
        %1087 = vmatprep.mubr.f32.mxu0 0.0
        %1088 = vmatmul.mubr.f32.gmra.mrb[0].mxu0 %v886
        %v1089 = vpop.f32.mrb[0].mxu0
        %v1090 = vadd.f32 0.0, %v1089
        %v1091 = vpop.f32.mrb[0].mxu0
        %1092 = vmatprep.mubr.f32.mxu0 0.0
        %1093 = vmatmul.mubr.f32.gmra.mrb[0].mxu0 %v887
        %v1094 = vpop.f32.mrb[0].mxu0
        %v1095 = vadd.f32 0.0, %v1094
        %v1096 = vpop.f32.mrb[0].mxu0
        %1097 = vmatprep.mubr.f32.mxu0 0.0
        %1098 = vmatmul.mubr.f32.gmra.mrb[0].mxu0 %v888
        %v1099 = vpop.f32.mrb[0].mxu0
        %v1100 = vadd.f32 0.0, %v1099
        %v1101 = vpop.f32.mrb[0].mxu0
        %1102 = vmatprep.mubr.f32.mxu0 0.0
        %1103 = vmatmul.mubr.f32.gmra.mrb[0].mxu0 %v889
        %v1104 = vpop.f32.mrb[0].mxu0
        %v1105 = vadd.f32 0.0, %v1104
        %v1106 = vpop.f32.mrb[0].mxu0
        %1107 = vmatprep.mubr.f32.mxu0 0.0
        %1108 = vmatmul.mubr.f32.gmra.mrb[0].mxu0 %v890
        %v1109 = vpop.f32.mrb[0].mxu0
        %v1110 = vadd.f32 0.0, %v1109
        %v1111 = vpop.f32.mrb[0].mxu0
        %1112 = vmatprep.mubr.f32.mxu0 0.0
        %1113 = vmatmul.mubr.f32.gmra.mrb[0].mxu0 %v891
        %v1114 = vpop.f32.mrb[0].mxu0
        %v1115 = vadd.f32 0.0, %v1114
        %v1116 = vpop.f32.mrb[0].mxu0
        %1117 = vmatprep.mubr.f32.mxu0 0.0
        %1118 = vmatmul.mubr.f32.gmra.mrb[0].mxu0 %v892
        %v1119 = vpop.f32.mrb[0].mxu0
        %v1120 = vadd.f32 0.0, %v1119
        %v1121 = vpop.f32.mrb[0].mxu0
        %1122 = vmatprep.mubr.f32.mxu0 0.0
        %1123 = vmatmul.mubr.f32.gmra.mrb[0].mxu0 %v893
        %v1124 = vpop.f32.mrb[0].mxu0
        %v1125 = vadd.f32 0.0, %v1124
        %v1126 = vpop.f32.mrb[0].mxu0
        %1127 = vmatprep.mubr.f32.mxu0 0.0
        %1128 = vmatmul.mubr.f32.gmra.mrb[0].mxu0 %v894
        %v1129 = vpop.f32.mrb[0].mxu0
        %v1130 = vadd.f32 0.0, %v1129
        %v1131 = vpop.f32.mrb[0].mxu0
        %1132 = vmatprep.mubr.f32.mxu0 0.0
        %1133 = vmatmul.mubr.f32.gmra.mrb[0].mxu0 %v895
        %v1134 = vpop.f32.mrb[0].mxu0
        %v1135 = vadd.f32 0.0, %v1134
        %v1136 = vpop.f32.mrb[0].mxu0
        %1137 = vdwg.mxu0
        %1138 = vmatprep.subr.mxu0 0.0
        %1139 = vmatpush1.msra.mxu0 %v848
        %1140 = vmatprep.subr.mxu0 0.0
        %1141 = vmatpush1.msra.mxu0 %v849
        %1142 = vmatprep.subr.mxu0 0.0
        %1143 = vmatpush1.msra.mxu0 %v850
        %1144 = vmatprep.subr.mxu0 0.0
        %1145 = vmatpush1.msra.mxu0 %v851
        %1146 = vmatprep.subr.mxu0 0.0
        %1147 = vmatpush1.msra.mxu0 %v852
        %1148 = vmatprep.subr.mxu0 0.0
        %1149 = vmatpush1.msra.mxu0 %v853
        %1150 = vmatprep.subr.mxu0 0.0
        %1151 = vmatpush1.msra.mxu0 %v854
        %1152 = vmatprep.subr.mxu0 0.0
        %1153 = vmatpush1.msra.mxu0 %v855
        %1154 = vmatprep.subr.mxu0 0.0
        %1155 = vmatpush1.msra.mxu0 %v856
        %1156 = vmatprep.subr.mxu0 0.0
        %1157 = vmatpush1.msra.mxu0 %v857
        %1158 = vmatprep.subr.mxu0 0.0
        %1159 = vmatpush1.msra.mxu0 %v858
        %1160 = vmatprep.subr.mxu0 0.0
        %1161 = vmatpush1.msra.mxu0 %v859
        %1162 = vmatprep.subr.mxu0 0.0
        %1163 = vmatpush1.msra.mxu0 %v860
        %1164 = vmatprep.subr.mxu0 0.0
        %1165 = vmatpush1.msra.mxu0 %v861
        %1166 = vmatprep.subr.mxu0 0.0
        %1167 = vmatpush1.msra.mxu0 %v862
        %1168 = vmatprep.subr.mxu0 0.0
        %1169 = vmatpush1.msra.mxu0 %v863
        %1170 = vmatprep.subr.mxu0 0.0
        %1171 = vmatpush1.msra.mxu0 0.0
        %1172 = vmatprep.subr.mxu0 0.0
        %1173 = vmatpush1.msra.mxu0 0.0
        %1174 = vmatprep.subr.mxu0 0.0
        %1175 = vmatpush1.msra.mxu0 0.0
        %1176 = vmatprep.subr.mxu0 0.0
        %1177 = vmatpush1.msra.mxu0 0.0
        %1178 = vmatprep.subr.mxu0 0.0
        %1179 = vmatpush1.msra.mxu0 0.0
        %1180 = vmatprep.subr.mxu0 0.0
        %1181 = vmatpush1.msra.mxu0 0.0
        %1182 = vmatprep.subr.mxu0 0.0
        %1183 = vmatpush1.msra.mxu0 0.0
        %1184 = vmatprep.subr.mxu0 0.0
        %1185 = vmatpush1.msra.mxu0 0.0
        %1186 = vmatprep.subr.mxu0 0.0
        %1187 = vmatpush1.msra.mxu0 0.0
        %1188 = vmatprep.subr.mxu0 0.0
        %1189 = vmatpush1.msra.mxu0 0.0
        %1190 = vmatprep.subr.mxu0 0.0
        %1191 = vmatpush1.msra.mxu0 0.0
        %1192 = vmatprep.subr.mxu0 0.0
        %1193 = vmatpush1.msra.mxu0 0.0
        %1194 = vmatprep.subr.mxu0 0.0
        %1195 = vmatpush1.msra.mxu0 0.0
        %1196 = vmatprep.subr.mxu0 0.0
        %1197 = vmatpush1.msra.mxu0 0.0
        %1198 = vmatprep.subr.mxu0 0.0
        %1199 = vmatpush1.msra.mxu0 0.0
        %1200 = vmatprep.subr.mxu0 0.0
        %1201 = vmatpush1.msra.mxu0 0.0
        %1202 = vmatprep.mubr.f32.mxu0 0.0
        %1203 = vmatmul.mubr.f32.gmra.mrb[0].mxu0 %v816
        %v1204 = vpop.f32.mrb[0].mxu0
        %v1205 = vadd.f32 %v980, %v1204
        %v1206 = vpop.f32.mrb[0].mxu0
        %1207 = vmatprep.mubr.f32.mxu0 0.0
        %1208 = vmatmul.mubr.f32.gmra.mrb[0].mxu0 %v817
        %v1209 = vpop.f32.mrb[0].mxu0
        %v1210 = vadd.f32 %v985, %v1209
        %v1211 = vpop.f32.mrb[0].mxu0
        %1212 = vmatprep.mubr.f32.mxu0 0.0
        %1213 = vmatmul.mubr.f32.gmra.mrb[0].mxu0 %v818
        %v1214 = vpop.f32.mrb[0].mxu0
        %v1215 = vadd.f32 %v990, %v1214
        %v1216 = vpop.f32.mrb[0].mxu0
        %1217 = vmatprep.mubr.f32.mxu0 0.0
        %1218 = vmatmul.mubr.f32.gmra.mrb[0].mxu0 %v819
        %v1219 = vpop.f32.mrb[0].mxu0
        %v1220 = vadd.f32 %v995, %v1219
        %v1221 = vpop.f32.mrb[0].mxu0
        %1222 = vmatprep.mubr.f32.mxu0 0.0
        %1223 = vmatmul.mubr.f32.gmra.mrb[0].mxu0 %v820
        %v1224 = vpop.f32.mrb[0].mxu0
        %v1225 = vadd.f32 %v1000, %v1224
        %v1226 = vpop.f32.mrb[0].mxu0
        %1227 = vmatprep.mubr.f32.mxu0 0.0
        %1228 = vmatmul.mubr.f32.gmra.mrb[0].mxu0 %v821
        %v1229 = vpop.f32.mrb[0].mxu0
        %v1230 = vadd.f32 %v1005, %v1229
        %v1231 = vpop.f32.mrb[0].mxu0
        %1232 = vmatprep.mubr.f32.mxu0 0.0
        %1233 = vmatmul.mubr.f32.gmra.mrb[0].mxu0 %v822
        %v1234 = vpop.f32.mrb[0].mxu0
        %v1235 = vadd.f32 %v1010, %v1234
        %v1236 = vpop.f32.mrb[0].mxu0
        %1237 = vmatprep.mubr.f32.mxu0 0.0
        %1238 = vmatmul.mubr.f32.gmra.mrb[0].mxu0 %v823
        %v1239 = vpop.f32.mrb[0].mxu0
        %v1240 = vadd.f32 %v1015, %v1239
        %v1241 = vpop.f32.mrb[0].mxu0
        %1242 = vmatprep.mubr.f32.mxu0 0.0
        %1243 = vmatmul.mubr.f32.gmra.mrb[0].mxu0 %v824
        %v1244 = vpop.f32.mrb[0].mxu0
        %v1245 = vadd.f32 %v1020, %v1244
        %v1246 = vpop.f32.mrb[0].mxu0
        %1247 = vmatprep.mubr.f32.mxu0 0.0
        %1248 = vmatmul.mubr.f32.gmra.mrb[0].mxu0 %v825
        %v1249 = vpop.f32.mrb[0].mxu0
        %v1250 = vadd.f32 %v1025, %v1249
        %v1251 = vpop.f32.mrb[0].mxu0
        %1252 = vmatprep.mubr.f32.mxu0 0.0
        %1253 = vmatmul.mubr.f32.gmra.mrb[0].mxu0 %v826
        %v1254 = vpop.f32.mrb[0].mxu0
        %v1255 = vadd.f32 %v1030, %v1254
        %v1256 = vpop.f32.mrb[0].mxu0
        %1257 = vmatprep.mubr.f32.mxu0 0.0
        %1258 = vmatmul.mubr.f32.gmra.mrb[0].mxu0 %v827
        %v1259 = vpop.f32.mrb[0].mxu0
        %v1260 = vadd.f32 %v1035, %v1259
        %v1261 = vpop.f32.mrb[0].mxu0
        %1262 = vmatprep.mubr.f32.mxu0 0.0
        %1263 = vmatmul.mubr.f32.gmra.mrb[0].mxu0 %v828
        %v1264 = vpop.f32.mrb[0].mxu0
        %v1265 = vadd.f32 %v1040, %v1264
        %v1266 = vpop.f32.mrb[0].mxu0
        %1267 = vmatprep.mubr.f32.mxu0 0.0
        %1268 = vmatmul.mubr.f32.gmra.mrb[0].mxu0 %v829
        %v1269 = vpop.f32.mrb[0].mxu0
        %v1270 = vadd.f32 %v1045, %v1269
        %v1271 = vpop.f32.mrb[0].mxu0
        %1272 = vmatprep.mubr.f32.mxu0 0.0
        %1273 = vmatmul.mubr.f32.gmra.mrb[0].mxu0 %v830
        %v1274 = vpop.f32.mrb[0].mxu0
        %v1275 = vadd.f32 %v1050, %v1274
        %v1276 = vpop.f32.mrb[0].mxu0
        %1277 = vmatprep.mubr.f32.mxu0 0.0
        %1278 = vmatmul.mubr.f32.gmra.mrb[0].mxu0 %v831
        %v1279 = vpop.f32.mrb[0].mxu0
        %v1280 = vadd.f32 %v1055, %v1279
        %v1281 = vpop.f32.mrb[0].mxu0
        %1282 = vmatprep.mubr.f32.mxu0 0.0
        %1283 = vmatmul.mubr.f32.gmra.mrb[0].mxu0 %v832
        %v1284 = vpop.f32.mrb[0].mxu0
        %v1285 = vadd.f32 %v1060, %v1284
        %v1286 = vpop.f32.mrb[0].mxu0
        %1287 = vmatprep.mubr.f32.mxu0 0.0
        %1288 = vmatmul.mubr.f32.gmra.mrb[0].mxu0 %v833
        %v1289 = vpop.f32.mrb[0].mxu0
        %v1290 = vadd.f32 %v1065, %v1289
        %v1291 = vpop.f32.mrb[0].mxu0
        %1292 = vmatprep.mubr.f32.mxu0 0.0
        %1293 = vmatmul.mubr.f32.gmra.mrb[0].mxu0 %v834
        %v1294 = vpop.f32.mrb[0].mxu0
        %v1295 = vadd.f32 %v1070, %v1294
        %v1296 = vpop.f32.mrb[0].mxu0
        %1297 = vmatprep.mubr.f32.mxu0 0.0
        %1298 = vmatmul.mubr.f32.gmra.mrb[0].mxu0 %v835
        %v1299 = vpop.f32.mrb[0].mxu0
        %v1300 = vadd.f32 %v1075, %v1299
        %v1301 = vpop.f32.mrb[0].mxu0
        %1302 = vmatprep.mubr.f32.mxu0 0.0
        %1303 = vmatmul.mubr.f32.gmra.mrb[0].mxu0 %v836
        %v1304 = vpop.f32.mrb[0].mxu0
        %v1305 = vadd.f32 %v1080, %v1304
        %v1306 = vpop.f32.mrb[0].mxu0
        %1307 = vmatprep.mubr.f32.mxu0 0.0
        %1308 = vmatmul.mubr.f32.gmra.mrb[0].mxu0 %v837
        %v1309 = vpop.f32.mrb[0].mxu0
        %v1310 = vadd.f32 %v1085, %v1309
        %v1311 = vpop.f32.mrb[0].mxu0
        %1312 = vmatprep.mubr.f32.mxu0 0.0
        %1313 = vmatmul.mubr.f32.gmra.mrb[0].mxu0 %v838
        %v1314 = vpop.f32.mrb[0].mxu0
        %v1315 = vadd.f32 %v1090, %v1314
        %v1316 = vpop.f32.mrb[0].mxu0
        %1317 = vmatprep.mubr.f32.mxu0 0.0
        %1318 = vmatmul.mubr.f32.gmra.mrb[0].mxu0 %v839
        %v1319 = vpop.f32.mrb[0].mxu0
        %v1320 = vadd.f32 %v1095, %v1319
        %v1321 = vpop.f32.mrb[0].mxu0
        %1322 = vmatprep.mubr.f32.mxu0 0.0
        %1323 = vmatmul.mubr.f32.gmra.mrb[0].mxu0 %v840
        %v1324 = vpop.f32.mrb[0].mxu0
        %v1325 = vadd.f32 %v1100, %v1324
        %v1326 = vpop.f32.mrb[0].mxu0
        %1327 = vmatprep.mubr.f32.mxu0 0.0
        %1328 = vmatmul.mubr.f32.gmra.mrb[0].mxu0 %v841
        %v1329 = vpop.f32.mrb[0].mxu0
        %v1330 = vadd.f32 %v1105, %v1329
        %v1331 = vpop.f32.mrb[0].mxu0
        %1332 = vmatprep.mubr.f32.mxu0 0.0
        %1333 = vmatmul.mubr.f32.gmra.mrb[0].mxu0 %v842
        %v1334 = vpop.f32.mrb[0].mxu0
        %v1335 = vadd.f32 %v1110, %v1334
        %v1336 = vpop.f32.mrb[0].mxu0
        %1337 = vmatprep.mubr.f32.mxu0 0.0
        %1338 = vmatmul.mubr.f32.gmra.mrb[0].mxu0 %v843
        %v1339 = vpop.f32.mrb[0].mxu0
        %v1340 = vadd.f32 %v1115, %v1339
        %v1341 = vpop.f32.mrb[0].mxu0
        %1342 = vmatprep.mubr.f32.mxu0 0.0
        %1343 = vmatmul.mubr.f32.gmra.mrb[0].mxu0 %v844
        %v1344 = vpop.f32.mrb[0].mxu0
        %v1345 = vadd.f32 %v1120, %v1344
        %v1346 = vpop.f32.mrb[0].mxu0
        %1347 = vmatprep.mubr.f32.mxu0 0.0
        %1348 = vmatmul.mubr.f32.gmra.mrb[0].mxu0 %v845
        %v1349 = vpop.f32.mrb[0].mxu0
        %v1350 = vadd.f32 %v1125, %v1349
        %v1351 = vpop.f32.mrb[0].mxu0
        %1352 = vmatprep.mubr.f32.mxu0 0.0
        %1353 = vmatmul.mubr.f32.gmra.mrb[0].mxu0 %v846
        %v1354 = vpop.f32.mrb[0].mxu0
        %v1355 = vadd.f32 %v1130, %v1354
        %v1356 = vpop.f32.mrb[0].mxu0
        %1357 = vmatprep.mubr.f32.mxu0 0.0
        %1358 = vmatmul.mubr.f32.gmra.mrb[0].mxu0 %v847
        %v1359 = vpop.f32.mrb[0].mxu0
        %v1360 = vadd.f32 %v1135, %v1359
        %v1361 = vpop.f32.mrb[0].mxu0
        %1362 = vdwg.mxu0
        %v1363 = vld [vmem:[#allocation2 + $0x2] sm:$0xff]
        %v1364 = vld [vmem:[#allocation2 + $0xa] sm:$0xff]
        %v1365 = vld [vmem:[#allocation2 + $0x1a] sm:$0xff]
        %v1366 = vld [vmem:[#allocation2 + $0x22] sm:$0xff]
        %v1367 = vld [vmem:[#allocation2 + $0x32] sm:$0xff]
        %v1368 = vld [vmem:[#allocation2 + $0x3a] sm:$0xff]
        %v1369 = vld [vmem:[#allocation2 + $0x4a] sm:$0xff]
        %v1370 = vld [vmem:[#allocation2 + $0x52] sm:$0xff]
        %v1371 = vld [vmem:[#allocation2 + $0x62] sm:$0xff]
        %v1372 = vld [vmem:[#allocation2 + $0x6a] sm:$0xff]
        %v1373 = vld [vmem:[#allocation2 + $0x7a] sm:$0xff]
        %v1374 = vld [vmem:[#allocation2 + $0x82] sm:$0xff]
        %v1375 = vld [vmem:[#allocation2 + $0x92] sm:$0xff]
        %v1376 = vld [vmem:[#allocation2 + $0x9a] sm:$0xff]
        %v1377 = vld [vmem:[#allocation2 + $0xaa] sm:$0xff]
        %v1378 = vld [vmem:[#allocation2 + $0xb2] sm:$0xff]
        %v1379 = vld [vmem:[#allocation2 + $0xc2] sm:$0xff]
        %v1380 = vld [vmem:[#allocation2 + $0xca] sm:$0xff]
        %v1381 = vld [vmem:[#allocation2 + $0xda] sm:$0xff]
        %v1382 = vld [vmem:[#allocation2 + $0xe2] sm:$0xff]
        %v1383 = vld [vmem:[#allocation2 + $0xf2] sm:$0xff]
        %v1384 = vld [vmem:[#allocation2 + $0xfa] sm:$0xff]
        %v1385 = vld [vmem:[#allocation2 + $0x10a] sm:$0xff]
        %v1386 = vld [vmem:[#allocation2 + $0x112] sm:$0xff]
        %v1387 = vld [vmem:[#allocation2 + $0x122] sm:$0xff]
        %v1388 = vld [vmem:[#allocation2 + $0x12a] sm:$0xff]
        %v1389 = vld [vmem:[#allocation2 + $0x13a] sm:$0xff]
        %v1390 = vld [vmem:[#allocation2 + $0x142] sm:$0xff]
        %v1391 = vld [vmem:[#allocation2 + $0x152] sm:$0xff]
        %v1392 = vld [vmem:[#allocation2 + $0x15a] sm:$0xff]
        %v1393 = vld [vmem:[#allocation2 + $0x16a] sm:$0xff]
        %v1394 = vld [vmem:[#allocation2 + $0x172] sm:$0xff]
        %s1395 = scalar_lea.vmem [#allocation8], 256
        %v1396 = vld [vmem:[%s1395] sm:$0xff]
        %v1397 = vld [vmem:[%s1395 + $0x8] sm:$0xff]
        %v1398 = vld [vmem:[%s1395 + $0x10] sm:$0xff]
        %v1399 = vld [vmem:[%s1395 + $0x18] sm:$0xff]
        %v1400 = vld [vmem:[%s1395 + $0x20] sm:$0xff]
        %v1401 = vld [vmem:[%s1395 + $0x28] sm:$0xff]
        %v1402 = vld [vmem:[%s1395 + $0x30] sm:$0xff]
        %v1403 = vld [vmem:[%s1395 + $0x38] sm:$0xff]
        %v1404 = vld [vmem:[%s1395 + $0x40] sm:$0xff]
        %v1405 = vld [vmem:[%s1395 + $0x48] sm:$0xff]
        %v1406 = vld [vmem:[%s1395 + $0x50] sm:$0xff]
        %v1407 = vld [vmem:[%s1395 + $0x58] sm:$0xff]
        %v1408 = vld [vmem:[%s1395 + $0x60] sm:$0xff]
        %v1409 = vld [vmem:[%s1395 + $0x68] sm:$0xff]
        %v1410 = vld [vmem:[%s1395 + $0x70] sm:$0xff]
        %v1411 = vld [vmem:[%s1395 + $0x78] sm:$0xff]
        %1412 = vmatprep.subr.mxu0 0.0
        %1413 = vmatpush1.msra.mxu0 %v1396
        %1414 = vmatprep.subr.mxu0 0.0
        %1415 = vmatpush1.msra.mxu0 %v1397
        %1416 = vmatprep.subr.mxu0 0.0
        %1417 = vmatpush1.msra.mxu0 %v1398
        %1418 = vmatprep.subr.mxu0 0.0
        %1419 = vmatpush1.msra.mxu0 %v1399
        %1420 = vmatprep.subr.mxu0 0.0
        %1421 = vmatpush1.msra.mxu0 %v1400
        %1422 = vmatprep.subr.mxu0 0.0
        %1423 = vmatpush1.msra.mxu0 %v1401
        %1424 = vmatprep.subr.mxu0 0.0
        %1425 = vmatpush1.msra.mxu0 %v1402
        %1426 = vmatprep.subr.mxu0 0.0
        %1427 = vmatpush1.msra.mxu0 %v1403
        %1428 = vmatprep.subr.mxu0 0.0
        %1429 = vmatpush1.msra.mxu0 %v1404
        %1430 = vmatprep.subr.mxu0 0.0
        %1431 = vmatpush1.msra.mxu0 %v1405
        %1432 = vmatprep.subr.mxu0 0.0
        %1433 = vmatpush1.msra.mxu0 %v1406
        %1434 = vmatprep.subr.mxu0 0.0
        %1435 = vmatpush1.msra.mxu0 %v1407
        %1436 = vmatprep.subr.mxu0 0.0
        %1437 = vmatpush1.msra.mxu0 %v1408
        %1438 = vmatprep.subr.mxu0 0.0
        %1439 = vmatpush1.msra.mxu0 %v1409
        %1440 = vmatprep.subr.mxu0 0.0
        %1441 = vmatpush1.msra.mxu0 %v1410
        %1442 = vmatprep.subr.mxu0 0.0
        %1443 = vmatpush1.msra.mxu0 %v1411
        %1444 = vmatprep.subr.mxu0 0.0
        %1445 = vmatpush1.msra.mxu0 0.0
        %1446 = vmatprep.subr.mxu0 0.0
        %1447 = vmatpush1.msra.mxu0 0.0
        %1448 = vmatprep.subr.mxu0 0.0
        %1449 = vmatpush1.msra.mxu0 0.0
        %1450 = vmatprep.subr.mxu0 0.0
        %1451 = vmatpush1.msra.mxu0 0.0
        %1452 = vmatprep.subr.mxu0 0.0
        %1453 = vmatpush1.msra.mxu0 0.0
        %1454 = vmatprep.subr.mxu0 0.0
        %1455 = vmatpush1.msra.mxu0 0.0
        %1456 = vmatprep.subr.mxu0 0.0
        %1457 = vmatpush1.msra.mxu0 0.0
        %1458 = vmatprep.subr.mxu0 0.0
        %1459 = vmatpush1.msra.mxu0 0.0
        %1460 = vmatprep.subr.mxu0 0.0
        %1461 = vmatpush1.msra.mxu0 0.0
        %1462 = vmatprep.subr.mxu0 0.0
        %1463 = vmatpush1.msra.mxu0 0.0
        %1464 = vmatprep.subr.mxu0 0.0
        %1465 = vmatpush1.msra.mxu0 0.0
        %1466 = vmatprep.subr.mxu0 0.0
        %1467 = vmatpush1.msra.mxu0 0.0
        %1468 = vmatprep.subr.mxu0 0.0
        %1469 = vmatpush1.msra.mxu0 0.0
        %1470 = vmatprep.subr.mxu0 0.0
        %1471 = vmatpush1.msra.mxu0 0.0
        %1472 = vmatprep.subr.mxu0 0.0
        %1473 = vmatpush1.msra.mxu0 0.0
        %1474 = vmatprep.subr.mxu0 0.0
        %1475 = vmatpush1.msra.mxu0 0.0
        %1476 = vmatprep.mubr.f32.mxu0 0.0
        %1477 = vmatmul.mubr.f32.gmra.mrb[0].mxu0 %v1363
        %v1478 = vpop.f32.mrb[0].mxu0
        %v1479 = vadd.f32 0.0, %v1478
        %v1480 = vpop.f32.mrb[0].mxu0
        %1481 = vmatprep.mubr.f32.mxu0 0.0
        %1482 = vmatmul.mubr.f32.gmra.mrb[0].mxu0 %v1364
        %v1483 = vpop.f32.mrb[0].mxu0
        %v1484 = vadd.f32 0.0, %v1483
        %v1485 = vpop.f32.mrb[0].mxu0
        %1486 = vmatprep.mubr.f32.mxu0 0.0
        %1487 = vmatmul.mubr.f32.gmra.mrb[0].mxu0 %v1365
        %v1488 = vpop.f32.mrb[0].mxu0
        %v1489 = vadd.f32 0.0, %v1488
        %v1490 = vpop.f32.mrb[0].mxu0
        %1491 = vmatprep.mubr.f32.mxu0 0.0
        %1492 = vmatmul.mubr.f32.gmra.mrb[0].mxu0 %v1366
        %v1493 = vpop.f32.mrb[0].mxu0
        %v1494 = vadd.f32 0.0, %v1493
        %v1495 = vpop.f32.mrb[0].mxu0
        %1496 = vmatprep.mubr.f32.mxu0 0.0
        %1497 = vmatmul.mubr.f32.gmra.mrb[0].mxu0 %v1367
        %v1498 = vpop.f32.mrb[0].mxu0
        %v1499 = vadd.f32 0.0, %v1498
        %v1500 = vpop.f32.mrb[0].mxu0
        %1501 = vmatprep.mubr.f32.mxu0 0.0
        %1502 = vmatmul.mubr.f32.gmra.mrb[0].mxu0 %v1368
        %v1503 = vpop.f32.mrb[0].mxu0
        %v1504 = vadd.f32 0.0, %v1503
        %v1505 = vpop.f32.mrb[0].mxu0
        %1506 = vmatprep.mubr.f32.mxu0 0.0
        %1507 = vmatmul.mubr.f32.gmra.mrb[0].mxu0 %v1369
        %v1508 = vpop.f32.mrb[0].mxu0
        %v1509 = vadd.f32 0.0, %v1508
        %v1510 = vpop.f32.mrb[0].mxu0
        %1511 = vmatprep.mubr.f32.mxu0 0.0
        %1512 = vmatmul.mubr.f32.gmra.mrb[0].mxu0 %v1370
        %v1513 = vpop.f32.mrb[0].mxu0
        %v1514 = vadd.f32 0.0, %v1513
        %v1515 = vpop.f32.mrb[0].mxu0
        %1516 = vmatprep.mubr.f32.mxu0 0.0
        %1517 = vmatmul.mubr.f32.gmra.mrb[0].mxu0 %v1371
        %v1518 = vpop.f32.mrb[0].mxu0
        %v1519 = vadd.f32 0.0, %v1518
        %v1520 = vpop.f32.mrb[0].mxu0
        %1521 = vmatprep.mubr.f32.mxu0 0.0
        %1522 = vmatmul.mubr.f32.gmra.mrb[0].mxu0 %v1372
        %v1523 = vpop.f32.mrb[0].mxu0
        %v1524 = vadd.f32 0.0, %v1523
        %v1525 = vpop.f32.mrb[0].mxu0
        %1526 = vmatprep.mubr.f32.mxu0 0.0
        %1527 = vmatmul.mubr.f32.gmra.mrb[0].mxu0 %v1373
        %v1528 = vpop.f32.mrb[0].mxu0
        %v1529 = vadd.f32 0.0, %v1528
        %v1530 = vpop.f32.mrb[0].mxu0
        %1531 = vmatprep.mubr.f32.mxu0 0.0
        %1532 = vmatmul.mubr.f32.gmra.mrb[0].mxu0 %v1374
        %v1533 = vpop.f32.mrb[0].mxu0
        %v1534 = vadd.f32 0.0, %v1533
        %v1535 = vpop.f32.mrb[0].mxu0
        %1536 = vmatprep.mubr.f32.mxu0 0.0
        %1537 = vmatmul.mubr.f32.gmra.mrb[0].mxu0 %v1375
        %v1538 = vpop.f32.mrb[0].mxu0
        %v1539 = vadd.f32 0.0, %v1538
        %v1540 = vpop.f32.mrb[0].mxu0
        %1541 = vmatprep.mubr.f32.mxu0 0.0
        %1542 = vmatmul.mubr.f32.gmra.mrb[0].mxu0 %v1376
        %v1543 = vpop.f32.mrb[0].mxu0
        %v1544 = vadd.f32 0.0, %v1543
        %v1545 = vpop.f32.mrb[0].mxu0
        %1546 = vmatprep.mubr.f32.mxu0 0.0
        %1547 = vmatmul.mubr.f32.gmra.mrb[0].mxu0 %v1377
        %v1548 = vpop.f32.mrb[0].mxu0
        %v1549 = vadd.f32 0.0, %v1548
        %v1550 = vpop.f32.mrb[0].mxu0
        %1551 = vmatprep.mubr.f32.mxu0 0.0
        %1552 = vmatmul.mubr.f32.gmra.mrb[0].mxu0 %v1378
        %v1553 = vpop.f32.mrb[0].mxu0
        %v1554 = vadd.f32 0.0, %v1553
        %v1555 = vpop.f32.mrb[0].mxu0
        %1556 = vmatprep.mubr.f32.mxu0 0.0
        %1557 = vmatmul.mubr.f32.gmra.mrb[0].mxu0 %v1379
        %v1558 = vpop.f32.mrb[0].mxu0
        %v1559 = vadd.f32 0.0, %v1558
        %v1560 = vpop.f32.mrb[0].mxu0
        %1561 = vmatprep.mubr.f32.mxu0 0.0
        %1562 = vmatmul.mubr.f32.gmra.mrb[0].mxu0 %v1380
        %v1563 = vpop.f32.mrb[0].mxu0
        %v1564 = vadd.f32 0.0, %v1563
        %v1565 = vpop.f32.mrb[0].mxu0
        %1566 = vmatprep.mubr.f32.mxu0 0.0
        %1567 = vmatmul.mubr.f32.gmra.mrb[0].mxu0 %v1381
        %v1568 = vpop.f32.mrb[0].mxu0
        %v1569 = vadd.f32 0.0, %v1568
        %v1570 = vpop.f32.mrb[0].mxu0
        %1571 = vmatprep.mubr.f32.mxu0 0.0
        %1572 = vmatmul.mubr.f32.gmra.mrb[0].mxu0 %v1382
        %v1573 = vpop.f32.mrb[0].mxu0
        %v1574 = vadd.f32 0.0, %v1573
        %v1575 = vpop.f32.mrb[0].mxu0
        %1576 = vmatprep.mubr.f32.mxu0 0.0
        %1577 = vmatmul.mubr.f32.gmra.mrb[0].mxu0 %v1383
        %v1578 = vpop.f32.mrb[0].mxu0
        %v1579 = vadd.f32 0.0, %v1578
        %v1580 = vpop.f32.mrb[0].mxu0
        %1581 = vmatprep.mubr.f32.mxu0 0.0
        %1582 = vmatmul.mubr.f32.gmra.mrb[0].mxu0 %v1384
        %v1583 = vpop.f32.mrb[0].mxu0
        %v1584 = vadd.f32 0.0, %v1583
        %v1585 = vpop.f32.mrb[0].mxu0
        %1586 = vmatprep.mubr.f32.mxu0 0.0
        %1587 = vmatmul.mubr.f32.gmra.mrb[0].mxu0 %v1385
        %v1588 = vpop.f32.mrb[0].mxu0
        %v1589 = vadd.f32 0.0, %v1588
        %v1590 = vpop.f32.mrb[0].mxu0
        %1591 = vmatprep.mubr.f32.mxu0 0.0
        %1592 = vmatmul.mubr.f32.gmra.mrb[0].mxu0 %v1386
        %v1593 = vpop.f32.mrb[0].mxu0
        %v1594 = vadd.f32 0.0, %v1593
        %v1595 = vpop.f32.mrb[0].mxu0
        %1596 = vmatprep.mubr.f32.mxu0 0.0
        %1597 = vmatmul.mubr.f32.gmra.mrb[0].mxu0 %v1387
        %v1598 = vpop.f32.mrb[0].mxu0
        %v1599 = vadd.f32 0.0, %v1598
        %v1600 = vpop.f32.mrb[0].mxu0
        %1601 = vmatprep.mubr.f32.mxu0 0.0
        %1602 = vmatmul.mubr.f32.gmra.mrb[0].mxu0 %v1388
        %v1603 = vpop.f32.mrb[0].mxu0
        %v1604 = vadd.f32 0.0, %v1603
        %v1605 = vpop.f32.mrb[0].mxu0
        %1606 = vmatprep.mubr.f32.mxu0 0.0
        %1607 = vmatmul.mubr.f32.gmra.mrb[0].mxu0 %v1389
        %v1608 = vpop.f32.mrb[0].mxu0
        %v1609 = vadd.f32 0.0, %v1608
        %v1610 = vpop.f32.mrb[0].mxu0
        %1611 = vmatprep.mubr.f32.mxu0 0.0
        %1612 = vmatmul.mubr.f32.gmra.mrb[0].mxu0 %v1390
        %v1613 = vpop.f32.mrb[0].mxu0
        %v1614 = vadd.f32 0.0, %v1613
        %v1615 = vpop.f32.mrb[0].mxu0
        %1616 = vmatprep.mubr.f32.mxu0 0.0
        %1617 = vmatmul.mubr.f32.gmra.mrb[0].mxu0 %v1391
        %v1618 = vpop.f32.mrb[0].mxu0
        %v1619 = vadd.f32 0.0, %v1618
        %v1620 = vpop.f32.mrb[0].mxu0
        %1621 = vmatprep.mubr.f32.mxu0 0.0
        %1622 = vmatmul.mubr.f32.gmra.mrb[0].mxu0 %v1392
        %v1623 = vpop.f32.mrb[0].mxu0
        %v1624 = vadd.f32 0.0, %v1623
        %v1625 = vpop.f32.mrb[0].mxu0
        %1626 = vmatprep.mubr.f32.mxu0 0.0
        %1627 = vmatmul.mubr.f32.gmra.mrb[0].mxu0 %v1393
        %v1628 = vpop.f32.mrb[0].mxu0
        %v1629 = vadd.f32 0.0, %v1628
        %v1630 = vpop.f32.mrb[0].mxu0
        %1631 = vmatprep.mubr.f32.mxu0 0.0
        %1632 = vmatmul.mubr.f32.gmra.mrb[0].mxu0 %v1394
        %v1633 = vpop.f32.mrb[0].mxu0
        %v1634 = vadd.f32 0.0, %v1633
        %v1635 = vpop.f32.mrb[0].mxu0
        %1636 = vdwg.mxu0
        %v1637 = vadd.f32 %v1205, %v1479
        %v1638 = vadd.f32 %v1210, %v1484
        %v1639 = vadd.f32 %v1215, %v1489
        %v1640 = vadd.f32 %v1220, %v1494
        %v1641 = vadd.f32 %v1225, %v1499
        %v1642 = vadd.f32 %v1230, %v1504
        %v1643 = vadd.f32 %v1235, %v1509
        %v1644 = vadd.f32 %v1240, %v1514
        %v1645 = vadd.f32 %v1245, %v1519
        %v1646 = vadd.f32 %v1250, %v1524
        %v1647 = vadd.f32 %v1255, %v1529
        %v1648 = vadd.f32 %v1260, %v1534
        %v1649 = vadd.f32 %v1265, %v1539
        %v1650 = vadd.f32 %v1270, %v1544
        %v1651 = vadd.f32 %v1275, %v1549
        %v1652 = vadd.f32 %v1280, %v1554
        %v1653 = vadd.f32 %v1285, %v1559
        %v1654 = vadd.f32 %v1290, %v1564
        %v1655 = vadd.f32 %v1295, %v1569
        %v1656 = vadd.f32 %v1300, %v1574
        %v1657 = vadd.f32 %v1305, %v1579
        %v1658 = vadd.f32 %v1310, %v1584
        %v1659 = vadd.f32 %v1315, %v1589
        %v1660 = vadd.f32 %v1320, %v1594
        %v1661 = vadd.f32 %v1325, %v1599
        %v1662 = vadd.f32 %v1330, %v1604
        %v1663 = vadd.f32 %v1335, %v1609
        %v1664 = vadd.f32 %v1340, %v1614
        %v1665 = vadd.f32 %v1345, %v1619
        %v1666 = vadd.f32 %v1350, %v1624
        %v1667 = vadd.f32 %v1355, %v1629
        %v1668 = vadd.f32 %v1360, %v1634
        %s1669 = scalar_lea.vmem [#allocation2], 24
        %v1670 = vld [vmem:[%s1669] sm:$0xff]
        %v1671 = vld [vmem:[%s1669 + $0x8] sm:$0xff]
        %v1672 = vld [vmem:[%s1669 + $0x18] sm:$0xff]
        %v1673 = vld [vmem:[%s1669 + $0x20] sm:$0xff]
        %v1674 = vld [vmem:[%s1669 + $0x30] sm:$0xff]
        %v1675 = vld [vmem:[%s1669 + $0x38] sm:$0xff]
        %v1676 = vld [vmem:[%s1669 + $0x48] sm:$0xff]
        %v1677 = vld [vmem:[%s1669 + $0x50] sm:$0xff]
        %v1678 = vld [vmem:[%s1669 + $0x60] sm:$0xff]
        %v1679 = vld [vmem:[%s1669 + $0x68] sm:$0xff]
        %v1680 = vld [vmem:[%s1669 + $0x78] sm:$0xff]
        %v1681 = vld [vmem:[%s1669 + $0x80] sm:$0xff]
        %v1682 = vld [vmem:[%s1669 + $0x90] sm:$0xff]
        %v1683 = vld [vmem:[%s1669 + $0x98] sm:$0xff]
        %v1684 = vld [vmem:[%s1669 + $0xa8] sm:$0xff]
        %v1685 = vld [vmem:[%s1669 + $0xb0] sm:$0xff]
        %v1686 = vld [vmem:[%s1669 + $0xc0] sm:$0xff]
        %v1687 = vld [vmem:[%s1669 + $0xc8] sm:$0xff]
        %v1688 = vld [vmem:[%s1669 + $0xd8] sm:$0xff]
        %v1689 = vld [vmem:[%s1669 + $0xe0] sm:$0xff]
        %v1690 = vld [vmem:[%s1669 + $0xf0] sm:$0xff]
        %v1691 = vld [vmem:[%s1669 + $0xf8] sm:$0xff]
        %v1692 = vld [vmem:[%s1669 + $0x108] sm:$0xff]
        %v1693 = vld [vmem:[%s1669 + $0x110] sm:$0xff]
        %v1694 = vld [vmem:[%s1669 + $0x120] sm:$0xff]
        %v1695 = vld [vmem:[%s1669 + $0x128] sm:$0xff]
        %v1696 = vld [vmem:[%s1669 + $0x138] sm:$0xff]
        %v1697 = vld [vmem:[%s1669 + $0x140] sm:$0xff]
        %v1698 = vld [vmem:[%s1669 + $0x150] sm:$0xff]
        %v1699 = vld [vmem:[%s1669 + $0x158] sm:$0xff]
        %v1700 = vld [vmem:[%s1669 + $0x168] sm:$0xff]
        %v1701 = vld [vmem:[%s1669 + $0x170] sm:$0xff]
        %s1702 = scalar_lea.vmem [#allocation8], 384
        %v1703 = vld [vmem:[%s1702] sm:$0xff]
        %v1704 = vld [vmem:[%s1702 + $0x8] sm:$0xff]
        %v1705 = vld [vmem:[%s1702 + $0x10] sm:$0xff]
        %v1706 = vld [vmem:[%s1702 + $0x18] sm:$0xff]
        %v1707 = vld [vmem:[%s1702 + $0x20] sm:$0xff]
        %v1708 = vld [vmem:[%s1702 + $0x28] sm:$0xff]
        %v1709 = vld [vmem:[%s1702 + $0x30] sm:$0xff]
        %v1710 = vld [vmem:[%s1702 + $0x38] sm:$0xff]
        %v1711 = vld [vmem:[%s1702 + $0x40] sm:$0xff]
        %v1712 = vld [vmem:[%s1702 + $0x48] sm:$0xff]
        %v1713 = vld [vmem:[%s1702 + $0x50] sm:$0xff]
        %v1714 = vld [vmem:[%s1702 + $0x58] sm:$0xff]
        %v1715 = vld [vmem:[%s1702 + $0x60] sm:$0xff]
        %v1716 = vld [vmem:[%s1702 + $0x68] sm:$0xff]
        %v1717 = vld [vmem:[%s1702 + $0x70] sm:$0xff]
        %v1718 = vld [vmem:[%s1702 + $0x78] sm:$0xff]
        %1719 = vmatprep.subr.mxu0 0.0
        %1720 = vmatpush1.msra.mxu0 %v1703
        %1721 = vmatprep.subr.mxu0 0.0
        %1722 = vmatpush1.msra.mxu0 %v1704
        %1723 = vmatprep.subr.mxu0 0.0
        %1724 = vmatpush1.msra.mxu0 %v1705
        %1725 = vmatprep.subr.mxu0 0.0
        %1726 = vmatpush1.msra.mxu0 %v1706
        %1727 = vmatprep.subr.mxu0 0.0
        %1728 = vmatpush1.msra.mxu0 %v1707
        %1729 = vmatprep.subr.mxu0 0.0
        %1730 = vmatpush1.msra.mxu0 %v1708
        %1731 = vmatprep.subr.mxu0 0.0
        %1732 = vmatpush1.msra.mxu0 %v1709
        %1733 = vmatprep.subr.mxu0 0.0
        %1734 = vmatpush1.msra.mxu0 %v1710
        %1735 = vmatprep.subr.mxu0 0.0
        %1736 = vmatpush1.msra.mxu0 %v1711
        %1737 = vmatprep.subr.mxu0 0.0
        %1738 = vmatpush1.msra.mxu0 %v1712
        %1739 = vmatprep.subr.mxu0 0.0
        %1740 = vmatpush1.msra.mxu0 %v1713
        %1741 = vmatprep.subr.mxu0 0.0
        %1742 = vmatpush1.msra.mxu0 %v1714
        %1743 = vmatprep.subr.mxu0 0.0
        %1744 = vmatpush1.msra.mxu0 %v1715
        %1745 = vmatprep.subr.mxu0 0.0
        %1746 = vmatpush1.msra.mxu0 %v1716
        %1747 = vmatprep.subr.mxu0 0.0
        %1748 = vmatpush1.msra.mxu0 %v1717
        %1749 = vmatprep.subr.mxu0 0.0
        %1750 = vmatpush1.msra.mxu0 %v1718
        %1751 = vmatprep.subr.mxu0 0.0
        %1752 = vmatpush1.msra.mxu0 0.0
        %1753 = vmatprep.subr.mxu0 0.0
        %1754 = vmatpush1.msra.mxu0 0.0
        %1755 = vmatprep.subr.mxu0 0.0
        %1756 = vmatpush1.msra.mxu0 0.0
        %1757 = vmatprep.subr.mxu0 0.0
        %1758 = vmatpush1.msra.mxu0 0.0
        %1759 = vmatprep.subr.mxu0 0.0
        %1760 = vmatpush1.msra.mxu0 0.0
        %1761 = vmatprep.subr.mxu0 0.0
        %1762 = vmatpush1.msra.mxu0 0.0
        %1763 = vmatprep.subr.mxu0 0.0
        %1764 = vmatpush1.msra.mxu0 0.0
        %1765 = vmatprep.subr.mxu0 0.0
        %1766 = vmatpush1.msra.mxu0 0.0
        %1767 = vmatprep.subr.mxu0 0.0
        %1768 = vmatpush1.msra.mxu0 0.0
        %1769 = vmatprep.subr.mxu0 0.0
        %1770 = vmatpush1.msra.mxu0 0.0
        %1771 = vmatprep.subr.mxu0 0.0
        %1772 = vmatpush1.msra.mxu0 0.0
        %1773 = vmatprep.subr.mxu0 0.0
        %1774 = vmatpush1.msra.mxu0 0.0
        %1775 = vmatprep.subr.mxu0 0.0
        %1776 = vmatpush1.msra.mxu0 0.0
        %1777 = vmatprep.subr.mxu0 0.0
        %1778 = vmatpush1.msra.mxu0 0.0
        %1779 = vmatprep.subr.mxu0 0.0
        %1780 = vmatpush1.msra.mxu0 0.0
        %1781 = vmatprep.subr.mxu0 0.0
        %1782 = vmatpush1.msra.mxu0 0.0
        %1783 = vmatprep.mubr.f32.mxu0 0.0
        %1784 = vmatmul.mubr.f32.gmra.mrb[0].mxu0 %v1670
        %v1785 = vpop.f32.mrb[0].mxu0
        %v1786 = vadd.f32 0.0, %v1785
        %v1787 = vpop.f32.mrb[0].mxu0
        %1788 = vmatprep.mubr.f32.mxu0 0.0
        %1789 = vmatmul.mubr.f32.gmra.mrb[0].mxu0 %v1671
        %v1790 = vpop.f32.mrb[0].mxu0
        %v1791 = vadd.f32 0.0, %v1790
        %v1792 = vpop.f32.mrb[0].mxu0
        %1793 = vmatprep.mubr.f32.mxu0 0.0
        %1794 = vmatmul.mubr.f32.gmra.mrb[0].mxu0 %v1672
        %v1795 = vpop.f32.mrb[0].mxu0
        %v1796 = vadd.f32 0.0, %v1795
        %v1797 = vpop.f32.mrb[0].mxu0
        %1798 = vmatprep.mubr.f32.mxu0 0.0
        %1799 = vmatmul.mubr.f32.gmra.mrb[0].mxu0 %v1673
        %v1800 = vpop.f32.mrb[0].mxu0
        %v1801 = vadd.f32 0.0, %v1800
        %v1802 = vpop.f32.mrb[0].mxu0
        %1803 = vmatprep.mubr.f32.mxu0 0.0
        %1804 = vmatmul.mubr.f32.gmra.mrb[0].mxu0 %v1674
        %v1805 = vpop.f32.mrb[0].mxu0
        %v1806 = vadd.f32 0.0, %v1805
        %v1807 = vpop.f32.mrb[0].mxu0
        %1808 = vmatprep.mubr.f32.mxu0 0.0
        %1809 = vmatmul.mubr.f32.gmra.mrb[0].mxu0 %v1675
        %v1810 = vpop.f32.mrb[0].mxu0
        %v1811 = vadd.f32 0.0, %v1810
        %v1812 = vpop.f32.mrb[0].mxu0
        %1813 = vmatprep.mubr.f32.mxu0 0.0
        %1814 = vmatmul.mubr.f32.gmra.mrb[0].mxu0 %v1676
        %v1815 = vpop.f32.mrb[0].mxu0
        %v1816 = vadd.f32 0.0, %v1815
        %v1817 = vpop.f32.mrb[0].mxu0
        %1818 = vmatprep.mubr.f32.mxu0 0.0
        %1819 = vmatmul.mubr.f32.gmra.mrb[0].mxu0 %v1677
        %v1820 = vpop.f32.mrb[0].mxu0
        %v1821 = vadd.f32 0.0, %v1820
        %v1822 = vpop.f32.mrb[0].mxu0
        %1823 = vmatprep.mubr.f32.mxu0 0.0
        %1824 = vmatmul.mubr.f32.gmra.mrb[0].mxu0 %v1678
        %v1825 = vpop.f32.mrb[0].mxu0
        %v1826 = vadd.f32 0.0, %v1825
        %v1827 = vpop.f32.mrb[0].mxu0
        %1828 = vmatprep.mubr.f32.mxu0 0.0
        %1829 = vmatmul.mubr.f32.gmra.mrb[0].mxu0 %v1679
        %v1830 = vpop.f32.mrb[0].mxu0
        %v1831 = vadd.f32 0.0, %v1830
        %v1832 = vpop.f32.mrb[0].mxu0
        %1833 = vmatprep.mubr.f32.mxu0 0.0
        %1834 = vmatmul.mubr.f32.gmra.mrb[0].mxu0 %v1680
        %v1835 = vpop.f32.mrb[0].mxu0
        %v1836 = vadd.f32 0.0, %v1835
        %v1837 = vpop.f32.mrb[0].mxu0
        %1838 = vmatprep.mubr.f32.mxu0 0.0
        %1839 = vmatmul.mubr.f32.gmra.mrb[0].mxu0 %v1681
        %v1840 = vpop.f32.mrb[0].mxu0
        %v1841 = vadd.f32 0.0, %v1840
        %v1842 = vpop.f32.mrb[0].mxu0
        %1843 = vmatprep.mubr.f32.mxu0 0.0
        %1844 = vmatmul.mubr.f32.gmra.mrb[0].mxu0 %v1682
        %v1845 = vpop.f32.mrb[0].mxu0
        %v1846 = vadd.f32 0.0, %v1845
        %v1847 = vpop.f32.mrb[0].mxu0
        %1848 = vmatprep.mubr.f32.mxu0 0.0
        %1849 = vmatmul.mubr.f32.gmra.mrb[0].mxu0 %v1683
        %v1850 = vpop.f32.mrb[0].mxu0
        %v1851 = vadd.f32 0.0, %v1850
        %v1852 = vpop.f32.mrb[0].mxu0
        %1853 = vmatprep.mubr.f32.mxu0 0.0
        %1854 = vmatmul.mubr.f32.gmra.mrb[0].mxu0 %v1684
        %v1855 = vpop.f32.mrb[0].mxu0
        %v1856 = vadd.f32 0.0, %v1855
        %v1857 = vpop.f32.mrb[0].mxu0
        %1858 = vmatprep.mubr.f32.mxu0 0.0
        %1859 = vmatmul.mubr.f32.gmra.mrb[0].mxu0 %v1685
        %v1860 = vpop.f32.mrb[0].mxu0
        %v1861 = vadd.f32 0.0, %v1860
        %v1862 = vpop.f32.mrb[0].mxu0
        %1863 = vmatprep.mubr.f32.mxu0 0.0
        %1864 = vmatmul.mubr.f32.gmra.mrb[0].mxu0 %v1686
        %v1865 = vpop.f32.mrb[0].mxu0
        %v1866 = vadd.f32 0.0, %v1865
        %v1867 = vpop.f32.mrb[0].mxu0
        %1868 = vmatprep.mubr.f32.mxu0 0.0
        %1869 = vmatmul.mubr.f32.gmra.mrb[0].mxu0 %v1687
        %v1870 = vpop.f32.mrb[0].mxu0
        %v1871 = vadd.f32 0.0, %v1870
        %v1872 = vpop.f32.mrb[0].mxu0
        %1873 = vmatprep.mubr.f32.mxu0 0.0
        %1874 = vmatmul.mubr.f32.gmra.mrb[0].mxu0 %v1688
        %v1875 = vpop.f32.mrb[0].mxu0
        %v1876 = vadd.f32 0.0, %v1875
        %v1877 = vpop.f32.mrb[0].mxu0
        %1878 = vmatprep.mubr.f32.mxu0 0.0
        %1879 = vmatmul.mubr.f32.gmra.mrb[0].mxu0 %v1689
        %v1880 = vpop.f32.mrb[0].mxu0
        %v1881 = vadd.f32 0.0, %v1880
        %v1882 = vpop.f32.mrb[0].mxu0
        %1883 = vmatprep.mubr.f32.mxu0 0.0
        %1884 = vmatmul.mubr.f32.gmra.mrb[0].mxu0 %v1690
        %v1885 = vpop.f32.mrb[0].mxu0
        %v1886 = vadd.f32 0.0, %v1885
        %v1887 = vpop.f32.mrb[0].mxu0
        %1888 = vmatprep.mubr.f32.mxu0 0.0
        %1889 = vmatmul.mubr.f32.gmra.mrb[0].mxu0 %v1691
        %v1890 = vpop.f32.mrb[0].mxu0
        %v1891 = vadd.f32 0.0, %v1890
        %v1892 = vpop.f32.mrb[0].mxu0
        %1893 = vmatprep.mubr.f32.mxu0 0.0
        %1894 = vmatmul.mubr.f32.gmra.mrb[0].mxu0 %v1692
        %v1895 = vpop.f32.mrb[0].mxu0
        %v1896 = vadd.f32 0.0, %v1895
        %v1897 = vpop.f32.mrb[0].mxu0
        %1898 = vmatprep.mubr.f32.mxu0 0.0
        %1899 = vmatmul.mubr.f32.gmra.mrb[0].mxu0 %v1693
        %v1900 = vpop.f32.mrb[0].mxu0
        %v1901 = vadd.f32 0.0, %v1900
        %v1902 = vpop.f32.mrb[0].mxu0
        %1903 = vmatprep.mubr.f32.mxu0 0.0
        %1904 = vmatmul.mubr.f32.gmra.mrb[0].mxu0 %v1694
        %v1905 = vpop.f32.mrb[0].mxu0
        %v1906 = vadd.f32 0.0, %v1905
        %v1907 = vpop.f32.mrb[0].mxu0
        %1908 = vmatprep.mubr.f32.mxu0 0.0
        %1909 = vmatmul.mubr.f32.gmra.mrb[0].mxu0 %v1695
        %v1910 = vpop.f32.mrb[0].mxu0
        %v1911 = vadd.f32 0.0, %v1910
        %v1912 = vpop.f32.mrb[0].mxu0
        %1913 = vmatprep.mubr.f32.mxu0 0.0
        %1914 = vmatmul.mubr.f32.gmra.mrb[0].mxu0 %v1696
        %v1915 = vpop.f32.mrb[0].mxu0
        %v1916 = vadd.f32 0.0, %v1915
        %v1917 = vpop.f32.mrb[0].mxu0
        %1918 = vmatprep.mubr.f32.mxu0 0.0
        %1919 = vmatmul.mubr.f32.gmra.mrb[0].mxu0 %v1697
        %v1920 = vpop.f32.mrb[0].mxu0
        %v1921 = vadd.f32 0.0, %v1920
        %v1922 = vpop.f32.mrb[0].mxu0
        %1923 = vmatprep.mubr.f32.mxu0 0.0
        %1924 = vmatmul.mubr.f32.gmra.mrb[0].mxu0 %v1698
        %v1925 = vpop.f32.mrb[0].mxu0
        %v1926 = vadd.f32 0.0, %v1925
        %v1927 = vpop.f32.mrb[0].mxu0
        %1928 = vmatprep.mubr.f32.mxu0 0.0
        %1929 = vmatmul.mubr.f32.gmra.mrb[0].mxu0 %v1699
        %v1930 = vpop.f32.mrb[0].mxu0
        %v1931 = vadd.f32 0.0, %v1930
        %v1932 = vpop.f32.mrb[0].mxu0
        %1933 = vmatprep.mubr.f32.mxu0 0.0
        %1934 = vmatmul.mubr.f32.gmra.mrb[0].mxu0 %v1700
        %v1935 = vpop.f32.mrb[0].mxu0
        %v1936 = vadd.f32 0.0, %v1935
        %v1937 = vpop.f32.mrb[0].mxu0
        %1938 = vmatprep.mubr.f32.mxu0 0.0
        %1939 = vmatmul.mubr.f32.gmra.mrb[0].mxu0 %v1701
        %v1940 = vpop.f32.mrb[0].mxu0
        %v1941 = vadd.f32 0.0, %v1940
        %v1942 = vpop.f32.mrb[0].mxu0
        %1943 = vdwg.mxu0
        %v1944 = vadd.f32 %v1637, %v1786
        %v1945 = vadd.f32 %v1638, %v1791
        %v1946 = vadd.f32 %v1639, %v1796
        %v1947 = vadd.f32 %v1640, %v1801
        %v1948 = vadd.f32 %v1641, %v1806
        %v1949 = vadd.f32 %v1642, %v1811
        %v1950 = vadd.f32 %v1643, %v1816
        %v1951 = vadd.f32 %v1644, %v1821
        %v1952 = vadd.f32 %v1645, %v1826
        %v1953 = vadd.f32 %v1646, %v1831
        %v1954 = vadd.f32 %v1647, %v1836
        %v1955 = vadd.f32 %v1648, %v1841
        %v1956 = vadd.f32 %v1649, %v1846
        %v1957 = vadd.f32 %v1650, %v1851
        %v1958 = vadd.f32 %v1651, %v1856
        %v1959 = vadd.f32 %v1652, %v1861
        %v1960 = vadd.f32 %v1653, %v1866
        %v1961 = vadd.f32 %v1654, %v1871
        %v1962 = vadd.f32 %v1655, %v1876
        %v1963 = vadd.f32 %v1656, %v1881
        %v1964 = vadd.f32 %v1657, %v1886
        %v1965 = vadd.f32 %v1658, %v1891
        %v1966 = vadd.f32 %v1659, %v1896
        %v1967 = vadd.f32 %v1660, %v1901
        %v1968 = vadd.f32 %v1661, %v1906
        %v1969 = vadd.f32 %v1662, %v1911
        %v1970 = vadd.f32 %v1663, %v1916
        %v1971 = vadd.f32 %v1664, %v1921
        %v1972 = vadd.f32 %v1665, %v1926
        %v1973 = vadd.f32 %v1666, %v1931
        %v1974 = vadd.f32 %v1667, %v1936
        %v1975 = vadd.f32 %v1668, %v1941
        %v1976 = vld [vmem:[%s1669 + $0x1] sm:$0xff]
        %v1977 = vld [vmem:[%s1669 + $0x9] sm:$0xff]
        %v1978 = vld [vmem:[%s1669 + $0x19] sm:$0xff]
        %v1979 = vld [vmem:[%s1669 + $0x21] sm:$0xff]
        %v1980 = vld [vmem:[%s1669 + $0x31] sm:$0xff]
        %v1981 = vld [vmem:[%s1669 + $0x39] sm:$0xff]
        %v1982 = vld [vmem:[%s1669 + $0x49] sm:$0xff]
        %v1983 = vld [vmem:[%s1669 + $0x51] sm:$0xff]
        %v1984 = vld [vmem:[%s1669 + $0x61] sm:$0xff]
        %v1985 = vld [vmem:[%s1669 + $0x69] sm:$0xff]
        %v1986 = vld [vmem:[%s1669 + $0x79] sm:$0xff]
        %v1987 = vld [vmem:[%s1669 + $0x81] sm:$0xff]
        %v1988 = vld [vmem:[%s1669 + $0x91] sm:$0xff]
        %v1989 = vld [vmem:[%s1669 + $0x99] sm:$0xff]
        %v1990 = vld [vmem:[%s1669 + $0xa9] sm:$0xff]
        %v1991 = vld [vmem:[%s1669 + $0xb1] sm:$0xff]
        %v1992 = vld [vmem:[%s1669 + $0xc1] sm:$0xff]
        %v1993 = vld [vmem:[%s1669 + $0xc9] sm:$0xff]
        %v1994 = vld [vmem:[%s1669 + $0xd9] sm:$0xff]
        %v1995 = vld [vmem:[%s1669 + $0xe1] sm:$0xff]
        %v1996 = vld [vmem:[%s1669 + $0xf1] sm:$0xff]
        %v1997 = vld [vmem:[%s1669 + $0xf9] sm:$0xff]
        %v1998 = vld [vmem:[%s1669 + $0x109] sm:$0xff]
        %v1999 = vld [vmem:[%s1669 + $0x111] sm:$0xff]
        %v2000 = vld [vmem:[%s1669 + $0x121] sm:$0xff]
        %v2001 = vld [vmem:[%s1669 + $0x129] sm:$0xff]
        %v2002 = vld [vmem:[%s1669 + $0x139] sm:$0xff]
        %v2003 = vld [vmem:[%s1669 + $0x141] sm:$0xff]
        %v2004 = vld [vmem:[%s1669 + $0x151] sm:$0xff]
        %v2005 = vld [vmem:[%s1669 + $0x159] sm:$0xff]
        %v2006 = vld [vmem:[%s1669 + $0x169] sm:$0xff]
        %v2007 = vld [vmem:[%s1669 + $0x171] sm:$0xff]
        %s2008 = scalar_lea.vmem [#allocation8], 512
        %v2009 = vld [vmem:[%s2008] sm:$0xff]
        %v2010 = vld [vmem:[%s2008 + $0x8] sm:$0xff]
        %v2011 = vld [vmem:[%s2008 + $0x10] sm:$0xff]
        %v2012 = vld [vmem:[%s2008 + $0x18] sm:$0xff]
        %v2013 = vld [vmem:[%s2008 + $0x20] sm:$0xff]
        %v2014 = vld [vmem:[%s2008 + $0x28] sm:$0xff]
        %v2015 = vld [vmem:[%s2008 + $0x30] sm:$0xff]
        %v2016 = vld [vmem:[%s2008 + $0x38] sm:$0xff]
        %v2017 = vld [vmem:[%s2008 + $0x40] sm:$0xff]
        %v2018 = vld [vmem:[%s2008 + $0x48] sm:$0xff]
        %v2019 = vld [vmem:[%s2008 + $0x50] sm:$0xff]
        %v2020 = vld [vmem:[%s2008 + $0x58] sm:$0xff]
        %v2021 = vld [vmem:[%s2008 + $0x60] sm:$0xff]
        %v2022 = vld [vmem:[%s2008 + $0x68] sm:$0xff]
        %v2023 = vld [vmem:[%s2008 + $0x70] sm:$0xff]
        %v2024 = vld [vmem:[%s2008 + $0x78] sm:$0xff]
        %2025 = vmatprep.subr.mxu0 0.0
        %2026 = vmatpush1.msra.mxu0 %v2009
        %2027 = vmatprep.subr.mxu0 0.0
        %2028 = vmatpush1.msra.mxu0 %v2010
        %2029 = vmatprep.subr.mxu0 0.0
        %2030 = vmatpush1.msra.mxu0 %v2011
        %2031 = vmatprep.subr.mxu0 0.0
        %2032 = vmatpush1.msra.mxu0 %v2012
        %2033 = vmatprep.subr.mxu0 0.0
        %2034 = vmatpush1.msra.mxu0 %v2013
        %2035 = vmatprep.subr.mxu0 0.0
        %2036 = vmatpush1.msra.mxu0 %v2014
        %2037 = vmatprep.subr.mxu0 0.0
        %2038 = vmatpush1.msra.mxu0 %v2015
        %2039 = vmatprep.subr.mxu0 0.0
        %2040 = vmatpush1.msra.mxu0 %v2016
        %2041 = vmatprep.subr.mxu0 0.0
        %2042 = vmatpush1.msra.mxu0 %v2017
        %2043 = vmatprep.subr.mxu0 0.0
        %2044 = vmatpush1.msra.mxu0 %v2018
        %2045 = vmatprep.subr.mxu0 0.0
        %2046 = vmatpush1.msra.mxu0 %v2019
        %2047 = vmatprep.subr.mxu0 0.0
        %2048 = vmatpush1.msra.mxu0 %v2020
        %2049 = vmatprep.subr.mxu0 0.0
        %2050 = vmatpush1.msra.mxu0 %v2021
        %2051 = vmatprep.subr.mxu0 0.0
        %2052 = vmatpush1.msra.mxu0 %v2022
        %2053 = vmatprep.subr.mxu0 0.0
        %2054 = vmatpush1.msra.mxu0 %v2023
        %2055 = vmatprep.subr.mxu0 0.0
        %2056 = vmatpush1.msra.mxu0 %v2024
        %2057 = vmatprep.subr.mxu0 0.0
        %2058 = vmatpush1.msra.mxu0 0.0
        %2059 = vmatprep.subr.mxu0 0.0
        %2060 = vmatpush1.msra.mxu0 0.0
        %2061 = vmatprep.subr.mxu0 0.0
        %2062 = vmatpush1.msra.mxu0 0.0
        %2063 = vmatprep.subr.mxu0 0.0
        %2064 = vmatpush1.msra.mxu0 0.0
        %2065 = vmatprep.subr.mxu0 0.0
        %2066 = vmatpush1.msra.mxu0 0.0
        %2067 = vmatprep.subr.mxu0 0.0
        %2068 = vmatpush1.msra.mxu0 0.0
        %2069 = vmatprep.subr.mxu0 0.0
        %2070 = vmatpush1.msra.mxu0 0.0
        %2071 = vmatprep.subr.mxu0 0.0
        %2072 = vmatpush1.msra.mxu0 0.0
        %2073 = vmatprep.subr.mxu0 0.0
        %2074 = vmatpush1.msra.mxu0 0.0
        %2075 = vmatprep.subr.mxu0 0.0
        %2076 = vmatpush1.msra.mxu0 0.0
        %2077 = vmatprep.subr.mxu0 0.0
        %2078 = vmatpush1.msra.mxu0 0.0
        %2079 = vmatprep.subr.mxu0 0.0
        %2080 = vmatpush1.msra.mxu0 0.0
        %2081 = vmatprep.subr.mxu0 0.0
        %2082 = vmatpush1.msra.mxu0 0.0
        %2083 = vmatprep.subr.mxu0 0.0
        %2084 = vmatpush1.msra.mxu0 0.0
        %2085 = vmatprep.subr.mxu0 0.0
        %2086 = vmatpush1.msra.mxu0 0.0
        %2087 = vmatprep.subr.mxu0 0.0
        %2088 = vmatpush1.msra.mxu0 0.0
        %2089 = vmatprep.mubr.f32.mxu0 0.0
        %2090 = vmatmul.mubr.f32.gmra.mrb[0].mxu0 %v1976
        %v2091 = vpop.f32.mrb[0].mxu0
        %v2092 = vadd.f32 0.0, %v2091
        %v2093 = vpop.f32.mrb[0].mxu0
        %2094 = vmatprep.mubr.f32.mxu0 0.0
        %2095 = vmatmul.mubr.f32.gmra.mrb[0].mxu0 %v1977
        %v2096 = vpop.f32.mrb[0].mxu0
        %v2097 = vadd.f32 0.0, %v2096
        %v2098 = vpop.f32.mrb[0].mxu0
        %2099 = vmatprep.mubr.f32.mxu0 0.0
        %2100 = vmatmul.mubr.f32.gmra.mrb[0].mxu0 %v1978
        %v2101 = vpop.f32.mrb[0].mxu0
        %v2102 = vadd.f32 0.0, %v2101
        %v2103 = vpop.f32.mrb[0].mxu0
        %2104 = vmatprep.mubr.f32.mxu0 0.0
        %2105 = vmatmul.mubr.f32.gmra.mrb[0].mxu0 %v1979
        %v2106 = vpop.f32.mrb[0].mxu0
        %v2107 = vadd.f32 0.0, %v2106
        %v2108 = vpop.f32.mrb[0].mxu0
        %2109 = vmatprep.mubr.f32.mxu0 0.0
        %2110 = vmatmul.mubr.f32.gmra.mrb[0].mxu0 %v1980
        %v2111 = vpop.f32.mrb[0].mxu0
        %v2112 = vadd.f32 0.0, %v2111
        %v2113 = vpop.f32.mrb[0].mxu0
        %2114 = vmatprep.mubr.f32.mxu0 0.0
        %2115 = vmatmul.mubr.f32.gmra.mrb[0].mxu0 %v1981
        %v2116 = vpop.f32.mrb[0].mxu0
        %v2117 = vadd.f32 0.0, %v2116
        %v2118 = vpop.f32.mrb[0].mxu0
        %2119 = vmatprep.mubr.f32.mxu0 0.0
        %2120 = vmatmul.mubr.f32.gmra.mrb[0].mxu0 %v1982
        %v2121 = vpop.f32.mrb[0].mxu0
        %v2122 = vadd.f32 0.0, %v2121
        %v2123 = vpop.f32.mrb[0].mxu0
        %2124 = vmatprep.mubr.f32.mxu0 0.0
        %2125 = vmatmul.mubr.f32.gmra.mrb[0].mxu0 %v1983
        %v2126 = vpop.f32.mrb[0].mxu0
        %v2127 = vadd.f32 0.0, %v2126
        %v2128 = vpop.f32.mrb[0].mxu0
        %2129 = vmatprep.mubr.f32.mxu0 0.0
        %2130 = vmatmul.mubr.f32.gmra.mrb[0].mxu0 %v1984
        %v2131 = vpop.f32.mrb[0].mxu0
        %v2132 = vadd.f32 0.0, %v2131
        %v2133 = vpop.f32.mrb[0].mxu0
        %2134 = vmatprep.mubr.f32.mxu0 0.0
        %2135 = vmatmul.mubr.f32.gmra.mrb[0].mxu0 %v1985
        %v2136 = vpop.f32.mrb[0].mxu0
        %v2137 = vadd.f32 0.0, %v2136
        %v2138 = vpop.f32.mrb[0].mxu0
        %2139 = vmatprep.mubr.f32.mxu0 0.0
        %2140 = vmatmul.mubr.f32.gmra.mrb[0].mxu0 %v1986
        %v2141 = vpop.f32.mrb[0].mxu0
        %v2142 = vadd.f32 0.0, %v2141
        %v2143 = vpop.f32.mrb[0].mxu0
        %2144 = vmatprep.mubr.f32.mxu0 0.0
        %2145 = vmatmul.mubr.f32.gmra.mrb[0].mxu0 %v1987
        %v2146 = vpop.f32.mrb[0].mxu0
        %v2147 = vadd.f32 0.0, %v2146
        %v2148 = vpop.f32.mrb[0].mxu0
        %2149 = vmatprep.mubr.f32.mxu0 0.0
        %2150 = vmatmul.mubr.f32.gmra.mrb[0].mxu0 %v1988
        %v2151 = vpop.f32.mrb[0].mxu0
        %v2152 = vadd.f32 0.0, %v2151
        %v2153 = vpop.f32.mrb[0].mxu0
        %2154 = vmatprep.mubr.f32.mxu0 0.0
        %2155 = vmatmul.mubr.f32.gmra.mrb[0].mxu0 %v1989
        %v2156 = vpop.f32.mrb[0].mxu0
        %v2157 = vadd.f32 0.0, %v2156
        %v2158 = vpop.f32.mrb[0].mxu0
        %2159 = vmatprep.mubr.f32.mxu0 0.0
        %2160 = vmatmul.mubr.f32.gmra.mrb[0].mxu0 %v1990
        %v2161 = vpop.f32.mrb[0].mxu0
        %v2162 = vadd.f32 0.0, %v2161
        %v2163 = vpop.f32.mrb[0].mxu0
        %2164 = vmatprep.mubr.f32.mxu0 0.0
        %2165 = vmatmul.mubr.f32.gmra.mrb[0].mxu0 %v1991
        %v2166 = vpop.f32.mrb[0].mxu0
        %v2167 = vadd.f32 0.0, %v2166
        %v2168 = vpop.f32.mrb[0].mxu0
        %2169 = vmatprep.mubr.f32.mxu0 0.0
        %2170 = vmatmul.mubr.f32.gmra.mrb[0].mxu0 %v1992
        %v2171 = vpop.f32.mrb[0].mxu0
        %v2172 = vadd.f32 0.0, %v2171
        %v2173 = vpop.f32.mrb[0].mxu0
        %2174 = vmatprep.mubr.f32.mxu0 0.0
        %2175 = vmatmul.mubr.f32.gmra.mrb[0].mxu0 %v1993
        %v2176 = vpop.f32.mrb[0].mxu0
        %v2177 = vadd.f32 0.0, %v2176
        %v2178 = vpop.f32.mrb[0].mxu0
        %2179 = vmatprep.mubr.f32.mxu0 0.0
        %2180 = vmatmul.mubr.f32.gmra.mrb[0].mxu0 %v1994
        %v2181 = vpop.f32.mrb[0].mxu0
        %v2182 = vadd.f32 0.0, %v2181
        %v2183 = vpop.f32.mrb[0].mxu0
        %2184 = vmatprep.mubr.f32.mxu0 0.0
        %2185 = vmatmul.mubr.f32.gmra.mrb[0].mxu0 %v1995
        %v2186 = vpop.f32.mrb[0].mxu0
        %v2187 = vadd.f32 0.0, %v2186
        %v2188 = vpop.f32.mrb[0].mxu0
        %2189 = vmatprep.mubr.f32.mxu0 0.0
        %2190 = vmatmul.mubr.f32.gmra.mrb[0].mxu0 %v1996
        %v2191 = vpop.f32.mrb[0].mxu0
        %v2192 = vadd.f32 0.0, %v2191
        %v2193 = vpop.f32.mrb[0].mxu0
        %2194 = vmatprep.mubr.f32.mxu0 0.0
        %2195 = vmatmul.mubr.f32.gmra.mrb[0].mxu0 %v1997
        %v2196 = vpop.f32.mrb[0].mxu0
        %v2197 = vadd.f32 0.0, %v2196
        %v2198 = vpop.f32.mrb[0].mxu0
        %2199 = vmatprep.mubr.f32.mxu0 0.0
        %2200 = vmatmul.mubr.f32.gmra.mrb[0].mxu0 %v1998
        %v2201 = vpop.f32.mrb[0].mxu0
        %v2202 = vadd.f32 0.0, %v2201
        %v2203 = vpop.f32.mrb[0].mxu0
        %2204 = vmatprep.mubr.f32.mxu0 0.0
        %2205 = vmatmul.mubr.f32.gmra.mrb[0].mxu0 %v1999
        %v2206 = vpop.f32.mrb[0].mxu0
        %v2207 = vadd.f32 0.0, %v2206
        %v2208 = vpop.f32.mrb[0].mxu0
        %2209 = vmatprep.mubr.f32.mxu0 0.0
        %2210 = vmatmul.mubr.f32.gmra.mrb[0].mxu0 %v2000
        %v2211 = vpop.f32.mrb[0].mxu0
        %v2212 = vadd.f32 0.0, %v2211
        %v2213 = vpop.f32.mrb[0].mxu0
        %2214 = vmatprep.mubr.f32.mxu0 0.0
        %2215 = vmatmul.mubr.f32.gmra.mrb[0].mxu0 %v2001
        %v2216 = vpop.f32.mrb[0].mxu0
        %v2217 = vadd.f32 0.0, %v2216
        %v2218 = vpop.f32.mrb[0].mxu0
        %2219 = vmatprep.mubr.f32.mxu0 0.0
        %2220 = vmatmul.mubr.f32.gmra.mrb[0].mxu0 %v2002
        %v2221 = vpop.f32.mrb[0].mxu0
        %v2222 = vadd.f32 0.0, %v2221
        %v2223 = vpop.f32.mrb[0].mxu0
        %2224 = vmatprep.mubr.f32.mxu0 0.0
        %2225 = vmatmul.mubr.f32.gmra.mrb[0].mxu0 %v2003
        %v2226 = vpop.f32.mrb[0].mxu0
        %v2227 = vadd.f32 0.0, %v2226
        %v2228 = vpop.f32.mrb[0].mxu0
        %2229 = vmatprep.mubr.f32.mxu0 0.0
        %2230 = vmatmul.mubr.f32.gmra.mrb[0].mxu0 %v2004
        %v2231 = vpop.f32.mrb[0].mxu0
        %v2232 = vadd.f32 0.0, %v2231
        %v2233 = vpop.f32.mrb[0].mxu0
        %2234 = vmatprep.mubr.f32.mxu0 0.0
        %2235 = vmatmul.mubr.f32.gmra.mrb[0].mxu0 %v2005
        %v2236 = vpop.f32.mrb[0].mxu0
        %v2237 = vadd.f32 0.0, %v2236
        %v2238 = vpop.f32.mrb[0].mxu0
        %2239 = vmatprep.mubr.f32.mxu0 0.0
        %2240 = vmatmul.mubr.f32.gmra.mrb[0].mxu0 %v2006
        %v2241 = vpop.f32.mrb[0].mxu0
        %v2242 = vadd.f32 0.0, %v2241
        %v2243 = vpop.f32.mrb[0].mxu0
        %2244 = vmatprep.mubr.f32.mxu0 0.0
        %2245 = vmatmul.mubr.f32.gmra.mrb[0].mxu0 %v2007
        %v2246 = vpop.f32.mrb[0].mxu0
        %v2247 = vadd.f32 0.0, %v2246
        %v2248 = vpop.f32.mrb[0].mxu0
        %2249 = vdwg.mxu0
        %v2250 = vadd.f32 %v1944, %v2092
        %v2251 = vadd.f32 %v1945, %v2097
        %v2252 = vadd.f32 %v1946, %v2102
        %v2253 = vadd.f32 %v1947, %v2107
        %v2254 = vadd.f32 %v1948, %v2112
        %v2255 = vadd.f32 %v1949, %v2117
        %v2256 = vadd.f32 %v1950, %v2122
        %v2257 = vadd.f32 %v1951, %v2127
        %v2258 = vadd.f32 %v1952, %v2132
        %v2259 = vadd.f32 %v1953, %v2137
        %v2260 = vadd.f32 %v1954, %v2142
        %v2261 = vadd.f32 %v1955, %v2147
        %v2262 = vadd.f32 %v1956, %v2152
        %v2263 = vadd.f32 %v1957, %v2157
        %v2264 = vadd.f32 %v1958, %v2162
        %v2265 = vadd.f32 %v1959, %v2167
        %v2266 = vadd.f32 %v1960, %v2172
        %v2267 = vadd.f32 %v1961, %v2177
        %v2268 = vadd.f32 %v1962, %v2182
        %v2269 = vadd.f32 %v1963, %v2187
        %v2270 = vadd.f32 %v1964, %v2192
        %v2271 = vadd.f32 %v1965, %v2197
        %v2272 = vadd.f32 %v1966, %v2202
        %v2273 = vadd.f32 %v1967, %v2207
        %v2274 = vadd.f32 %v1968, %v2212
        %v2275 = vadd.f32 %v1969, %v2217
        %v2276 = vadd.f32 %v1970, %v2222
        %v2277 = vadd.f32 %v1971, %v2227
        %v2278 = vadd.f32 %v1972, %v2232
        %v2279 = vadd.f32 %v1973, %v2237
        %v2280 = vadd.f32 %v1974, %v2242
        %v2281 = vadd.f32 %v1975, %v2247
        %v2282 = vld [vmem:[%s1669 + $0x2] sm:$0xff]
        %v2283 = vld [vmem:[%s1669 + $0xa] sm:$0xff]
        %v2284 = vld [vmem:[%s1669 + $0x1a] sm:$0xff]
        %v2285 = vld [vmem:[%s1669 + $0x22] sm:$0xff]
        %v2286 = vld [vmem:[%s1669 + $0x32] sm:$0xff]
        %v2287 = vld [vmem:[%s1669 + $0x3a] sm:$0xff]
        %v2288 = vld [vmem:[%s1669 + $0x4a] sm:$0xff]
        %v2289 = vld [vmem:[%s1669 + $0x52] sm:$0xff]
        %v2290 = vld [vmem:[%s1669 + $0x62] sm:$0xff]
        %v2291 = vld [vmem:[%s1669 + $0x6a] sm:$0xff]
        %v2292 = vld [vmem:[%s1669 + $0x7a] sm:$0xff]
        %v2293 = vld [vmem:[%s1669 + $0x82] sm:$0xff]
        %v2294 = vld [vmem:[%s1669 + $0x92] sm:$0xff]
        %v2295 = vld [vmem:[%s1669 + $0x9a] sm:$0xff]
        %v2296 = vld [vmem:[%s1669 + $0xaa] sm:$0xff]
        %v2297 = vld [vmem:[%s1669 + $0xb2] sm:$0xff]
        %v2298 = vld [vmem:[%s1669 + $0xc2] sm:$0xff]
        %v2299 = vld [vmem:[%s1669 + $0xca] sm:$0xff]
        %v2300 = vld [vmem:[%s1669 + $0xda] sm:$0xff]
        %v2301 = vld [vmem:[%s1669 + $0xe2] sm:$0xff]
        %v2302 = vld [vmem:[%s1669 + $0xf2] sm:$0xff]
        %v2303 = vld [vmem:[%s1669 + $0xfa] sm:$0xff]
        %v2304 = vld [vmem:[%s1669 + $0x10a] sm:$0xff]
        %v2305 = vld [vmem:[%s1669 + $0x112] sm:$0xff]
        %v2306 = vld [vmem:[%s1669 + $0x122] sm:$0xff]
        %v2307 = vld [vmem:[%s1669 + $0x12a] sm:$0xff]
        %v2308 = vld [vmem:[%s1669 + $0x13a] sm:$0xff]
        %v2309 = vld [vmem:[%s1669 + $0x142] sm:$0xff]
        %v2310 = vld [vmem:[%s1669 + $0x152] sm:$0xff]
        %v2311 = vld [vmem:[%s1669 + $0x15a] sm:$0xff]
        %v2312 = vld [vmem:[%s1669 + $0x16a] sm:$0xff]
        %v2313 = vld [vmem:[%s1669 + $0x172] sm:$0xff]
        %s2314 = scalar_lea.vmem [#allocation8], 640
        %v2315 = vld [vmem:[%s2314] sm:$0xff]
        %v2316 = vld [vmem:[%s2314 + $0x8] sm:$0xff]
        %v2317 = vld [vmem:[%s2314 + $0x10] sm:$0xff]
        %v2318 = vld [vmem:[%s2314 + $0x18] sm:$0xff]
        %v2319 = vld [vmem:[%s2314 + $0x20] sm:$0xff]
        %v2320 = vld [vmem:[%s2314 + $0x28] sm:$0xff]
        %v2321 = vld [vmem:[%s2314 + $0x30] sm:$0xff]
        %v2322 = vld [vmem:[%s2314 + $0x38] sm:$0xff]
        %v2323 = vld [vmem:[%s2314 + $0x40] sm:$0xff]
        %v2324 = vld [vmem:[%s2314 + $0x48] sm:$0xff]
        %v2325 = vld [vmem:[%s2314 + $0x50] sm:$0xff]
        %v2326 = vld [vmem:[%s2314 + $0x58] sm:$0xff]
        %v2327 = vld [vmem:[%s2314 + $0x60] sm:$0xff]
        %v2328 = vld [vmem:[%s2314 + $0x68] sm:$0xff]
        %v2329 = vld [vmem:[%s2314 + $0x70] sm:$0xff]
        %v2330 = vld [vmem:[%s2314 + $0x78] sm:$0xff]
        %2331 = vmatprep.subr.mxu0 0.0
        %2332 = vmatpush1.msra.mxu0 %v2315
        %2333 = vmatprep.subr.mxu0 0.0
        %2334 = vmatpush1.msra.mxu0 %v2316
        %2335 = vmatprep.subr.mxu0 0.0
        %2336 = vmatpush1.msra.mxu0 %v2317
        %2337 = vmatprep.subr.mxu0 0.0
        %2338 = vmatpush1.msra.mxu0 %v2318
        %2339 = vmatprep.subr.mxu0 0.0
        %2340 = vmatpush1.msra.mxu0 %v2319
        %2341 = vmatprep.subr.mxu0 0.0
        %2342 = vmatpush1.msra.mxu0 %v2320
        %2343 = vmatprep.subr.mxu0 0.0
        %2344 = vmatpush1.msra.mxu0 %v2321
        %2345 = vmatprep.subr.mxu0 0.0
        %2346 = vmatpush1.msra.mxu0 %v2322
        %2347 = vmatprep.subr.mxu0 0.0
        %2348 = vmatpush1.msra.mxu0 %v2323
        %2349 = vmatprep.subr.mxu0 0.0
        %2350 = vmatpush1.msra.mxu0 %v2324
        %2351 = vmatprep.subr.mxu0 0.0
        %2352 = vmatpush1.msra.mxu0 %v2325
        %2353 = vmatprep.subr.mxu0 0.0
        %2354 = vmatpush1.msra.mxu0 %v2326
        %2355 = vmatprep.subr.mxu0 0.0
        %2356 = vmatpush1.msra.mxu0 %v2327
        %2357 = vmatprep.subr.mxu0 0.0
        %2358 = vmatpush1.msra.mxu0 %v2328
        %2359 = vmatprep.subr.mxu0 0.0
        %2360 = vmatpush1.msra.mxu0 %v2329
        %2361 = vmatprep.subr.mxu0 0.0
        %2362 = vmatpush1.msra.mxu0 %v2330
        %2363 = vmatprep.subr.mxu0 0.0
        %2364 = vmatpush1.msra.mxu0 0.0
        %2365 = vmatprep.subr.mxu0 0.0
        %2366 = vmatpush1.msra.mxu0 0.0
        %2367 = vmatprep.subr.mxu0 0.0
        %2368 = vmatpush1.msra.mxu0 0.0
        %2369 = vmatprep.subr.mxu0 0.0
        %2370 = vmatpush1.msra.mxu0 0.0
        %2371 = vmatprep.subr.mxu0 0.0
        %2372 = vmatpush1.msra.mxu0 0.0
        %2373 = vmatprep.subr.mxu0 0.0
        %2374 = vmatpush1.msra.mxu0 0.0
        %2375 = vmatprep.subr.mxu0 0.0
        %2376 = vmatpush1.msra.mxu0 0.0
        %2377 = vmatprep.subr.mxu0 0.0
        %2378 = vmatpush1.msra.mxu0 0.0
        %2379 = vmatprep.subr.mxu0 0.0
        %2380 = vmatpush1.msra.mxu0 0.0
        %2381 = vmatprep.subr.mxu0 0.0
        %2382 = vmatpush1.msra.mxu0 0.0
        %2383 = vmatprep.subr.mxu0 0.0
        %2384 = vmatpush1.msra.mxu0 0.0
        %2385 = vmatprep.subr.mxu0 0.0
        %2386 = vmatpush1.msra.mxu0 0.0
        %2387 = vmatprep.subr.mxu0 0.0
        %2388 = vmatpush1.msra.mxu0 0.0
        %2389 = vmatprep.subr.mxu0 0.0
        %2390 = vmatpush1.msra.mxu0 0.0
        %2391 = vmatprep.subr.mxu0 0.0
        %2392 = vmatpush1.msra.mxu0 0.0
        %2393 = vmatprep.subr.mxu0 0.0
        %2394 = vmatpush1.msra.mxu0 0.0
        %2395 = vmatprep.mubr.f32.mxu0 0.0
        %2396 = vmatmul.mubr.f32.gmra.mrb[0].mxu0 %v2282
        %v2397 = vpop.f32.mrb[0].mxu0
        %v2398 = vadd.f32 0.0, %v2397
        %v2399 = vpop.f32.mrb[0].mxu0
        %2400 = vmatprep.mubr.f32.mxu0 0.0
        %2401 = vmatmul.mubr.f32.gmra.mrb[0].mxu0 %v2283
        %v2402 = vpop.f32.mrb[0].mxu0
        %v2403 = vadd.f32 0.0, %v2402
        %v2404 = vpop.f32.mrb[0].mxu0
        %2405 = vmatprep.mubr.f32.mxu0 0.0
        %2406 = vmatmul.mubr.f32.gmra.mrb[0].mxu0 %v2284
        %v2407 = vpop.f32.mrb[0].mxu0
        %v2408 = vadd.f32 0.0, %v2407
        %v2409 = vpop.f32.mrb[0].mxu0
        %2410 = vmatprep.mubr.f32.mxu0 0.0
        %2411 = vmatmul.mubr.f32.gmra.mrb[0].mxu0 %v2285
        %v2412 = vpop.f32.mrb[0].mxu0
        %v2413 = vadd.f32 0.0, %v2412
        %v2414 = vpop.f32.mrb[0].mxu0
        %2415 = vmatprep.mubr.f32.mxu0 0.0
        %2416 = vmatmul.mubr.f32.gmra.mrb[0].mxu0 %v2286
        %v2417 = vpop.f32.mrb[0].mxu0
        %v2418 = vadd.f32 0.0, %v2417
        %v2419 = vpop.f32.mrb[0].mxu0
        %2420 = vmatprep.mubr.f32.mxu0 0.0
        %2421 = vmatmul.mubr.f32.gmra.mrb[0].mxu0 %v2287
        %v2422 = vpop.f32.mrb[0].mxu0
        %v2423 = vadd.f32 0.0, %v2422
        %v2424 = vpop.f32.mrb[0].mxu0
        %2425 = vmatprep.mubr.f32.mxu0 0.0
        %2426 = vmatmul.mubr.f32.gmra.mrb[0].mxu0 %v2288
        %v2427 = vpop.f32.mrb[0].mxu0
        %v2428 = vadd.f32 0.0, %v2427
        %v2429 = vpop.f32.mrb[0].mxu0
        %2430 = vmatprep.mubr.f32.mxu0 0.0
        %2431 = vmatmul.mubr.f32.gmra.mrb[0].mxu0 %v2289
        %v2432 = vpop.f32.mrb[0].mxu0
        %v2433 = vadd.f32 0.0, %v2432
        %v2434 = vpop.f32.mrb[0].mxu0
        %2435 = vmatprep.mubr.f32.mxu0 0.0
        %2436 = vmatmul.mubr.f32.gmra.mrb[0].mxu0 %v2290
        %v2437 = vpop.f32.mrb[0].mxu0
        %v2438 = vadd.f32 0.0, %v2437
        %v2439 = vpop.f32.mrb[0].mxu0
        %2440 = vmatprep.mubr.f32.mxu0 0.0
        %2441 = vmatmul.mubr.f32.gmra.mrb[0].mxu0 %v2291
        %v2442 = vpop.f32.mrb[0].mxu0
        %v2443 = vadd.f32 0.0, %v2442
        %v2444 = vpop.f32.mrb[0].mxu0
        %2445 = vmatprep.mubr.f32.mxu0 0.0
        %2446 = vmatmul.mubr.f32.gmra.mrb[0].mxu0 %v2292
        %v2447 = vpop.f32.mrb[0].mxu0
        %v2448 = vadd.f32 0.0, %v2447
        %v2449 = vpop.f32.mrb[0].mxu0
        %2450 = vmatprep.mubr.f32.mxu0 0.0
        %2451 = vmatmul.mubr.f32.gmra.mrb[0].mxu0 %v2293
        %v2452 = vpop.f32.mrb[0].mxu0
        %v2453 = vadd.f32 0.0, %v2452
        %v2454 = vpop.f32.mrb[0].mxu0
        %2455 = vmatprep.mubr.f32.mxu0 0.0
        %2456 = vmatmul.mubr.f32.gmra.mrb[0].mxu0 %v2294
        %v2457 = vpop.f32.mrb[0].mxu0
        %v2458 = vadd.f32 0.0, %v2457
        %v2459 = vpop.f32.mrb[0].mxu0
        %2460 = vmatprep.mubr.f32.mxu0 0.0
        %2461 = vmatmul.mubr.f32.gmra.mrb[0].mxu0 %v2295
        %v2462 = vpop.f32.mrb[0].mxu0
        %v2463 = vadd.f32 0.0, %v2462
        %v2464 = vpop.f32.mrb[0].mxu0
        %2465 = vmatprep.mubr.f32.mxu0 0.0
        %2466 = vmatmul.mubr.f32.gmra.mrb[0].mxu0 %v2296
        %v2467 = vpop.f32.mrb[0].mxu0
        %v2468 = vadd.f32 0.0, %v2467
        %v2469 = vpop.f32.mrb[0].mxu0
        %2470 = vmatprep.mubr.f32.mxu0 0.0
        %2471 = vmatmul.mubr.f32.gmra.mrb[0].mxu0 %v2297
        %v2472 = vpop.f32.mrb[0].mxu0
        %v2473 = vadd.f32 0.0, %v2472
        %v2474 = vpop.f32.mrb[0].mxu0
        %2475 = vmatprep.mubr.f32.mxu0 0.0
        %2476 = vmatmul.mubr.f32.gmra.mrb[0].mxu0 %v2298
        %v2477 = vpop.f32.mrb[0].mxu0
        %v2478 = vadd.f32 0.0, %v2477
        %v2479 = vpop.f32.mrb[0].mxu0
        %2480 = vmatprep.mubr.f32.mxu0 0.0
        %2481 = vmatmul.mubr.f32.gmra.mrb[0].mxu0 %v2299
        %v2482 = vpop.f32.mrb[0].mxu0
        %v2483 = vadd.f32 0.0, %v2482
        %v2484 = vpop.f32.mrb[0].mxu0
        %2485 = vmatprep.mubr.f32.mxu0 0.0
        %2486 = vmatmul.mubr.f32.gmra.mrb[0].mxu0 %v2300
        %v2487 = vpop.f32.mrb[0].mxu0
        %v2488 = vadd.f32 0.0, %v2487
        %v2489 = vpop.f32.mrb[0].mxu0
        %2490 = vmatprep.mubr.f32.mxu0 0.0
        %2491 = vmatmul.mubr.f32.gmra.mrb[0].mxu0 %v2301
        %v2492 = vpop.f32.mrb[0].mxu0
        %v2493 = vadd.f32 0.0, %v2492
        %v2494 = vpop.f32.mrb[0].mxu0
        %2495 = vmatprep.mubr.f32.mxu0 0.0
        %2496 = vmatmul.mubr.f32.gmra.mrb[0].mxu0 %v2302
        %v2497 = vpop.f32.mrb[0].mxu0
        %v2498 = vadd.f32 0.0, %v2497
        %v2499 = vpop.f32.mrb[0].mxu0
        %2500 = vmatprep.mubr.f32.mxu0 0.0
        %2501 = vmatmul.mubr.f32.gmra.mrb[0].mxu0 %v2303
        %v2502 = vpop.f32.mrb[0].mxu0
        %v2503 = vadd.f32 0.0, %v2502
        %v2504 = vpop.f32.mrb[0].mxu0
        %2505 = vmatprep.mubr.f32.mxu0 0.0
        %2506 = vmatmul.mubr.f32.gmra.mrb[0].mxu0 %v2304
        %v2507 = vpop.f32.mrb[0].mxu0
        %v2508 = vadd.f32 0.0, %v2507
        %v2509 = vpop.f32.mrb[0].mxu0
        %2510 = vmatprep.mubr.f32.mxu0 0.0
        %2511 = vmatmul.mubr.f32.gmra.mrb[0].mxu0 %v2305
        %v2512 = vpop.f32.mrb[0].mxu0
        %v2513 = vadd.f32 0.0, %v2512
        %v2514 = vpop.f32.mrb[0].mxu0
        %2515 = vmatprep.mubr.f32.mxu0 0.0
        %2516 = vmatmul.mubr.f32.gmra.mrb[0].mxu0 %v2306
        %v2517 = vpop.f32.mrb[0].mxu0
        %v2518 = vadd.f32 0.0, %v2517
        %v2519 = vpop.f32.mrb[0].mxu0
        %2520 = vmatprep.mubr.f32.mxu0 0.0
        %2521 = vmatmul.mubr.f32.gmra.mrb[0].mxu0 %v2307
        %v2522 = vpop.f32.mrb[0].mxu0
        %v2523 = vadd.f32 0.0, %v2522
        %v2524 = vpop.f32.mrb[0].mxu0
        %2525 = vmatprep.mubr.f32.mxu0 0.0
        %2526 = vmatmul.mubr.f32.gmra.mrb[0].mxu0 %v2308
        %v2527 = vpop.f32.mrb[0].mxu0
        %v2528 = vadd.f32 0.0, %v2527
        %v2529 = vpop.f32.mrb[0].mxu0
        %2530 = vmatprep.mubr.f32.mxu0 0.0
        %2531 = vmatmul.mubr.f32.gmra.mrb[0].mxu0 %v2309
        %v2532 = vpop.f32.mrb[0].mxu0
        %v2533 = vadd.f32 0.0, %v2532
        %v2534 = vpop.f32.mrb[0].mxu0
        %2535 = vmatprep.mubr.f32.mxu0 0.0
        %2536 = vmatmul.mubr.f32.gmra.mrb[0].mxu0 %v2310
        %v2537 = vpop.f32.mrb[0].mxu0
        %v2538 = vadd.f32 0.0, %v2537
        %v2539 = vpop.f32.mrb[0].mxu0
        %2540 = vmatprep.mubr.f32.mxu0 0.0
        %2541 = vmatmul.mubr.f32.gmra.mrb[0].mxu0 %v2311
        %v2542 = vpop.f32.mrb[0].mxu0
        %v2543 = vadd.f32 0.0, %v2542
        %v2544 = vpop.f32.mrb[0].mxu0
        %2545 = vmatprep.mubr.f32.mxu0 0.0
        %2546 = vmatmul.mubr.f32.gmra.mrb[0].mxu0 %v2312
        %v2547 = vpop.f32.mrb[0].mxu0
        %v2548 = vadd.f32 0.0, %v2547
        %v2549 = vpop.f32.mrb[0].mxu0
        %2550 = vmatprep.mubr.f32.mxu0 0.0
        %2551 = vmatmul.mubr.f32.gmra.mrb[0].mxu0 %v2313
        %v2552 = vpop.f32.mrb[0].mxu0
        %v2553 = vadd.f32 0.0, %v2552
        %v2554 = vpop.f32.mrb[0].mxu0
        %2555 = vdwg.mxu0
        %v2556 = vadd.f32 %v2250, %v2398
        %v2557 = vadd.f32 %v2251, %v2403
        %v2558 = vadd.f32 %v2252, %v2408
        %v2559 = vadd.f32 %v2253, %v2413
        %v2560 = vadd.f32 %v2254, %v2418
        %v2561 = vadd.f32 %v2255, %v2423
        %v2562 = vadd.f32 %v2256, %v2428
        %v2563 = vadd.f32 %v2257, %v2433
        %v2564 = vadd.f32 %v2258, %v2438
        %v2565 = vadd.f32 %v2259, %v2443
        %v2566 = vadd.f32 %v2260, %v2448
        %v2567 = vadd.f32 %v2261, %v2453
        %v2568 = vadd.f32 %v2262, %v2458
        %v2569 = vadd.f32 %v2263, %v2463
        %v2570 = vadd.f32 %v2264, %v2468
        %v2571 = vadd.f32 %v2265, %v2473
        %v2572 = vadd.f32 %v2266, %v2478
        %v2573 = vadd.f32 %v2267, %v2483
        %v2574 = vadd.f32 %v2268, %v2488
        %v2575 = vadd.f32 %v2269, %v2493
        %v2576 = vadd.f32 %v2270, %v2498
        %v2577 = vadd.f32 %v2271, %v2503
        %v2578 = vadd.f32 %v2272, %v2508
        %v2579 = vadd.f32 %v2273, %v2513
        %v2580 = vadd.f32 %v2274, %v2518
        %v2581 = vadd.f32 %v2275, %v2523
        %v2582 = vadd.f32 %v2276, %v2528
        %v2583 = vadd.f32 %v2277, %v2533
        %v2584 = vadd.f32 %v2278, %v2538
        %v2585 = vadd.f32 %v2279, %v2543
        %v2586 = vadd.f32 %v2280, %v2548
        %v2587 = vadd.f32 %v2281, %v2553
        %s2588 = scalar_lea.vmem [#allocation2], 48
        %v2589 = vld [vmem:[%s2588] sm:$0xff]
        %v2590 = vld [vmem:[%s2588 + $0x8] sm:$0xff]
        %v2591 = vld [vmem:[%s2588 + $0x18] sm:$0xff]
        %v2592 = vld [vmem:[%s2588 + $0x20] sm:$0xff]
        %v2593 = vld [vmem:[%s2588 + $0x30] sm:$0xff]
        %v2594 = vld [vmem:[%s2588 + $0x38] sm:$0xff]
        %v2595 = vld [vmem:[%s2588 + $0x48] sm:$0xff]
        %v2596 = vld [vmem:[%s2588 + $0x50] sm:$0xff]
        %v2597 = vld [vmem:[%s2588 + $0x60] sm:$0xff]
        %v2598 = vld [vmem:[%s2588 + $0x68] sm:$0xff]
        %v2599 = vld [vmem:[%s2588 + $0x78] sm:$0xff]
        %v2600 = vld [vmem:[%s2588 + $0x80] sm:$0xff]
        %v2601 = vld [vmem:[%s2588 + $0x90] sm:$0xff]
        %v2602 = vld [vmem:[%s2588 + $0x98] sm:$0xff]
        %v2603 = vld [vmem:[%s2588 + $0xa8] sm:$0xff]
        %v2604 = vld [vmem:[%s2588 + $0xb0] sm:$0xff]
        %v2605 = vld [vmem:[%s2588 + $0xc0] sm:$0xff]
        %v2606 = vld [vmem:[%s2588 + $0xc8] sm:$0xff]
        %v2607 = vld [vmem:[%s2588 + $0xd8] sm:$0xff]
        %v2608 = vld [vmem:[%s2588 + $0xe0] sm:$0xff]
        %v2609 = vld [vmem:[%s2588 + $0xf0] sm:$0xff]
        %v2610 = vld [vmem:[%s2588 + $0xf8] sm:$0xff]
        %v2611 = vld [vmem:[%s2588 + $0x108] sm:$0xff]
        %v2612 = vld [vmem:[%s2588 + $0x110] sm:$0xff]
        %v2613 = vld [vmem:[%s2588 + $0x120] sm:$0xff]
        %v2614 = vld [vmem:[%s2588 + $0x128] sm:$0xff]
        %v2615 = vld [vmem:[%s2588 + $0x138] sm:$0xff]
        %v2616 = vld [vmem:[%s2588 + $0x140] sm:$0xff]
        %v2617 = vld [vmem:[%s2588 + $0x150] sm:$0xff]
        %v2618 = vld [vmem:[%s2588 + $0x158] sm:$0xff]
        %v2619 = vld [vmem:[%s2588 + $0x168] sm:$0xff]
        %v2620 = vld [vmem:[%s2588 + $0x170] sm:$0xff]
        %s2621 = scalar_lea.vmem [#allocation8], 768
        %v2622 = vld [vmem:[%s2621] sm:$0xff]
        %v2623 = vld [vmem:[%s2621 + $0x8] sm:$0xff]
        %v2624 = vld [vmem:[%s2621 + $0x10] sm:$0xff]
        %v2625 = vld [vmem:[%s2621 + $0x18] sm:$0xff]
        %v2626 = vld [vmem:[%s2621 + $0x20] sm:$0xff]
        %v2627 = vld [vmem:[%s2621 + $0x28] sm:$0xff]
        %v2628 = vld [vmem:[%s2621 + $0x30] sm:$0xff]
        %v2629 = vld [vmem:[%s2621 + $0x38] sm:$0xff]
        %v2630 = vld [vmem:[%s2621 + $0x40] sm:$0xff]
        %v2631 = vld [vmem:[%s2621 + $0x48] sm:$0xff]
        %v2632 = vld [vmem:[%s2621 + $0x50] sm:$0xff]
        %v2633 = vld [vmem:[%s2621 + $0x58] sm:$0xff]
        %v2634 = vld [vmem:[%s2621 + $0x60] sm:$0xff]
        %v2635 = vld [vmem:[%s2621 + $0x68] sm:$0xff]
        %v2636 = vld [vmem:[%s2621 + $0x70] sm:$0xff]
        %v2637 = vld [vmem:[%s2621 + $0x78] sm:$0xff]
        %2638 = vmatprep.subr.mxu0 0.0
        %2639 = vmatpush1.msra.mxu0 %v2622
        %2640 = vmatprep.subr.mxu0 0.0
        %2641 = vmatpush1.msra.mxu0 %v2623
        %2642 = vmatprep.subr.mxu0 0.0
        %2643 = vmatpush1.msra.mxu0 %v2624
        %2644 = vmatprep.subr.mxu0 0.0
        %2645 = vmatpush1.msra.mxu0 %v2625
        %2646 = vmatprep.subr.mxu0 0.0
        %2647 = vmatpush1.msra.mxu0 %v2626
        %2648 = vmatprep.subr.mxu0 0.0
        %2649 = vmatpush1.msra.mxu0 %v2627
        %2650 = vmatprep.subr.mxu0 0.0
        %2651 = vmatpush1.msra.mxu0 %v2628
        %2652 = vmatprep.subr.mxu0 0.0
        %2653 = vmatpush1.msra.mxu0 %v2629
        %2654 = vmatprep.subr.mxu0 0.0
        %2655 = vmatpush1.msra.mxu0 %v2630
        %2656 = vmatprep.subr.mxu0 0.0
        %2657 = vmatpush1.msra.mxu0 %v2631
        %2658 = vmatprep.subr.mxu0 0.0
        %2659 = vmatpush1.msra.mxu0 %v2632
        %2660 = vmatprep.subr.mxu0 0.0
        %2661 = vmatpush1.msra.mxu0 %v2633
        %2662 = vmatprep.subr.mxu0 0.0
        %2663 = vmatpush1.msra.mxu0 %v2634
        %2664 = vmatprep.subr.mxu0 0.0
        %2665 = vmatpush1.msra.mxu0 %v2635
        %2666 = vmatprep.subr.mxu0 0.0
        %2667 = vmatpush1.msra.mxu0 %v2636
        %2668 = vmatprep.subr.mxu0 0.0
        %2669 = vmatpush1.msra.mxu0 %v2637
        %2670 = vmatprep.subr.mxu0 0.0
        %2671 = vmatpush1.msra.mxu0 0.0
        %2672 = vmatprep.subr.mxu0 0.0
        %2673 = vmatpush1.msra.mxu0 0.0
        %2674 = vmatprep.subr.mxu0 0.0
        %2675 = vmatpush1.msra.mxu0 0.0
        %2676 = vmatprep.subr.mxu0 0.0
        %2677 = vmatpush1.msra.mxu0 0.0
        %2678 = vmatprep.subr.mxu0 0.0
        %2679 = vmatpush1.msra.mxu0 0.0
        %2680 = vmatprep.subr.mxu0 0.0
        %2681 = vmatpush1.msra.mxu0 0.0
        %2682 = vmatprep.subr.mxu0 0.0
        %2683 = vmatpush1.msra.mxu0 0.0
        %2684 = vmatprep.subr.mxu0 0.0
        %2685 = vmatpush1.msra.mxu0 0.0
        %2686 = vmatprep.subr.mxu0 0.0
        %2687 = vmatpush1.msra.mxu0 0.0
        %2688 = vmatprep.subr.mxu0 0.0
        %2689 = vmatpush1.msra.mxu0 0.0
        %2690 = vmatprep.subr.mxu0 0.0
        %2691 = vmatpush1.msra.mxu0 0.0
        %2692 = vmatprep.subr.mxu0 0.0
        %2693 = vmatpush1.msra.mxu0 0.0
        %2694 = vmatprep.subr.mxu0 0.0
        %2695 = vmatpush1.msra.mxu0 0.0
        %2696 = vmatprep.subr.mxu0 0.0
        %2697 = vmatpush1.msra.mxu0 0.0
        %2698 = vmatprep.subr.mxu0 0.0
        %2699 = vmatpush1.msra.mxu0 0.0
        %2700 = vmatprep.subr.mxu0 0.0
        %2701 = vmatpush1.msra.mxu0 0.0
        %2702 = vmatprep.mubr.f32.mxu0 0.0
        %2703 = vmatmul.mubr.f32.gmra.mrb[0].mxu0 %v2589
        %v2704 = vpop.f32.mrb[0].mxu0
        %v2705 = vadd.f32 0.0, %v2704
        %v2706 = vpop.f32.mrb[0].mxu0
        %2707 = vmatprep.mubr.f32.mxu0 0.0
        %2708 = vmatmul.mubr.f32.gmra.mrb[0].mxu0 %v2590
        %v2709 = vpop.f32.mrb[0].mxu0
        %v2710 = vadd.f32 0.0, %v2709
        %v2711 = vpop.f32.mrb[0].mxu0
        %2712 = vmatprep.mubr.f32.mxu0 0.0
        %2713 = vmatmul.mubr.f32.gmra.mrb[0].mxu0 %v2591
        %v2714 = vpop.f32.mrb[0].mxu0
        %v2715 = vadd.f32 0.0, %v2714
        %v2716 = vpop.f32.mrb[0].mxu0
        %2717 = vmatprep.mubr.f32.mxu0 0.0
        %2718 = vmatmul.mubr.f32.gmra.mrb[0].mxu0 %v2592
        %v2719 = vpop.f32.mrb[0].mxu0
        %v2720 = vadd.f32 0.0, %v2719
        %v2721 = vpop.f32.mrb[0].mxu0
        %2722 = vmatprep.mubr.f32.mxu0 0.0
        %2723 = vmatmul.mubr.f32.gmra.mrb[0].mxu0 %v2593
        %v2724 = vpop.f32.mrb[0].mxu0
        %v2725 = vadd.f32 0.0, %v2724
        %v2726 = vpop.f32.mrb[0].mxu0
        %2727 = vmatprep.mubr.f32.mxu0 0.0
        %2728 = vmatmul.mubr.f32.gmra.mrb[0].mxu0 %v2594
        %v2729 = vpop.f32.mrb[0].mxu0
        %v2730 = vadd.f32 0.0, %v2729
        %v2731 = vpop.f32.mrb[0].mxu0
        %2732 = vmatprep.mubr.f32.mxu0 0.0
        %2733 = vmatmul.mubr.f32.gmra.mrb[0].mxu0 %v2595
        %v2734 = vpop.f32.mrb[0].mxu0
        %v2735 = vadd.f32 0.0, %v2734
        %v2736 = vpop.f32.mrb[0].mxu0
        %2737 = vmatprep.mubr.f32.mxu0 0.0
        %2738 = vmatmul.mubr.f32.gmra.mrb[0].mxu0 %v2596
        %v2739 = vpop.f32.mrb[0].mxu0
        %v2740 = vadd.f32 0.0, %v2739
        %v2741 = vpop.f32.mrb[0].mxu0
        %2742 = vmatprep.mubr.f32.mxu0 0.0
        %2743 = vmatmul.mubr.f32.gmra.mrb[0].mxu0 %v2597
        %v2744 = vpop.f32.mrb[0].mxu0
        %v2745 = vadd.f32 0.0, %v2744
        %v2746 = vpop.f32.mrb[0].mxu0
        %2747 = vmatprep.mubr.f32.mxu0 0.0
        %2748 = vmatmul.mubr.f32.gmra.mrb[0].mxu0 %v2598
        %v2749 = vpop.f32.mrb[0].mxu0
        %v2750 = vadd.f32 0.0, %v2749
        %v2751 = vpop.f32.mrb[0].mxu0
        %2752 = vmatprep.mubr.f32.mxu0 0.0
        %2753 = vmatmul.mubr.f32.gmra.mrb[0].mxu0 %v2599
        %v2754 = vpop.f32.mrb[0].mxu0
        %v2755 = vadd.f32 0.0, %v2754
        %v2756 = vpop.f32.mrb[0].mxu0
        %2757 = vmatprep.mubr.f32.mxu0 0.0
        %2758 = vmatmul.mubr.f32.gmra.mrb[0].mxu0 %v2600
        %v2759 = vpop.f32.mrb[0].mxu0
        %v2760 = vadd.f32 0.0, %v2759
        %v2761 = vpop.f32.mrb[0].mxu0
        %2762 = vmatprep.mubr.f32.mxu0 0.0
        %2763 = vmatmul.mubr.f32.gmra.mrb[0].mxu0 %v2601
        %v2764 = vpop.f32.mrb[0].mxu0
        %v2765 = vadd.f32 0.0, %v2764
        %v2766 = vpop.f32.mrb[0].mxu0
        %2767 = vmatprep.mubr.f32.mxu0 0.0
        %2768 = vmatmul.mubr.f32.gmra.mrb[0].mxu0 %v2602
        %v2769 = vpop.f32.mrb[0].mxu0
        %v2770 = vadd.f32 0.0, %v2769
        %v2771 = vpop.f32.mrb[0].mxu0
        %2772 = vmatprep.mubr.f32.mxu0 0.0
        %2773 = vmatmul.mubr.f32.gmra.mrb[0].mxu0 %v2603
        %v2774 = vpop.f32.mrb[0].mxu0
        %v2775 = vadd.f32 0.0, %v2774
        %v2776 = vpop.f32.mrb[0].mxu0
        %2777 = vmatprep.mubr.f32.mxu0 0.0
        %2778 = vmatmul.mubr.f32.gmra.mrb[0].mxu0 %v2604
        %v2779 = vpop.f32.mrb[0].mxu0
        %v2780 = vadd.f32 0.0, %v2779
        %v2781 = vpop.f32.mrb[0].mxu0
        %2782 = vmatprep.mubr.f32.mxu0 0.0
        %2783 = vmatmul.mubr.f32.gmra.mrb[0].mxu0 %v2605
        %v2784 = vpop.f32.mrb[0].mxu0
        %v2785 = vadd.f32 0.0, %v2784
        %v2786 = vpop.f32.mrb[0].mxu0
        %2787 = vmatprep.mubr.f32.mxu0 0.0
        %2788 = vmatmul.mubr.f32.gmra.mrb[0].mxu0 %v2606
        %v2789 = vpop.f32.mrb[0].mxu0
        %v2790 = vadd.f32 0.0, %v2789
        %v2791 = vpop.f32.mrb[0].mxu0
        %2792 = vmatprep.mubr.f32.mxu0 0.0
        %2793 = vmatmul.mubr.f32.gmra.mrb[0].mxu0 %v2607
        %v2794 = vpop.f32.mrb[0].mxu0
        %v2795 = vadd.f32 0.0, %v2794
        %v2796 = vpop.f32.mrb[0].mxu0
        %2797 = vmatprep.mubr.f32.mxu0 0.0
        %2798 = vmatmul.mubr.f32.gmra.mrb[0].mxu0 %v2608
        %v2799 = vpop.f32.mrb[0].mxu0
        %v2800 = vadd.f32 0.0, %v2799
        %v2801 = vpop.f32.mrb[0].mxu0
        %2802 = vmatprep.mubr.f32.mxu0 0.0
        %2803 = vmatmul.mubr.f32.gmra.mrb[0].mxu0 %v2609
        %v2804 = vpop.f32.mrb[0].mxu0
        %v2805 = vadd.f32 0.0, %v2804
        %v2806 = vpop.f32.mrb[0].mxu0
        %2807 = vmatprep.mubr.f32.mxu0 0.0
        %2808 = vmatmul.mubr.f32.gmra.mrb[0].mxu0 %v2610
        %v2809 = vpop.f32.mrb[0].mxu0
        %v2810 = vadd.f32 0.0, %v2809
        %v2811 = vpop.f32.mrb[0].mxu0
        %2812 = vmatprep.mubr.f32.mxu0 0.0
        %2813 = vmatmul.mubr.f32.gmra.mrb[0].mxu0 %v2611
        %v2814 = vpop.f32.mrb[0].mxu0
        %v2815 = vadd.f32 0.0, %v2814
        %v2816 = vpop.f32.mrb[0].mxu0
        %2817 = vmatprep.mubr.f32.mxu0 0.0
        %2818 = vmatmul.mubr.f32.gmra.mrb[0].mxu0 %v2612
        %v2819 = vpop.f32.mrb[0].mxu0
        %v2820 = vadd.f32 0.0, %v2819
        %v2821 = vpop.f32.mrb[0].mxu0
        %2822 = vmatprep.mubr.f32.mxu0 0.0
        %2823 = vmatmul.mubr.f32.gmra.mrb[0].mxu0 %v2613
        %v2824 = vpop.f32.mrb[0].mxu0
        %v2825 = vadd.f32 0.0, %v2824
        %v2826 = vpop.f32.mrb[0].mxu0
        %2827 = vmatprep.mubr.f32.mxu0 0.0
        %2828 = vmatmul.mubr.f32.gmra.mrb[0].mxu0 %v2614
        %v2829 = vpop.f32.mrb[0].mxu0
        %v2830 = vadd.f32 0.0, %v2829
        %v2831 = vpop.f32.mrb[0].mxu0
        %2832 = vmatprep.mubr.f32.mxu0 0.0
        %2833 = vmatmul.mubr.f32.gmra.mrb[0].mxu0 %v2615
        %v2834 = vpop.f32.mrb[0].mxu0
        %v2835 = vadd.f32 0.0, %v2834
        %v2836 = vpop.f32.mrb[0].mxu0
        %2837 = vmatprep.mubr.f32.mxu0 0.0
        %2838 = vmatmul.mubr.f32.gmra.mrb[0].mxu0 %v2616
        %v2839 = vpop.f32.mrb[0].mxu0
        %v2840 = vadd.f32 0.0, %v2839
        %v2841 = vpop.f32.mrb[0].mxu0
        %2842 = vmatprep.mubr.f32.mxu0 0.0
        %2843 = vmatmul.mubr.f32.gmra.mrb[0].mxu0 %v2617
        %v2844 = vpop.f32.mrb[0].mxu0
        %v2845 = vadd.f32 0.0, %v2844
        %v2846 = vpop.f32.mrb[0].mxu0
        %2847 = vmatprep.mubr.f32.mxu0 0.0
        %2848 = vmatmul.mubr.f32.gmra.mrb[0].mxu0 %v2618
        %v2849 = vpop.f32.mrb[0].mxu0
        %v2850 = vadd.f32 0.0, %v2849
        %v2851 = vpop.f32.mrb[0].mxu0
        %2852 = vmatprep.mubr.f32.mxu0 0.0
        %2853 = vmatmul.mubr.f32.gmra.mrb[0].mxu0 %v2619
        %v2854 = vpop.f32.mrb[0].mxu0
        %v2855 = vadd.f32 0.0, %v2854
        %v2856 = vpop.f32.mrb[0].mxu0
        %2857 = vmatprep.mubr.f32.mxu0 0.0
        %2858 = vmatmul.mubr.f32.gmra.mrb[0].mxu0 %v2620
        %v2859 = vpop.f32.mrb[0].mxu0
        %v2860 = vadd.f32 0.0, %v2859
        %v2861 = vpop.f32.mrb[0].mxu0
        %2862 = vdwg.mxu0
        %v2863 = vadd.f32 %v2556, %v2705
        %v2864 = vadd.f32 %v2557, %v2710
        %v2865 = vadd.f32 %v2558, %v2715
        %v2866 = vadd.f32 %v2559, %v2720
        %v2867 = vadd.f32 %v2560, %v2725
        %v2868 = vadd.f32 %v2561, %v2730
        %v2869 = vadd.f32 %v2562, %v2735
        %v2870 = vadd.f32 %v2563, %v2740
        %v2871 = vadd.f32 %v2564, %v2745
        %v2872 = vadd.f32 %v2565, %v2750
        %v2873 = vadd.f32 %v2566, %v2755
        %v2874 = vadd.f32 %v2567, %v2760
        %v2875 = vadd.f32 %v2568, %v2765
        %v2876 = vadd.f32 %v2569, %v2770
        %v2877 = vadd.f32 %v2570, %v2775
        %v2878 = vadd.f32 %v2571, %v2780
        %v2879 = vadd.f32 %v2572, %v2785
        %v2880 = vadd.f32 %v2573, %v2790
        %v2881 = vadd.f32 %v2574, %v2795
        %v2882 = vadd.f32 %v2575, %v2800
        %v2883 = vadd.f32 %v2576, %v2805
        %v2884 = vadd.f32 %v2577, %v2810
        %v2885 = vadd.f32 %v2578, %v2815
        %v2886 = vadd.f32 %v2579, %v2820
        %v2887 = vadd.f32 %v2580, %v2825
        %v2888 = vadd.f32 %v2581, %v2830
        %v2889 = vadd.f32 %v2582, %v2835
        %v2890 = vadd.f32 %v2583, %v2840
        %v2891 = vadd.f32 %v2584, %v2845
        %v2892 = vadd.f32 %v2585, %v2850
        %v2893 = vadd.f32 %v2586, %v2855
        %v2894 = vadd.f32 %v2587, %v2860
        %v2895 = vld [vmem:[%s2588 + $0x1] sm:$0xff]
        %v2896 = vld [vmem:[%s2588 + $0x9] sm:$0xff]
        %v2897 = vld [vmem:[%s2588 + $0x19] sm:$0xff]
        %v2898 = vld [vmem:[%s2588 + $0x21] sm:$0xff]
        %v2899 = vld [vmem:[%s2588 + $0x31] sm:$0xff]
        %v2900 = vld [vmem:[%s2588 + $0x39] sm:$0xff]
        %v2901 = vld [vmem:[%s2588 + $0x49] sm:$0xff]
        %v2902 = vld [vmem:[%s2588 + $0x51] sm:$0xff]
        %v2903 = vld [vmem:[%s2588 + $0x61] sm:$0xff]
        %v2904 = vld [vmem:[%s2588 + $0x69] sm:$0xff]
        %v2905 = vld [vmem:[%s2588 + $0x79] sm:$0xff]
        %v2906 = vld [vmem:[%s2588 + $0x81] sm:$0xff]
        %v2907 = vld [vmem:[%s2588 + $0x91] sm:$0xff]
        %v2908 = vld [vmem:[%s2588 + $0x99] sm:$0xff]
        %v2909 = vld [vmem:[%s2588 + $0xa9] sm:$0xff]
        %v2910 = vld [vmem:[%s2588 + $0xb1] sm:$0xff]
        %v2911 = vld [vmem:[%s2588 + $0xc1] sm:$0xff]
        %v2912 = vld [vmem:[%s2588 + $0xc9] sm:$0xff]
        %v2913 = vld [vmem:[%s2588 + $0xd9] sm:$0xff]
        %v2914 = vld [vmem:[%s2588 + $0xe1] sm:$0xff]
        %v2915 = vld [vmem:[%s2588 + $0xf1] sm:$0xff]
        %v2916 = vld [vmem:[%s2588 + $0xf9] sm:$0xff]
        %v2917 = vld [vmem:[%s2588 + $0x109] sm:$0xff]
        %v2918 = vld [vmem:[%s2588 + $0x111] sm:$0xff]
        %v2919 = vld [vmem:[%s2588 + $0x121] sm:$0xff]
        %v2920 = vld [vmem:[%s2588 + $0x129] sm:$0xff]
        %v2921 = vld [vmem:[%s2588 + $0x139] sm:$0xff]
        %v2922 = vld [vmem:[%s2588 + $0x141] sm:$0xff]
        %v2923 = vld [vmem:[%s2588 + $0x151] sm:$0xff]
        %v2924 = vld [vmem:[%s2588 + $0x159] sm:$0xff]
        %v2925 = vld [vmem:[%s2588 + $0x169] sm:$0xff]
        %v2926 = vld [vmem:[%s2588 + $0x171] sm:$0xff]
        %s2927 = scalar_lea.vmem [#allocation8], 896
        %v2928 = vld [vmem:[%s2927] sm:$0xff]
        %v2929 = vld [vmem:[%s2927 + $0x8] sm:$0xff]
        %v2930 = vld [vmem:[%s2927 + $0x10] sm:$0xff]
        %v2931 = vld [vmem:[%s2927 + $0x18] sm:$0xff]
        %v2932 = vld [vmem:[%s2927 + $0x20] sm:$0xff]
        %v2933 = vld [vmem:[%s2927 + $0x28] sm:$0xff]
        %v2934 = vld [vmem:[%s2927 + $0x30] sm:$0xff]
        %v2935 = vld [vmem:[%s2927 + $0x38] sm:$0xff]
        %v2936 = vld [vmem:[%s2927 + $0x40] sm:$0xff]
        %v2937 = vld [vmem:[%s2927 + $0x48] sm:$0xff]
        %v2938 = vld [vmem:[%s2927 + $0x50] sm:$0xff]
        %v2939 = vld [vmem:[%s2927 + $0x58] sm:$0xff]
        %v2940 = vld [vmem:[%s2927 + $0x60] sm:$0xff]
        %v2941 = vld [vmem:[%s2927 + $0x68] sm:$0xff]
        %v2942 = vld [vmem:[%s2927 + $0x70] sm:$0xff]
        %v2943 = vld [vmem:[%s2927 + $0x78] sm:$0xff]
        %2944 = vmatprep.subr.mxu0 0.0
        %2945 = vmatpush1.msra.mxu0 %v2928
        %2946 = vmatprep.subr.mxu0 0.0
        %2947 = vmatpush1.msra.mxu0 %v2929
        %2948 = vmatprep.subr.mxu0 0.0
        %2949 = vmatpush1.msra.mxu0 %v2930
        %2950 = vmatprep.subr.mxu0 0.0
        %2951 = vmatpush1.msra.mxu0 %v2931
        %2952 = vmatprep.subr.mxu0 0.0
        %2953 = vmatpush1.msra.mxu0 %v2932
        %2954 = vmatprep.subr.mxu0 0.0
        %2955 = vmatpush1.msra.mxu0 %v2933
        %2956 = vmatprep.subr.mxu0 0.0
        %2957 = vmatpush1.msra.mxu0 %v2934
        %2958 = vmatprep.subr.mxu0 0.0
        %2959 = vmatpush1.msra.mxu0 %v2935
        %2960 = vmatprep.subr.mxu0 0.0
        %2961 = vmatpush1.msra.mxu0 %v2936
        %2962 = vmatprep.subr.mxu0 0.0
        %2963 = vmatpush1.msra.mxu0 %v2937
        %2964 = vmatprep.subr.mxu0 0.0
        %2965 = vmatpush1.msra.mxu0 %v2938
        %2966 = vmatprep.subr.mxu0 0.0
        %2967 = vmatpush1.msra.mxu0 %v2939
        %2968 = vmatprep.subr.mxu0 0.0
        %2969 = vmatpush1.msra.mxu0 %v2940
        %2970 = vmatprep.subr.mxu0 0.0
        %2971 = vmatpush1.msra.mxu0 %v2941
        %2972 = vmatprep.subr.mxu0 0.0
        %2973 = vmatpush1.msra.mxu0 %v2942
        %2974 = vmatprep.subr.mxu0 0.0
        %2975 = vmatpush1.msra.mxu0 %v2943
        %2976 = vmatprep.subr.mxu0 0.0
        %2977 = vmatpush1.msra.mxu0 0.0
        %2978 = vmatprep.subr.mxu0 0.0
        %2979 = vmatpush1.msra.mxu0 0.0
        %2980 = vmatprep.subr.mxu0 0.0
        %2981 = vmatpush1.msra.mxu0 0.0
        %2982 = vmatprep.subr.mxu0 0.0
        %2983 = vmatpush1.msra.mxu0 0.0
        %2984 = vmatprep.subr.mxu0 0.0
        %2985 = vmatpush1.msra.mxu0 0.0
        %2986 = vmatprep.subr.mxu0 0.0
        %2987 = vmatpush1.msra.mxu0 0.0
        %2988 = vmatprep.subr.mxu0 0.0
        %2989 = vmatpush1.msra.mxu0 0.0
        %2990 = vmatprep.subr.mxu0 0.0
        %2991 = vmatpush1.msra.mxu0 0.0
        %2992 = vmatprep.subr.mxu0 0.0
        %2993 = vmatpush1.msra.mxu0 0.0
        %2994 = vmatprep.subr.mxu0 0.0
        %2995 = vmatpush1.msra.mxu0 0.0
        %2996 = vmatprep.subr.mxu0 0.0
        %2997 = vmatpush1.msra.mxu0 0.0
        %2998 = vmatprep.subr.mxu0 0.0
        %2999 = vmatpush1.msra.mxu0 0.0
        %3000 = vmatprep.subr.mxu0 0.0
        %3001 = vmatpush1.msra.mxu0 0.0
        %3002 = vmatprep.subr.mxu0 0.0
        %3003 = vmatpush1.msra.mxu0 0.0
        %3004 = vmatprep.subr.mxu0 0.0
        %3005 = vmatpush1.msra.mxu0 0.0
        %3006 = vmatprep.subr.mxu0 0.0
        %3007 = vmatpush1.msra.mxu0 0.0
        %3008 = vmatprep.mubr.f32.mxu0 0.0
        %3009 = vmatmul.mubr.f32.gmra.mrb[0].mxu0 %v2895
        %v3010 = vpop.f32.mrb[0].mxu0
        %v3011 = vadd.f32 0.0, %v3010
        %v3012 = vpop.f32.mrb[0].mxu0
        %3013 = vmatprep.mubr.f32.mxu0 0.0
        %3014 = vmatmul.mubr.f32.gmra.mrb[0].mxu0 %v2896
        %v3015 = vpop.f32.mrb[0].mxu0
        %v3016 = vadd.f32 0.0, %v3015
        %v3017 = vpop.f32.mrb[0].mxu0
        %3018 = vmatprep.mubr.f32.mxu0 0.0
        %3019 = vmatmul.mubr.f32.gmra.mrb[0].mxu0 %v2897
        %v3020 = vpop.f32.mrb[0].mxu0
        %v3021 = vadd.f32 0.0, %v3020
        %v3022 = vpop.f32.mrb[0].mxu0
        %3023 = vmatprep.mubr.f32.mxu0 0.0
        %3024 = vmatmul.mubr.f32.gmra.mrb[0].mxu0 %v2898
        %v3025 = vpop.f32.mrb[0].mxu0
        %v3026 = vadd.f32 0.0, %v3025
        %v3027 = vpop.f32.mrb[0].mxu0
        %3028 = vmatprep.mubr.f32.mxu0 0.0
        %3029 = vmatmul.mubr.f32.gmra.mrb[0].mxu0 %v2899
        %v3030 = vpop.f32.mrb[0].mxu0
        %v3031 = vadd.f32 0.0, %v3030
        %v3032 = vpop.f32.mrb[0].mxu0
        %3033 = vmatprep.mubr.f32.mxu0 0.0
        %3034 = vmatmul.mubr.f32.gmra.mrb[0].mxu0 %v2900
        %v3035 = vpop.f32.mrb[0].mxu0
        %v3036 = vadd.f32 0.0, %v3035
        %v3037 = vpop.f32.mrb[0].mxu0
        %3038 = vmatprep.mubr.f32.mxu0 0.0
        %3039 = vmatmul.mubr.f32.gmra.mrb[0].mxu0 %v2901
        %v3040 = vpop.f32.mrb[0].mxu0
        %v3041 = vadd.f32 0.0, %v3040
        %v3042 = vpop.f32.mrb[0].mxu0
        %3043 = vmatprep.mubr.f32.mxu0 0.0
        %3044 = vmatmul.mubr.f32.gmra.mrb[0].mxu0 %v2902
        %v3045 = vpop.f32.mrb[0].mxu0
        %v3046 = vadd.f32 0.0, %v3045
        %v3047 = vpop.f32.mrb[0].mxu0
        %3048 = vmatprep.mubr.f32.mxu0 0.0
        %3049 = vmatmul.mubr.f32.gmra.mrb[0].mxu0 %v2903
        %v3050 = vpop.f32.mrb[0].mxu0
        %v3051 = vadd.f32 0.0, %v3050
        %v3052 = vpop.f32.mrb[0].mxu0
        %3053 = vmatprep.mubr.f32.mxu0 0.0
        %3054 = vmatmul.mubr.f32.gmra.mrb[0].mxu0 %v2904
        %v3055 = vpop.f32.mrb[0].mxu0
        %v3056 = vadd.f32 0.0, %v3055
        %v3057 = vpop.f32.mrb[0].mxu0
        %3058 = vmatprep.mubr.f32.mxu0 0.0
        %3059 = vmatmul.mubr.f32.gmra.mrb[0].mxu0 %v2905
        %v3060 = vpop.f32.mrb[0].mxu0
        %v3061 = vadd.f32 0.0, %v3060
        %v3062 = vpop.f32.mrb[0].mxu0
        %3063 = vmatprep.mubr.f32.mxu0 0.0
        %3064 = vmatmul.mubr.f32.gmra.mrb[0].mxu0 %v2906
        %v3065 = vpop.f32.mrb[0].mxu0
        %v3066 = vadd.f32 0.0, %v3065
        %v3067 = vpop.f32.mrb[0].mxu0
        %3068 = vmatprep.mubr.f32.mxu0 0.0
        %3069 = vmatmul.mubr.f32.gmra.mrb[0].mxu0 %v2907
        %v3070 = vpop.f32.mrb[0].mxu0
        %v3071 = vadd.f32 0.0, %v3070
        %v3072 = vpop.f32.mrb[0].mxu0
        %3073 = vmatprep.mubr.f32.mxu0 0.0
        %3074 = vmatmul.mubr.f32.gmra.mrb[0].mxu0 %v2908
        %v3075 = vpop.f32.mrb[0].mxu0
        %v3076 = vadd.f32 0.0, %v3075
        %v3077 = vpop.f32.mrb[0].mxu0
        %3078 = vmatprep.mubr.f32.mxu0 0.0
        %3079 = vmatmul.mubr.f32.gmra.mrb[0].mxu0 %v2909
        %v3080 = vpop.f32.mrb[0].mxu0
        %v3081 = vadd.f32 0.0, %v3080
        %v3082 = vpop.f32.mrb[0].mxu0
        %3083 = vmatprep.mubr.f32.mxu0 0.0
        %3084 = vmatmul.mubr.f32.gmra.mrb[0].mxu0 %v2910
        %v3085 = vpop.f32.mrb[0].mxu0
        %v3086 = vadd.f32 0.0, %v3085
        %v3087 = vpop.f32.mrb[0].mxu0
        %3088 = vmatprep.mubr.f32.mxu0 0.0
        %3089 = vmatmul.mubr.f32.gmra.mrb[0].mxu0 %v2911
        %v3090 = vpop.f32.mrb[0].mxu0
        %v3091 = vadd.f32 0.0, %v3090
        %v3092 = vpop.f32.mrb[0].mxu0
        %3093 = vmatprep.mubr.f32.mxu0 0.0
        %3094 = vmatmul.mubr.f32.gmra.mrb[0].mxu0 %v2912
        %v3095 = vpop.f32.mrb[0].mxu0
        %v3096 = vadd.f32 0.0, %v3095
        %v3097 = vpop.f32.mrb[0].mxu0
        %3098 = vmatprep.mubr.f32.mxu0 0.0
        %3099 = vmatmul.mubr.f32.gmra.mrb[0].mxu0 %v2913
        %v3100 = vpop.f32.mrb[0].mxu0
        %v3101 = vadd.f32 0.0, %v3100
        %v3102 = vpop.f32.mrb[0].mxu0
        %3103 = vmatprep.mubr.f32.mxu0 0.0
        %3104 = vmatmul.mubr.f32.gmra.mrb[0].mxu0 %v2914
        %v3105 = vpop.f32.mrb[0].mxu0
        %v3106 = vadd.f32 0.0, %v3105
        %v3107 = vpop.f32.mrb[0].mxu0
        %3108 = vmatprep.mubr.f32.mxu0 0.0
        %3109 = vmatmul.mubr.f32.gmra.mrb[0].mxu0 %v2915
        %v3110 = vpop.f32.mrb[0].mxu0
        %v3111 = vadd.f32 0.0, %v3110
        %v3112 = vpop.f32.mrb[0].mxu0
        %3113 = vmatprep.mubr.f32.mxu0 0.0
        %3114 = vmatmul.mubr.f32.gmra.mrb[0].mxu0 %v2916
        %v3115 = vpop.f32.mrb[0].mxu0
        %v3116 = vadd.f32 0.0, %v3115
        %v3117 = vpop.f32.mrb[0].mxu0
        %3118 = vmatprep.mubr.f32.mxu0 0.0
        %3119 = vmatmul.mubr.f32.gmra.mrb[0].mxu0 %v2917
        %v3120 = vpop.f32.mrb[0].mxu0
        %v3121 = vadd.f32 0.0, %v3120
        %v3122 = vpop.f32.mrb[0].mxu0
        %3123 = vmatprep.mubr.f32.mxu0 0.0
        %3124 = vmatmul.mubr.f32.gmra.mrb[0].mxu0 %v2918
        %v3125 = vpop.f32.mrb[0].mxu0
        %v3126 = vadd.f32 0.0, %v3125
        %v3127 = vpop.f32.mrb[0].mxu0
        %3128 = vmatprep.mubr.f32.mxu0 0.0
        %3129 = vmatmul.mubr.f32.gmra.mrb[0].mxu0 %v2919
        %v3130 = vpop.f32.mrb[0].mxu0
        %v3131 = vadd.f32 0.0, %v3130
        %v3132 = vpop.f32.mrb[0].mxu0
        %3133 = vmatprep.mubr.f32.mxu0 0.0
        %3134 = vmatmul.mubr.f32.gmra.mrb[0].mxu0 %v2920
        %v3135 = vpop.f32.mrb[0].mxu0
        %v3136 = vadd.f32 0.0, %v3135
        %v3137 = vpop.f32.mrb[0].mxu0
        %3138 = vmatprep.mubr.f32.mxu0 0.0
        %3139 = vmatmul.mubr.f32.gmra.mrb[0].mxu0 %v2921
        %v3140 = vpop.f32.mrb[0].mxu0
        %v3141 = vadd.f32 0.0, %v3140
        %v3142 = vpop.f32.mrb[0].mxu0
        %3143 = vmatprep.mubr.f32.mxu0 0.0
        %3144 = vmatmul.mubr.f32.gmra.mrb[0].mxu0 %v2922
        %v3145 = vpop.f32.mrb[0].mxu0
        %v3146 = vadd.f32 0.0, %v3145
        %v3147 = vpop.f32.mrb[0].mxu0
        %3148 = vmatprep.mubr.f32.mxu0 0.0
        %3149 = vmatmul.mubr.f32.gmra.mrb[0].mxu0 %v2923
        %v3150 = vpop.f32.mrb[0].mxu0
        %v3151 = vadd.f32 0.0, %v3150
        %v3152 = vpop.f32.mrb[0].mxu0
        %3153 = vmatprep.mubr.f32.mxu0 0.0
        %3154 = vmatmul.mubr.f32.gmra.mrb[0].mxu0 %v2924
        %v3155 = vpop.f32.mrb[0].mxu0
        %v3156 = vadd.f32 0.0, %v3155
        %v3157 = vpop.f32.mrb[0].mxu0
        %3158 = vmatprep.mubr.f32.mxu0 0.0
        %3159 = vmatmul.mubr.f32.gmra.mrb[0].mxu0 %v2925
        %v3160 = vpop.f32.mrb[0].mxu0
        %v3161 = vadd.f32 0.0, %v3160
        %v3162 = vpop.f32.mrb[0].mxu0
        %3163 = vmatprep.mubr.f32.mxu0 0.0
        %3164 = vmatmul.mubr.f32.gmra.mrb[0].mxu0 %v2926
        %v3165 = vpop.f32.mrb[0].mxu0
        %v3166 = vadd.f32 0.0, %v3165
        %v3167 = vpop.f32.mrb[0].mxu0
        %3168 = vdwg.mxu0
        %v3169 = vadd.f32 %v2863, %v3011
        %v3170 = vadd.f32 %v2864, %v3016
        %v3171 = vadd.f32 %v2865, %v3021
        %v3172 = vadd.f32 %v2866, %v3026
        %v3173 = vadd.f32 %v2867, %v3031
        %v3174 = vadd.f32 %v2868, %v3036
        %v3175 = vadd.f32 %v2869, %v3041
        %v3176 = vadd.f32 %v2870, %v3046
        %v3177 = vadd.f32 %v2871, %v3051
        %v3178 = vadd.f32 %v2872, %v3056
        %v3179 = vadd.f32 %v2873, %v3061
        %v3180 = vadd.f32 %v2874, %v3066
        %v3181 = vadd.f32 %v2875, %v3071
        %v3182 = vadd.f32 %v2876, %v3076
        %v3183 = vadd.f32 %v2877, %v3081
        %v3184 = vadd.f32 %v2878, %v3086
        %v3185 = vadd.f32 %v2879, %v3091
        %v3186 = vadd.f32 %v2880, %v3096
        %v3187 = vadd.f32 %v2881, %v3101
        %v3188 = vadd.f32 %v2882, %v3106
        %v3189 = vadd.f32 %v2883, %v3111
        %v3190 = vadd.f32 %v2884, %v3116
        %v3191 = vadd.f32 %v2885, %v3121
        %v3192 = vadd.f32 %v2886, %v3126
        %v3193 = vadd.f32 %v2887, %v3131
        %v3194 = vadd.f32 %v2888, %v3136
        %v3195 = vadd.f32 %v2889, %v3141
        %v3196 = vadd.f32 %v2890, %v3146
        %v3197 = vadd.f32 %v2891, %v3151
        %v3198 = vadd.f32 %v2892, %v3156
        %v3199 = vadd.f32 %v2893, %v3161
        %v3200 = vadd.f32 %v2894, %v3166
        %v3201 = vld [vmem:[%s2588 + $0x2] sm:$0xff]
        %v3202 = vld [vmem:[%s2588 + $0xa] sm:$0xff]
        %v3203 = vld [vmem:[%s2588 + $0x1a] sm:$0xff]
        %v3204 = vld [vmem:[%s2588 + $0x22] sm:$0xff]
        %v3205 = vld [vmem:[%s2588 + $0x32] sm:$0xff]
        %v3206 = vld [vmem:[%s2588 + $0x3a] sm:$0xff]
        %v3207 = vld [vmem:[%s2588 + $0x4a] sm:$0xff]
        %v3208 = vld [vmem:[%s2588 + $0x52] sm:$0xff]
        %v3209 = vld [vmem:[%s2588 + $0x62] sm:$0xff]
        %v3210 = vld [vmem:[%s2588 + $0x6a] sm:$0xff]
        %v3211 = vld [vmem:[%s2588 + $0x7a] sm:$0xff]
        %v3212 = vld [vmem:[%s2588 + $0x82] sm:$0xff]
        %v3213 = vld [vmem:[%s2588 + $0x92] sm:$0xff]
        %v3214 = vld [vmem:[%s2588 + $0x9a] sm:$0xff]
        %v3215 = vld [vmem:[%s2588 + $0xaa] sm:$0xff]
        %v3216 = vld [vmem:[%s2588 + $0xb2] sm:$0xff]
        %v3217 = vld [vmem:[%s2588 + $0xc2] sm:$0xff]
        %v3218 = vld [vmem:[%s2588 + $0xca] sm:$0xff]
        %v3219 = vld [vmem:[%s2588 + $0xda] sm:$0xff]
        %v3220 = vld [vmem:[%s2588 + $0xe2] sm:$0xff]
        %v3221 = vld [vmem:[%s2588 + $0xf2] sm:$0xff]
        %v3222 = vld [vmem:[%s2588 + $0xfa] sm:$0xff]
        %v3223 = vld [vmem:[%s2588 + $0x10a] sm:$0xff]
        %v3224 = vld [vmem:[%s2588 + $0x112] sm:$0xff]
        %v3225 = vld [vmem:[%s2588 + $0x122] sm:$0xff]
        %v3226 = vld [vmem:[%s2588 + $0x12a] sm:$0xff]
        %v3227 = vld [vmem:[%s2588 + $0x13a] sm:$0xff]
        %v3228 = vld [vmem:[%s2588 + $0x142] sm:$0xff]
        %v3229 = vld [vmem:[%s2588 + $0x152] sm:$0xff]
        %v3230 = vld [vmem:[%s2588 + $0x15a] sm:$0xff]
        %v3231 = vld [vmem:[%s2588 + $0x16a] sm:$0xff]
        %v3232 = vld [vmem:[%s2588 + $0x172] sm:$0xff]
        %s3233 = scalar_lea.vmem [#allocation8], 1024
        %v3234 = vld [vmem:[%s3233] sm:$0xff]
        %v3235 = vld [vmem:[%s3233 + $0x8] sm:$0xff]
        %v3236 = vld [vmem:[%s3233 + $0x10] sm:$0xff]
        %v3237 = vld [vmem:[%s3233 + $0x18] sm:$0xff]
        %v3238 = vld [vmem:[%s3233 + $0x20] sm:$0xff]
        %v3239 = vld [vmem:[%s3233 + $0x28] sm:$0xff]
        %v3240 = vld [vmem:[%s3233 + $0x30] sm:$0xff]
        %v3241 = vld [vmem:[%s3233 + $0x38] sm:$0xff]
        %v3242 = vld [vmem:[%s3233 + $0x40] sm:$0xff]
        %v3243 = vld [vmem:[%s3233 + $0x48] sm:$0xff]
        %v3244 = vld [vmem:[%s3233 + $0x50] sm:$0xff]
        %v3245 = vld [vmem:[%s3233 + $0x58] sm:$0xff]
        %v3246 = vld [vmem:[%s3233 + $0x60] sm:$0xff]
        %v3247 = vld [vmem:[%s3233 + $0x68] sm:$0xff]
        %v3248 = vld [vmem:[%s3233 + $0x70] sm:$0xff]
        %v3249 = vld [vmem:[%s3233 + $0x78] sm:$0xff]
        %3250 = vmatprep.subr.mxu0 0.0
        %3251 = vmatpush1.msra.mxu0 %v3234
        %3252 = vmatprep.subr.mxu0 0.0
        %3253 = vmatpush1.msra.mxu0 %v3235
        %3254 = vmatprep.subr.mxu0 0.0
        %3255 = vmatpush1.msra.mxu0 %v3236
        %3256 = vmatprep.subr.mxu0 0.0
        %3257 = vmatpush1.msra.mxu0 %v3237
        %3258 = vmatprep.subr.mxu0 0.0
        %3259 = vmatpush1.msra.mxu0 %v3238
        %3260 = vmatprep.subr.mxu0 0.0
        %3261 = vmatpush1.msra.mxu0 %v3239
        %3262 = vmatprep.subr.mxu0 0.0
        %3263 = vmatpush1.msra.mxu0 %v3240
        %3264 = vmatprep.subr.mxu0 0.0
        %3265 = vmatpush1.msra.mxu0 %v3241
        %3266 = vmatprep.subr.mxu0 0.0
        %3267 = vmatpush1.msra.mxu0 %v3242
        %3268 = vmatprep.subr.mxu0 0.0
        %3269 = vmatpush1.msra.mxu0 %v3243
        %3270 = vmatprep.subr.mxu0 0.0
        %3271 = vmatpush1.msra.mxu0 %v3244
        %3272 = vmatprep.subr.mxu0 0.0
        %3273 = vmatpush1.msra.mxu0 %v3245
        %3274 = vmatprep.subr.mxu0 0.0
        %3275 = vmatpush1.msra.mxu0 %v3246
        %3276 = vmatprep.subr.mxu0 0.0
        %3277 = vmatpush1.msra.mxu0 %v3247
        %3278 = vmatprep.subr.mxu0 0.0
        %3279 = vmatpush1.msra.mxu0 %v3248
        %3280 = vmatprep.subr.mxu0 0.0
        %3281 = vmatpush1.msra.mxu0 %v3249
        %3282 = vmatprep.subr.mxu0 0.0
        %3283 = vmatpush1.msra.mxu0 0.0
        %3284 = vmatprep.subr.mxu0 0.0
        %3285 = vmatpush1.msra.mxu0 0.0
        %3286 = vmatprep.subr.mxu0 0.0
        %3287 = vmatpush1.msra.mxu0 0.0
        %3288 = vmatprep.subr.mxu0 0.0
        %3289 = vmatpush1.msra.mxu0 0.0
        %3290 = vmatprep.subr.mxu0 0.0
        %3291 = vmatpush1.msra.mxu0 0.0
        %3292 = vmatprep.subr.mxu0 0.0
        %3293 = vmatpush1.msra.mxu0 0.0
        %3294 = vmatprep.subr.mxu0 0.0
        %3295 = vmatpush1.msra.mxu0 0.0
        %3296 = vmatprep.subr.mxu0 0.0
        %3297 = vmatpush1.msra.mxu0 0.0
        %3298 = vmatprep.subr.mxu0 0.0
        %3299 = vmatpush1.msra.mxu0 0.0
        %3300 = vmatprep.subr.mxu0 0.0
        %3301 = vmatpush1.msra.mxu0 0.0
        %3302 = vmatprep.subr.mxu0 0.0
        %3303 = vmatpush1.msra.mxu0 0.0
        %3304 = vmatprep.subr.mxu0 0.0
        %3305 = vmatpush1.msra.mxu0 0.0
        %3306 = vmatprep.subr.mxu0 0.0
        %3307 = vmatpush1.msra.mxu0 0.0
        %3308 = vmatprep.subr.mxu0 0.0
        %3309 = vmatpush1.msra.mxu0 0.0
        %3310 = vmatprep.subr.mxu0 0.0
        %3311 = vmatpush1.msra.mxu0 0.0
        %3312 = vmatprep.subr.mxu0 0.0
        %3313 = vmatpush1.msra.mxu0 0.0
        %3314 = vmatprep.mubr.f32.mxu0 0.0
        %3315 = vmatmul.mubr.f32.gmra.mrb[0].mxu0 %v3201
        %v3316 = vpop.f32.mrb[0].mxu0
        %v3317 = vadd.f32 0.0, %v3316
        %v3318 = vpop.f32.mrb[0].mxu0
        %3319 = vmatprep.mubr.f32.mxu0 0.0
        %3320 = vmatmul.mubr.f32.gmra.mrb[0].mxu0 %v3202
        %v3321 = vpop.f32.mrb[0].mxu0
        %v3322 = vadd.f32 0.0, %v3321
        %v3323 = vpop.f32.mrb[0].mxu0
        %3324 = vmatprep.mubr.f32.mxu0 0.0
        %3325 = vmatmul.mubr.f32.gmra.mrb[0].mxu0 %v3203
        %v3326 = vpop.f32.mrb[0].mxu0
        %v3327 = vadd.f32 0.0, %v3326
        %v3328 = vpop.f32.mrb[0].mxu0
        %3329 = vmatprep.mubr.f32.mxu0 0.0
        %3330 = vmatmul.mubr.f32.gmra.mrb[0].mxu0 %v3204
        %v3331 = vpop.f32.mrb[0].mxu0
        %v3332 = vadd.f32 0.0, %v3331
        %v3333 = vpop.f32.mrb[0].mxu0
        %3334 = vmatprep.mubr.f32.mxu0 0.0
        %3335 = vmatmul.mubr.f32.gmra.mrb[0].mxu0 %v3205
        %v3336 = vpop.f32.mrb[0].mxu0
        %v3337 = vadd.f32 0.0, %v3336
        %v3338 = vpop.f32.mrb[0].mxu0
        %3339 = vmatprep.mubr.f32.mxu0 0.0
        %3340 = vmatmul.mubr.f32.gmra.mrb[0].mxu0 %v3206
        %v3341 = vpop.f32.mrb[0].mxu0
        %v3342 = vadd.f32 0.0, %v3341
        %v3343 = vpop.f32.mrb[0].mxu0
        %3344 = vmatprep.mubr.f32.mxu0 0.0
        %3345 = vmatmul.mubr.f32.gmra.mrb[0].mxu0 %v3207
        %v3346 = vpop.f32.mrb[0].mxu0
        %v3347 = vadd.f32 0.0, %v3346
        %v3348 = vpop.f32.mrb[0].mxu0
        %3349 = vmatprep.mubr.f32.mxu0 0.0
        %3350 = vmatmul.mubr.f32.gmra.mrb[0].mxu0 %v3208
        %v3351 = vpop.f32.mrb[0].mxu0
        %v3352 = vadd.f32 0.0, %v3351
        %v3353 = vpop.f32.mrb[0].mxu0
        %3354 = vmatprep.mubr.f32.mxu0 0.0
        %3355 = vmatmul.mubr.f32.gmra.mrb[0].mxu0 %v3209
        %v3356 = vpop.f32.mrb[0].mxu0
        %v3357 = vadd.f32 0.0, %v3356
        %v3358 = vpop.f32.mrb[0].mxu0
        %3359 = vmatprep.mubr.f32.mxu0 0.0
        %3360 = vmatmul.mubr.f32.gmra.mrb[0].mxu0 %v3210
        %v3361 = vpop.f32.mrb[0].mxu0
        %v3362 = vadd.f32 0.0, %v3361
        %v3363 = vpop.f32.mrb[0].mxu0
        %3364 = vmatprep.mubr.f32.mxu0 0.0
        %3365 = vmatmul.mubr.f32.gmra.mrb[0].mxu0 %v3211
        %v3366 = vpop.f32.mrb[0].mxu0
        %v3367 = vadd.f32 0.0, %v3366
        %v3368 = vpop.f32.mrb[0].mxu0
        %3369 = vmatprep.mubr.f32.mxu0 0.0
        %3370 = vmatmul.mubr.f32.gmra.mrb[0].mxu0 %v3212
        %v3371 = vpop.f32.mrb[0].mxu0
        %v3372 = vadd.f32 0.0, %v3371
        %v3373 = vpop.f32.mrb[0].mxu0
        %3374 = vmatprep.mubr.f32.mxu0 0.0
        %3375 = vmatmul.mubr.f32.gmra.mrb[0].mxu0 %v3213
        %v3376 = vpop.f32.mrb[0].mxu0
        %v3377 = vadd.f32 0.0, %v3376
        %v3378 = vpop.f32.mrb[0].mxu0
        %3379 = vmatprep.mubr.f32.mxu0 0.0
        %3380 = vmatmul.mubr.f32.gmra.mrb[0].mxu0 %v3214
        %v3381 = vpop.f32.mrb[0].mxu0
        %v3382 = vadd.f32 0.0, %v3381
        %v3383 = vpop.f32.mrb[0].mxu0
        %3384 = vmatprep.mubr.f32.mxu0 0.0
        %3385 = vmatmul.mubr.f32.gmra.mrb[0].mxu0 %v3215
        %v3386 = vpop.f32.mrb[0].mxu0
        %v3387 = vadd.f32 0.0, %v3386
        %v3388 = vpop.f32.mrb[0].mxu0
        %3389 = vmatprep.mubr.f32.mxu0 0.0
        %3390 = vmatmul.mubr.f32.gmra.mrb[0].mxu0 %v3216
        %v3391 = vpop.f32.mrb[0].mxu0
        %v3392 = vadd.f32 0.0, %v3391
        %v3393 = vpop.f32.mrb[0].mxu0
        %3394 = vmatprep.mubr.f32.mxu0 0.0
        %3395 = vmatmul.mubr.f32.gmra.mrb[0].mxu0 %v3217
        %v3396 = vpop.f32.mrb[0].mxu0
        %v3397 = vadd.f32 0.0, %v3396
        %v3398 = vpop.f32.mrb[0].mxu0
        %3399 = vmatprep.mubr.f32.mxu0 0.0
        %3400 = vmatmul.mubr.f32.gmra.mrb[0].mxu0 %v3218
        %v3401 = vpop.f32.mrb[0].mxu0
        %v3402 = vadd.f32 0.0, %v3401
        %v3403 = vpop.f32.mrb[0].mxu0
        %3404 = vmatprep.mubr.f32.mxu0 0.0
        %3405 = vmatmul.mubr.f32.gmra.mrb[0].mxu0 %v3219
        %v3406 = vpop.f32.mrb[0].mxu0
        %v3407 = vadd.f32 0.0, %v3406
        %v3408 = vpop.f32.mrb[0].mxu0
        %3409 = vmatprep.mubr.f32.mxu0 0.0
        %3410 = vmatmul.mubr.f32.gmra.mrb[0].mxu0 %v3220
        %v3411 = vpop.f32.mrb[0].mxu0
        %v3412 = vadd.f32 0.0, %v3411
        %v3413 = vpop.f32.mrb[0].mxu0
        %3414 = vmatprep.mubr.f32.mxu0 0.0
        %3415 = vmatmul.mubr.f32.gmra.mrb[0].mxu0 %v3221
        %v3416 = vpop.f32.mrb[0].mxu0
        %v3417 = vadd.f32 0.0, %v3416
        %v3418 = vpop.f32.mrb[0].mxu0
        %3419 = vmatprep.mubr.f32.mxu0 0.0
        %3420 = vmatmul.mubr.f32.gmra.mrb[0].mxu0 %v3222
        %v3421 = vpop.f32.mrb[0].mxu0
        %v3422 = vadd.f32 0.0, %v3421
        %v3423 = vpop.f32.mrb[0].mxu0
        %3424 = vmatprep.mubr.f32.mxu0 0.0
        %3425 = vmatmul.mubr.f32.gmra.mrb[0].mxu0 %v3223
        %v3426 = vpop.f32.mrb[0].mxu0
        %v3427 = vadd.f32 0.0, %v3426
        %v3428 = vpop.f32.mrb[0].mxu0
        %3429 = vmatprep.mubr.f32.mxu0 0.0
        %3430 = vmatmul.mubr.f32.gmra.mrb[0].mxu0 %v3224
        %v3431 = vpop.f32.mrb[0].mxu0
        %v3432 = vadd.f32 0.0, %v3431
        %v3433 = vpop.f32.mrb[0].mxu0
        %3434 = vmatprep.mubr.f32.mxu0 0.0
        %3435 = vmatmul.mubr.f32.gmra.mrb[0].mxu0 %v3225
        %v3436 = vpop.f32.mrb[0].mxu0
        %v3437 = vadd.f32 0.0, %v3436
        %v3438 = vpop.f32.mrb[0].mxu0
        %3439 = vmatprep.mubr.f32.mxu0 0.0
        %3440 = vmatmul.mubr.f32.gmra.mrb[0].mxu0 %v3226
        %v3441 = vpop.f32.mrb[0].mxu0
        %v3442 = vadd.f32 0.0, %v3441
        %v3443 = vpop.f32.mrb[0].mxu0
        %3444 = vmatprep.mubr.f32.mxu0 0.0
        %3445 = vmatmul.mubr.f32.gmra.mrb[0].mxu0 %v3227
        %v3446 = vpop.f32.mrb[0].mxu0
        %v3447 = vadd.f32 0.0, %v3446
        %v3448 = vpop.f32.mrb[0].mxu0
        %3449 = vmatprep.mubr.f32.mxu0 0.0
        %3450 = vmatmul.mubr.f32.gmra.mrb[0].mxu0 %v3228
        %v3451 = vpop.f32.mrb[0].mxu0
        %v3452 = vadd.f32 0.0, %v3451
        %v3453 = vpop.f32.mrb[0].mxu0
        %3454 = vmatprep.mubr.f32.mxu0 0.0
        %3455 = vmatmul.mubr.f32.gmra.mrb[0].mxu0 %v3229
        %v3456 = vpop.f32.mrb[0].mxu0
        %v3457 = vadd.f32 0.0, %v3456
        %v3458 = vpop.f32.mrb[0].mxu0
        %3459 = vmatprep.mubr.f32.mxu0 0.0
        %3460 = vmatmul.mubr.f32.gmra.mrb[0].mxu0 %v3230
        %v3461 = vpop.f32.mrb[0].mxu0
        %v3462 = vadd.f32 0.0, %v3461
        %v3463 = vpop.f32.mrb[0].mxu0
        %3464 = vmatprep.mubr.f32.mxu0 0.0
        %3465 = vmatmul.mubr.f32.gmra.mrb[0].mxu0 %v3231
        %v3466 = vpop.f32.mrb[0].mxu0
        %v3467 = vadd.f32 0.0, %v3466
        %v3468 = vpop.f32.mrb[0].mxu0
        %3469 = vmatprep.mubr.f32.mxu0 0.0
        %3470 = vmatmul.mubr.f32.gmra.mrb[0].mxu0 %v3232
        %v3471 = vpop.f32.mrb[0].mxu0
        %v3472 = vadd.f32 0.0, %v3471
        %v3473 = vpop.f32.mrb[0].mxu0
        %3474 = vdwg.mxu0
        %v3475 = vadd.f32 %v3169, %v3317
        %v3476 = vadd.f32 %v3170, %v3322
        %v3477 = vadd.f32 %v3171, %v3327
        %v3478 = vadd.f32 %v3172, %v3332
        %v3479 = vadd.f32 %v3173, %v3337
        %v3480 = vadd.f32 %v3174, %v3342
        %v3481 = vadd.f32 %v3175, %v3347
        %v3482 = vadd.f32 %v3176, %v3352
        %v3483 = vadd.f32 %v3177, %v3357
        %v3484 = vadd.f32 %v3178, %v3362
        %v3485 = vadd.f32 %v3179, %v3367
        %v3486 = vadd.f32 %v3180, %v3372
        %v3487 = vadd.f32 %v3181, %v3377
        %v3488 = vadd.f32 %v3182, %v3382
        %v3489 = vadd.f32 %v3183, %v3387
        %v3490 = vadd.f32 %v3184, %v3392
        %v3491 = vadd.f32 %v3185, %v3397
        %v3492 = vadd.f32 %v3186, %v3402
        %v3493 = vadd.f32 %v3187, %v3407
        %v3494 = vadd.f32 %v3188, %v3412
        %v3495 = vadd.f32 %v3189, %v3417
        %v3496 = vadd.f32 %v3190, %v3422
        %v3497 = vadd.f32 %v3191, %v3427
        %v3498 = vadd.f32 %v3192, %v3432
        %v3499 = vadd.f32 %v3193, %v3437
        %v3500 = vadd.f32 %v3194, %v3442
        %v3501 = vadd.f32 %v3195, %v3447
        %v3502 = vadd.f32 %v3196, %v3452
        %v3503 = vadd.f32 %v3197, %v3457
        %v3504 = vadd.f32 %v3198, %v3462
        %v3505 = vadd.f32 %v3199, %v3467
        %v3506 = vadd.f32 %v3200, %v3472
        %v3507 = vld [vmem:[%s4] sm:$0x1]
        %v3509 = vlaneseq
        %v3510 = vshrl.u32 %v3509, 7
        %v3511 = vsub.s32 0, %v3510
        %v3512 = vrot.slane %v3507, %v3511
        %v3514 = vadd.f32 %v3475, %v3512
        %v3515 = vadd.f32 %v3476, %v3512
        %v3516 = vadd.f32 %v3477, %v3512
        %v3517 = vadd.f32 %v3478, %v3512
        %v3518 = vadd.f32 %v3479, %v3512
        %v3519 = vadd.f32 %v3480, %v3512
        %v3520 = vadd.f32 %v3481, %v3512
        %v3521 = vadd.f32 %v3482, %v3512
        %v3522 = vadd.f32 %v3483, %v3512
        %v3523 = vadd.f32 %v3484, %v3512
        %v3524 = vadd.f32 %v3485, %v3512
        %v3525 = vadd.f32 %v3486, %v3512
        %v3526 = vadd.f32 %v3487, %v3512
        %v3527 = vadd.f32 %v3488, %v3512
        %v3528 = vadd.f32 %v3489, %v3512
        %v3529 = vadd.f32 %v3490, %v3512
        %v3530 = vadd.f32 %v3491, %v3512
        %v3531 = vadd.f32 %v3492, %v3512
        %v3532 = vadd.f32 %v3493, %v3512
        %v3533 = vadd.f32 %v3494, %v3512
        %v3534 = vadd.f32 %v3495, %v3512
        %v3535 = vadd.f32 %v3496, %v3512
        %v3536 = vadd.f32 %v3497, %v3512
        %v3537 = vadd.f32 %v3498, %v3512
        %v3538 = vadd.f32 %v3499, %v3512
        %v3539 = vadd.f32 %v3500, %v3512
        %v3540 = vadd.f32 %v3501, %v3512
        %v3541 = vadd.f32 %v3502, %v3512
        %v3542 = vadd.f32 %v3503, %v3512
        %v3543 = vadd.f32 %v3504, %v3512
        %v3544 = vadd.f32 %v3505, %v3512
        %v3545 = vadd.f32 %v3506, %v3512
        %vm3546 = vcmp.ge.f32.partialorder %v3514, 0.0
        %vm3547 = vcmp.ge.f32.partialorder %v3515, 0.0
        %vm3548 = vcmp.ge.f32.partialorder %v3516, 0.0
        %vm3549 = vcmp.ge.f32.partialorder %v3517, 0.0
        %vm3550 = vcmp.ge.f32.partialorder %v3518, 0.0
        %vm3551 = vcmp.ge.f32.partialorder %v3519, 0.0
        %vm3552 = vcmp.ge.f32.partialorder %v3520, 0.0
        %vm3553 = vcmp.ge.f32.partialorder %v3521, 0.0
        %vm3554 = vcmp.ge.f32.partialorder %v3522, 0.0
        %vm3555 = vcmp.ge.f32.partialorder %v3523, 0.0
        %vm3556 = vcmp.ge.f32.partialorder %v3524, 0.0
        %vm3557 = vcmp.ge.f32.partialorder %v3525, 0.0
        %vm3558 = vcmp.ge.f32.partialorder %v3526, 0.0
        %vm3559 = vcmp.ge.f32.partialorder %v3527, 0.0
        %vm3560 = vcmp.ge.f32.partialorder %v3528, 0.0
        %vm3561 = vcmp.ge.f32.partialorder %v3529, 0.0
        %vm3562 = vcmp.ge.f32.partialorder %v3530, 0.0
        %vm3563 = vcmp.ge.f32.partialorder %v3531, 0.0
        %vm3564 = vcmp.ge.f32.partialorder %v3532, 0.0
        %vm3565 = vcmp.ge.f32.partialorder %v3533, 0.0
        %vm3566 = vcmp.ge.f32.partialorder %v3534, 0.0
        %vm3567 = vcmp.ge.f32.partialorder %v3535, 0.0
        %vm3568 = vcmp.ge.f32.partialorder %v3536, 0.0
        %vm3569 = vcmp.ge.f32.partialorder %v3537, 0.0
        %vm3570 = vcmp.ge.f32.partialorder %v3538, 0.0
        %vm3571 = vcmp.ge.f32.partialorder %v3539, 0.0
        %vm3572 = vcmp.ge.f32.partialorder %v3540, 0.0
        %vm3573 = vcmp.ge.f32.partialorder %v3541, 0.0
        %vm3574 = vcmp.ge.f32.partialorder %v3542, 0.0
        %vm3575 = vcmp.ge.f32.partialorder %v3543, 0.0
        %vm3576 = vcmp.ge.f32.partialorder %v3544, 0.0
        %vm3577 = vcmp.ge.f32.partialorder %v3545, 0.0
        %v3578 = vmul.f32 %v3514, 0.1
        %v3579 = vmul.f32 %v3515, 0.1
        %v3580 = vmul.f32 %v3516, 0.1
        %v3581 = vmul.f32 %v3517, 0.1
        %v3582 = vmul.f32 %v3518, 0.1
        %v3583 = vmul.f32 %v3519, 0.1
        %v3584 = vmul.f32 %v3520, 0.1
        %v3585 = vmul.f32 %v3521, 0.1
        %v3586 = vmul.f32 %v3522, 0.1
        %v3587 = vmul.f32 %v3523, 0.1
        %v3588 = vmul.f32 %v3524, 0.1
        %v3589 = vmul.f32 %v3525, 0.1
        %v3590 = vmul.f32 %v3526, 0.1
        %v3591 = vmul.f32 %v3527, 0.1
        %v3592 = vmul.f32 %v3528, 0.1
        %v3593 = vmul.f32 %v3529, 0.1
        %v3594 = vmul.f32 %v3530, 0.1
        %v3595 = vmul.f32 %v3531, 0.1
        %v3596 = vmul.f32 %v3532, 0.1
        %v3597 = vmul.f32 %v3533, 0.1
        %v3598 = vmul.f32 %v3534, 0.1
        %v3599 = vmul.f32 %v3535, 0.1
        %v3600 = vmul.f32 %v3536, 0.1
        %v3601 = vmul.f32 %v3537, 0.1
        %v3602 = vmul.f32 %v3538, 0.1
        %v3603 = vmul.f32 %v3539, 0.1
        %v3604 = vmul.f32 %v3540, 0.1
        %v3605 = vmul.f32 %v3541, 0.1
        %v3606 = vmul.f32 %v3542, 0.1
        %v3607 = vmul.f32 %v3543, 0.1
        %v3608 = vmul.f32 %v3544, 0.1
        %v3609 = vmul.f32 %v3545, 0.1
        %v3610 = vsel %vm3546, %v3514, %v3578
        %v3611 = vsel %vm3547, %v3515, %v3579
        %v3612 = vsel %vm3548, %v3516, %v3580
        %v3613 = vsel %vm3549, %v3517, %v3581
        %v3614 = vsel %vm3550, %v3518, %v3582
        %v3615 = vsel %vm3551, %v3519, %v3583
        %v3616 = vsel %vm3552, %v3520, %v3584
        %v3617 = vsel %vm3553, %v3521, %v3585
        %v3618 = vsel %vm3554, %v3522, %v3586
        %v3619 = vsel %vm3555, %v3523, %v3587
        %v3620 = vsel %vm3556, %v3524, %v3588
        %v3621 = vsel %vm3557, %v3525, %v3589
        %v3622 = vsel %vm3558, %v3526, %v3590
        %v3623 = vsel %vm3559, %v3527, %v3591
        %v3624 = vsel %vm3560, %v3528, %v3592
        %v3625 = vsel %vm3561, %v3529, %v3593
        %v3626 = vsel %vm3562, %v3530, %v3594
        %v3627 = vsel %vm3563, %v3531, %v3595
        %v3628 = vsel %vm3564, %v3532, %v3596
        %v3629 = vsel %vm3565, %v3533, %v3597
        %v3630 = vsel %vm3566, %v3534, %v3598
        %v3631 = vsel %vm3567, %v3535, %v3599
        %v3632 = vsel %vm3568, %v3536, %v3600
        %v3633 = vsel %vm3569, %v3537, %v3601
        %v3634 = vsel %vm3570, %v3538, %v3602
        %v3635 = vsel %vm3571, %v3539, %v3603
        %v3636 = vsel %vm3572, %v3540, %v3604
        %v3637 = vsel %vm3573, %v3541, %v3605
        %v3638 = vsel %vm3574, %v3542, %v3606
        %v3639 = vsel %vm3575, %v3543, %v3607
        %v3640 = vsel %vm3576, %v3544, %v3608
        %v3641 = vsel %vm3577, %v3545, %v3609
        %s3642 = sadd.s32 %s287, 1
        %s3643 = smul.u32 %s3642, 16
        %s3644 = scalar_lea.vmem %s251, %s3643 [#allocation3]
        %v3645 = vld [vmem:[%s3644] sm:$0xff]
        %v3646 = vld [vmem:[%s3644 + $0x8] sm:$0xff]
        %v3647 = vld [vmem:[%s3644 + $0x10] sm:$0xff]
        %v3648 = vld [vmem:[%s3644 + $0x18] sm:$0xff]
        %v3649 = vld [vmem:[%s3644 + $0x20] sm:$0xff]
        %v3650 = vld [vmem:[%s3644 + $0x28] sm:$0xff]
        %v3651 = vld [vmem:[%s3644 + $0x30] sm:$0xff]
        %v3652 = vld [vmem:[%s3644 + $0x38] sm:$0xff]
        %v3653 = vld [vmem:[%s3644 + $0x40] sm:$0xff]
        %v3654 = vld [vmem:[%s3644 + $0x48] sm:$0xff]
        %v3655 = vld [vmem:[%s3644 + $0x50] sm:$0xff]
        %v3656 = vld [vmem:[%s3644 + $0x58] sm:$0xff]
        %v3657 = vld [vmem:[%s3644 + $0x60] sm:$0xff]
        %v3658 = vld [vmem:[%s3644 + $0x68] sm:$0xff]
        %v3659 = vld [vmem:[%s3644 + $0x70] sm:$0xff]
        %v3660 = vld [vmem:[%s3644 + $0x78] sm:$0xff]
        %v3661 = vld [vmem:[%s3644 + $0x80] sm:$0xff]
        %v3662 = vld [vmem:[%s3644 + $0x88] sm:$0xff]
        %v3663 = vld [vmem:[%s3644 + $0x90] sm:$0xff]
        %v3664 = vld [vmem:[%s3644 + $0x98] sm:$0xff]
        %v3665 = vld [vmem:[%s3644 + $0xa0] sm:$0xff]
        %v3666 = vld [vmem:[%s3644 + $0xa8] sm:$0xff]
        %v3667 = vld [vmem:[%s3644 + $0xb0] sm:$0xff]
        %v3668 = vld [vmem:[%s3644 + $0xb8] sm:$0xff]
        %v3669 = vld [vmem:[%s3644 + $0xc0] sm:$0xff]
        %v3670 = vld [vmem:[%s3644 + $0xc8] sm:$0xff]
        %v3671 = vld [vmem:[%s3644 + $0xd0] sm:$0xff]
        %v3672 = vld [vmem:[%s3644 + $0xd8] sm:$0xff]
        %v3673 = vld [vmem:[%s3644 + $0xe0] sm:$0xff]
        %v3674 = vld [vmem:[%s3644 + $0xe8] sm:$0xff]
        %v3675 = vld [vmem:[%s3644 + $0xf0] sm:$0xff]
        %v3676 = vld [vmem:[%s3644 + $0xf8] sm:$0xff]
        %v3677 = vadd.f32 %v3610, %v3645
        %v3678 = vadd.f32 %v3611, %v3646
        %v3679 = vadd.f32 %v3612, %v3647
        %v3680 = vadd.f32 %v3613, %v3648
        %v3681 = vadd.f32 %v3614, %v3649
        %v3682 = vadd.f32 %v3615, %v3650
        %v3683 = vadd.f32 %v3616, %v3651
        %v3684 = vadd.f32 %v3617, %v3652
        %v3685 = vadd.f32 %v3618, %v3653
        %v3686 = vadd.f32 %v3619, %v3654
        %v3687 = vadd.f32 %v3620, %v3655
        %v3688 = vadd.f32 %v3621, %v3656
        %v3689 = vadd.f32 %v3622, %v3657
        %v3690 = vadd.f32 %v3623, %v3658
        %v3691 = vadd.f32 %v3624, %v3659
        %v3692 = vadd.f32 %v3625, %v3660
        %v3693 = vadd.f32 %v3626, %v3661
        %v3694 = vadd.f32 %v3627, %v3662
        %v3695 = vadd.f32 %v3628, %v3663
        %v3696 = vadd.f32 %v3629, %v3664
        %v3697 = vadd.f32 %v3630, %v3665
        %v3698 = vadd.f32 %v3631, %v3666
        %v3699 = vadd.f32 %v3632, %v3667
        %v3700 = vadd.f32 %v3633, %v3668
        %v3701 = vadd.f32 %v3634, %v3669
        %v3702 = vadd.f32 %v3635, %v3670
        %v3703 = vadd.f32 %v3636, %v3671
        %v3704 = vadd.f32 %v3637, %v3672
        %v3705 = vadd.f32 %v3638, %v3673
        %v3706 = vadd.f32 %v3639, %v3674
        %v3707 = vadd.f32 %v3640, %v3675
        %v3708 = vadd.f32 %v3641, %v3676
        %3709 = vst [vmem:[%s285] sm:$0xff] %v3677
        %3710 = vst [vmem:[%s285 + $0x8] sm:$0xff] %v3678
        %3711 = vst [vmem:[%s285 + $0x10] sm:$0xff] %v3679
        %3712 = vst [vmem:[%s285 + $0x18] sm:$0xff] %v3680
        %3713 = vst [vmem:[%s285 + $0x20] sm:$0xff] %v3681
        %3714 = vst [vmem:[%s285 + $0x28] sm:$0xff] %v3682
        %3715 = vst [vmem:[%s285 + $0x30] sm:$0xff] %v3683
        %3716 = vst [vmem:[%s285 + $0x38] sm:$0xff] %v3684
        %3717 = vst [vmem:[%s285 + $0x40] sm:$0xff] %v3685
        %3718 = vst [vmem:[%s285 + $0x48] sm:$0xff] %v3686
        %3719 = vst [vmem:[%s285 + $0x50] sm:$0xff] %v3687
        %3720 = vst [vmem:[%s285 + $0x58] sm:$0xff] %v3688
        %3721 = vst [vmem:[%s285 + $0x60] sm:$0xff] %v3689
        %3722 = vst [vmem:[%s285 + $0x68] sm:$0xff] %v3690
        %3723 = vst [vmem:[%s285 + $0x70] sm:$0xff] %v3691
        %3724 = vst [vmem:[%s285 + $0x78] sm:$0xff] %v3692
        %3725 = vst [vmem:[%s285 + $0x80] sm:$0xff] %v3693
        %3726 = vst [vmem:[%s285 + $0x88] sm:$0xff] %v3694
        %3727 = vst [vmem:[%s285 + $0x90] sm:$0xff] %v3695
        %3728 = vst [vmem:[%s285 + $0x98] sm:$0xff] %v3696
        %3729 = vst [vmem:[%s285 + $0xa0] sm:$0xff] %v3697
        %3730 = vst [vmem:[%s285 + $0xa8] sm:$0xff] %v3698
        %3731 = vst [vmem:[%s285 + $0xb0] sm:$0xff] %v3699
        %3732 = vst [vmem:[%s285 + $0xb8] sm:$0xff] %v3700
        %3733 = vst [vmem:[%s285 + $0xc0] sm:$0xff] %v3701
        %3734 = vst [vmem:[%s285 + $0xc8] sm:$0xff] %v3702
        %3735 = vst [vmem:[%s285 + $0xd0] sm:$0xff] %v3703
        %3736 = vst [vmem:[%s285 + $0xd8] sm:$0xff] %v3704
        %3737 = vst [vmem:[%s285 + $0xe0] sm:$0xff] %v3705
        %3738 = vst [vmem:[%s285 + $0xe8] sm:$0xff] %v3706
        %3739 = vst [vmem:[%s285 + $0xf0] sm:$0xff] %v3707
        %3740 = vst [vmem:[%s285 + $0xf8] sm:$0xff] %v3708
        %s3741 = sand.u32 %s155, 1
        %s3742 = scalar_lea.sflag [#allocation5], %s3741
        %s3743 = sand.u32 %s155, 1
        %s3744 = smul.addr %s3743, 256
        %s3745 = scalar_lea.vmem [#allocation9], %s3744
        // Predicated region
        $region53: #{tpu_custom_call.1} parent=39 // pred_check
          %p3746 = pneg %p165
        $region54: #{tpu_custom_call.1} parent=39 // pred_check_branch
          %3748 = sbr.rel (%p3746) target = $region56
        $region55: #{tpu_custom_call.1} parent=39 // pred_region
          %s3749 = smul.u32 16, %s28
          %s3751 = ssub.s32 4096, 4096
          %3752 = vsyncadd %s3742, %s3751
          %s3753 = smul.addr %s3749, 2
          %s3754 = smul.addr %s27, 32
          %s3755 = sadd.s32 %s3753, %s3754
          %s3756 = smul.addr %s3755, 128
          %s3757 = scalar_lea.hbm %s5, %s3756
          %s3758 = sshll.u32 %s3745, 4
          %s3759 = int_to_ptr.vmem [resolvable:$true] %s3758
          %3764 = dma.vmem_to_hbm [thread:$0]  %s3759, 4096, %s3757, %s3742, 128, 128, 8
        $region56: #{tpu_custom_call.1} parent=39 // pred_fallthru
          _
      $region40: #{tpu_custom_call.1} parent=5 // pred_fallthru
        _
      %p3765 = scmp.le.s32.totalorder 2, %s18
      // Predicated region
      $region57: #{tpu_custom_call.1} parent=5 // pred_check
        %p3766 = pneg %p3765
      $region58: #{tpu_custom_call.1} parent=5 // pred_check_branch
        %3768 = sbr.rel (%p3766) target = $region60
      $region59: #{tpu_custom_call.1} parent=5 // pred_region
        %s3769 = ssub.s32 %s18, 2
        // Predicated region
        $region61: #{tpu_custom_call.1} parent=59 // pred_check
          %p3770 = pneg %p171
        $region62: #{tpu_custom_call.1} parent=59 // pred_check_branch
          %3772 = sbr.rel (%p3770) target = $region64
        $region63: #{tpu_custom_call.1} parent=59 // pred_region
          %s3773 = sand.u32 %s156, 1
          %s3774 = scalar_lea.sflag [#allocation5], %s3773
          %s3775 = sand.u32 %s156, 1
          %s3776 = smul.addr %s3775, 256
          %s3777 = scalar_lea.vmem [#allocation9], %s3776
          %3778 = dma.done %s3774, 4096
        $region64: #{tpu_custom_call.1} parent=59 // pred_fallthru
          _
      $region60: #{tpu_custom_call.1} parent=5 // pred_fallthru
        _
    $region6: #{tpu_custom_call.1} parent=1 // loop_footer
      %s22 = sadd.s32 1, %s18
    $region7: #{tpu_custom_call.1} parent=1 // loop_footer_branch
      %17 = sbr.rel target = $region3
    $region8: #{tpu_custom_call.1} parent=1 // loop_exit
      _
    %3779 = vsyncpa [#allocation4], 1
    %s3780 = scalar_lea.sflag [#allocation4], 1
    %3781 = vsyncpa %s3780, 1
    %3782 = vsyncpa [#allocation7], 1
    %3783 = vsyncpa [#allocation5], 1
    %s3784 = scalar_lea.sflag [#allocation5], 1
    %3785 = vsyncpa %s3784, 1

</llo_original>
